<compile_context>
chip_gen: v7x
topology: tpu7x:2x2x1
jax: 0.10.0
libtpu: 0.0.40
codegen_flags: <defaults>
</compile_context>

<pallas_src>
import functools

import jax
import jax.numpy as jnp
from jax.experimental import pallas as pl
from jax.experimental.pallas import tpu as pltpu


def _round_up(x, m):
    return (x + m - 1) // m * m


def _temporal_attention_kernel(
    # lane-dense activation slabs (rows = batch_block * padded_len)
    q_ref, qp_ref, kp_ref, v_ref,
    # attention projections (full-width) + output projection
    wq_ref, bq_ref, wk_ref, bk_ref, wv_ref, bv_ref, wo_ref, bo_ref,
    # layernorm 1, feed-forward, layernorm 2
    g1_ref, be1_ref, w1_ref, b1_ref, w2_ref, b2_ref, g2_ref, be2_ref,
    # output
    out_ref,
    *, nhead: int, d_model: int, seq_k: int, batch_block: int, ffn_block: int,
):
    f32 = jnp.float32
    cdt = wq_ref.dtype                   # MXU operand dtype (f32 or bf16)
    M, Ep = q_ref.shape                  # fused query rows, padded d_model
    NN = kp_ref.shape[0]                 # fused key rows
    Fp = w1_ref.shape[1]                 # padded dim_feedforward
    BB = batch_block
    Lp = M // BB                         # padded query length per example
    Sp = NN // BB                        # padded key length per example
    H = nhead
    dh = d_model // H

    # Residual path keeps the *un-positioned* query (f32); pos embeddings were
    # pre-added wrapper-side to qp / kp.
    q_res = q_ref[...]                                   # (M, Ep)
    qp = qp_ref[...].astype(cdt)
    kp = kp_ref[...].astype(cdt)
    vv = v_ref[...].astype(cdt)

    # Lane mask so LayerNorm statistics cover only the true d_model lanes.
    lane_valid = None
    if Ep != d_model:
        lane_valid = jax.lax.broadcasted_iota(jnp.int32, (1, Ep), 1) < d_model

    def layer_norm(x, g, b):
        # Mask padded lanes explicitly so the statistics never depend on the
        # "padded lanes are zero" invariant of upstream ops.
        if lane_valid is not None:
            x = jnp.where(lane_valid, x, 0.0)
        mu = jnp.sum(x, axis=-1, keepdims=True) * (1.0 / d_model)
        d = x - mu
        if lane_valid is not None:
            d = jnp.where(lane_valid, d, 0.0)
        var = jnp.sum(d * d, axis=-1, keepdims=True) * (1.0 / d_model)
        return d * jax.lax.rsqrt(var + 1e-5) * g + b

    # ---- full-width Q/K/V projections (single lane-dense matmul each) ----
    # 1/sqrt(dh) is already folded into wq/bq wrapper-side.
    Q_all = jnp.dot(qp, wq_ref[...], preferred_element_type=f32) + bq_ref[...]  # (M, Ep)
    K_all = jnp.dot(kp, wk_ref[...], preferred_element_type=f32) + bk_ref[...]  # (NN, Ep)
    V_all = jnp.dot(vv, wv_ref[...], preferred_element_type=f32) + bv_ref[...]  # (NN, Ep)

    if Sp != seq_k:
        if BB == 1:
            key_valid = jax.lax.broadcasted_iota(jnp.int32, (1, Sp), 1) < seq_k
        else:
            key_valid = jax.lax.broadcasted_iota(jnp.int32, (1, 1, Sp), 2) < seq_k
    else:
        key_valid = None

    # ---- per-head score / softmax / PV (scores kept in f32) ----
    head_outs = []
    for h in range(H):
        lo = h * dh
        Qh = Q_all[:, lo:lo + dh]
        Kh = K_all[:, lo:lo + dh]
        Vh = V_all[:, lo:lo + dh]

        if BB == 1:
            s = jax.lax.dot_general(
                Qh.astype(cdt), Kh.astype(cdt),
                (((1,), (1,)), ((), ())),
                preferred_element_type=f32)                               # (Lp, Sp)
            if key_valid is not None:
                s = jnp.where(key_valid, s, -1e30)
            s = s - jnp.max(s, axis=-1, keepdims=True)
            p = jnp.exp(s)
            p = p * pl.reciprocal(jnp.sum(p, axis=-1, keepdims=True), approx=True)
            oh = jnp.dot(p.astype(cdt), Vh.astype(cdt),
                         preferred_element_type=f32)                      # (Lp, dh)
        else:
            Qb = Qh.reshape(BB, Lp, dh).astype(cdt)
            Kb = Kh.reshape(BB, Sp, dh).astype(cdt)
            Vb = Vh.reshape(BB, Sp, dh).astype(cdt)
            s = jnp.einsum("bld,bsd->bls", Qb, Kb,
                           preferred_element_type=f32)                    # (BB,Lp,Sp)
            if key_valid is not None:
                s = jnp.where(key_valid, s, -1e30)
            s = s - jnp.max(s, axis=-1, keepdims=True)
            p = jnp.exp(s)
            p = p * pl.reciprocal(jnp.sum(p, axis=-1, keepdims=True), approx=True)
            oh = jnp.einsum("bls,bsd->bld", p.astype(cdt), Vb,
                            preferred_element_type=f32).reshape(M, dh)
        head_outs.append(oh)

    # ---- single full-width output projection on concatenated heads ----
    if Ep != d_model:
        head_outs.append(jnp.zeros((M, Ep - d_model), f32))   # keep lanes dense
    oh_all = jnp.concatenate(head_outs, axis=-1)               # (M, Ep)
    mha = jnp.dot(oh_all.astype(cdt), wo_ref[...],
                  preferred_element_type=f32) + bo_ref[...]    # (M, Ep)

    # ---- residual + LayerNorm 1 ----
    x = layer_norm(q_res + mha, g1_ref[...], be1_ref[...])     # (M, Ep)
    xc = x.astype(cdt)

    # ---- feed-forward, optionally tiled over the Fp axis ----
    ff = jnp.zeros((M, Ep), f32)
    for c0 in range(0, Fp, ffn_block):
        c1 = min(c0 + ffn_block, Fp)
        h1 = jnp.dot(xc, w1_ref[:, c0:c1],
                     preferred_element_type=f32) + b1_ref[:, c0:c1]
        h1 = jnp.maximum(h1, 0.0)
        ff = ff + jnp.dot(h1.astype(cdt), w2_ref[c0:c1, :],
                          preferred_element_type=f32)
    ff = ff + b2_ref[...]

    # ---- residual + LayerNorm 2, lane-dense store ----
    y = layer_norm(x + ff, g2_ref[...], be2_ref[...])
    out_ref[...] = y.astype(out_ref.dtype)


def _pad2d(a, rows, cols, dtype=None):
    if dtype is not None:
        a = a.astype(dtype)
    return jnp.pad(a, ((0, rows - a.shape[0]), (0, cols - a.shape[1])))


def prepare_params(params, nhead, *, compute_dtype=jnp.bfloat16):
    """Zero-pad weights to lane-dense shapes; fold 1/sqrt(dh) into Wq/bq."""
    E = params["wq"].shape[0]
    F = params["w1"].shape[1]
    dh = E // nhead
    Ep = _round_up(E, 128)
    Fp = _round_up(F, 128)
    scale = 1.0 / float(dh) ** 0.5

    return {
        "wq": _pad2d(params["wq"] * scale, Ep, Ep, compute_dtype),
        "bq": _pad2d(params["bq"] * scale, 1, Ep, jnp.float32),
        "wk": _pad2d(params["wk"], Ep, Ep, compute_dtype),
        "bk": _pad2d(params["bk"], 1, Ep, jnp.float32),
        "wv": _pad2d(params["wv"], Ep, Ep, compute_dtype),
        "bv": _pad2d(params["bv"], 1, Ep, jnp.float32),
        "wo": _pad2d(params["wo"], Ep, Ep, compute_dtype),
        "bo": _pad2d(params["bo"], 1, Ep, jnp.float32),
        "g1": _pad2d(params["g1"], 1, Ep, jnp.float32),
        "be1": _pad2d(params["be1"], 1, Ep, jnp.float32),
        "w1": _pad2d(params["w1"], Ep, Fp, compute_dtype),
        "b1": _pad2d(params["b1"], 1, Fp, jnp.float32),
        "w2": _pad2d(params["w2"], Fp, Ep, compute_dtype),
        "b2": _pad2d(params["b2"], 1, Ep, jnp.float32),
        "g2": _pad2d(params["g2"], 1, Ep, jnp.float32),
        "be2": _pad2d(params["be2"], 1, Ep, jnp.float32),
    }


def temporal_attention_layer(query, key, value, pos_query, pos_key, params, nhead,
                             *, compute_dtype=jnp.bfloat16, batch_block=None,
                             ffn_block=None, vmem_limit_bytes=None):
    """query:(B,L,E) key/value:(B,S,E) pos_query:(B,L,E) pos_key:(B,S,E)."""
    B, L, E = query.shape
    S = key.shape[1]
    F = params["w1"].shape[1]
    assert E % nhead == 0, "d_model must be divisible by nhead"

    row_mult = 16 if compute_dtype == jnp.bfloat16 else 8
    Ep, Fp = _round_up(E, 128), _round_up(F, 128)
    Lp, Sp = _round_up(L, row_mult), _round_up(S, row_mult)

    # FFN tiling: chunk sizes are always multiples of 128 lanes.
    if ffn_block is None:
        ffn_block_eff = Fp if Fp <= 2048 else 1024
    else:
        ffn_block_eff = max(128, min(_round_up(ffn_block, 128), Fp))

    # Auto batch_block: >= ~256 fused rows per step, but keep grid >= 2 so the
    # "parallel" axis can shard across the two v7x TensorCores.
    if batch_block is None:
        batch_block = 1
        for bb in range(1, B + 1):
            if B % bb == 0 and (B // bb >= 2 or B == 1) and bb * Lp <= 1024:
                batch_block = bb
                if bb * Lp >= 256:
                    break
    BB = batch_block
    assert B % BB == 0, "batch must be divisible by batch_block"

    def pad_to_slab(x, Tp):
        # (B, T, E) -> zero-pad -> lane-dense (B*Tp, Ep) slab (free XLA reshape).
        xp = jnp.pad(x, ((0, 0), (0, Tp - x.shape[1]), (0, Ep - x.shape[2])))
        return xp.reshape(B * Tp, Ep)

    q_s = pad_to_slab(query, Lp)                    # residual (un-positioned)
    qp_s = pad_to_slab(query + pos_query, Lp)       # pos pre-added wrapper-side
    kp_s = pad_to_slab(key + pos_key, Sp)           # pos_key slab eliminated
    v_s = pad_to_slab(value, Sp)

    pp = prepare_params(params, nhead, compute_dtype=compute_dtype)
    names = ("wq", "bq", "wk", "bk", "wv", "bv", "wo", "bo",
             "g1", "be1", "w1", "b1", "w2", "b2", "g2", "be2")
    weights = [pp[n] for n in names]

    q_rows, k_rows = BB * Lp, BB * Sp
    q_spec = pl.BlockSpec((q_rows, Ep), lambda b: (b, 0))
    k_spec = pl.BlockSpec((k_rows, Ep), lambda b: (b, 0))

    # ---- VMEM budget (generation-aware) ----
    itemsz = jnp.dtype(query.dtype).itemsize
    w_bytes = sum(int(w.size) * jnp.dtype(w.dtype).itemsize for w in weights)
    act_block_bytes = (2 * q_rows + 2 * k_rows) * Ep * itemsz     # 4 input slabs
    out_block_bytes = q_rows * Ep * itemsz
    interm_bytes = ((q_rows + 2 * k_rows) * Ep                    # Q/K/V_all
                    + q_rows * (3 * Ep + ffn_block_eff)) * 4      # oh_all, x, ff, h1
    vmem_needed = (2 * act_block_bytes + 2 * out_block_bytes
                   + 2 * w_bytes + 2 * interm_bytes)
    if vmem_limit_bytes is None:
        try:
            phys = int(pltpu.get_tpu_info().vmem_capacity_bytes)
        except Exception:
            phys = 64 * 1024 * 1024          # conservative (v7x per-core VMEM)
        vmem_limit_bytes = min(max(int(vmem_needed), 32 * 1024 * 1024),
                               int(phys * 0.75))

    # ---- cost estimate ----
    flops = 2 * B * (L * E * E              # Q projection
                     + 2 * S * E * E        # K, V projections
                     + 2 * L * S * E        # scores + PV (all heads)
                     + L * E * E            # output projection
                     + 2 * L * E * F)       # FFN
    bytes_accessed = int(sum(int(a.size) * jnp.dtype(a.dtype).itemsize
                             for a in (q_s, qp_s, kp_s, v_s))
                         + w_bytes + B * Lp * Ep * itemsz)
    cost = pl.CostEstimate(flops=int(flops),
                           transcendentals=int(B * nhead * L * S),
                           bytes_accessed=bytes_accessed)

    kernel = functools.partial(_temporal_attention_kernel, nhead=nhead,
                               d_model=E, seq_k=S, batch_block=BB,
                               ffn_block=ffn_block_eff)

    def run(single_buffer_weights):
        def const_spec(shape):
            zeros = (0,) * len(shape)
            if single_buffer_weights:
                return pl.BlockSpec(shape, lambda b: zeros,
                                    pipeline_mode=pl.Buffered(1))
            return pl.BlockSpec(shape, lambda b: zeros)

        in_specs = ([q_spec, q_spec, k_spec, k_spec]
                    + [const_spec(w.shape) for w in weights])
        return pl.pallas_call(
            kernel,
            out_shape=jax.ShapeDtypeStruct((B * Lp, Ep), query.dtype),
            grid_spec=pltpu.PrefetchScalarGridSpec(
                num_scalar_prefetch=0,
                grid=(B // BB,),
                in_specs=in_specs,
                out_specs=pl.BlockSpec((q_rows, Ep), lambda b: (b, 0)),
            ),
            compiler_params=pltpu.CompilerParams(
                dimension_semantics=("parallel",),
                vmem_limit_bytes=int(vmem_limit_bytes),
            ),
            cost_estimate=cost,
        )(q_s, qp_s, kp_s, v_s, *weights)

    try:
        out_slab = run(True)
    except Exception:
        # TODO(synk): pl.Buffered(1) single-buffering of the constant weight
        # operands is a pure VMEM optimization; fall back to the default
        # double-buffered specs if the installed JAX rejects it.
        out_slab = run(False)

    return out_slab.reshape(B, Lp, Ep)[:, :L, :E]


def reference_jax(query, key, value, pos_query, pos_key, p, nhead):
    """Plain-JAX reference (mirrors PyTorch semantics) for sanity checking."""
    q = query + pos_query
    k = key + pos_key
    B, L, E = q.shape
    dh = E // nhead
    Q = q @ p["wq"] + p["bq"]
    K = k @ p["wk"] + p["bk"]
    V = value @ p["wv"] + p["bv"]

    def split(x):  # (B, T, E) -> (B, H, T, dh)
        return x.reshape(B, -1, nhead, dh).transpose(0, 2, 1, 3)

    Qh, Kh, Vh = split(Q), split(K), split(V)
    s = jnp.einsum("bhld,bhsd->bhls", Qh, Kh) / jnp.sqrt(dh)
    a = jax.nn.softmax(s, axis=-1)
    o = jnp.einsum("bhls,bhsd->bhld", a, Vh).transpose(0, 2, 1, 3).reshape(B, L, E)
    mha = o @ p["wo"] + p["bo"]

    def ln(x, g, b):
        mu = x.mean(-1, keepdims=True)
        var = ((x - mu) ** 2).mean(-1, keepdims=True)
        return (x - mu) / jnp.sqrt(var + 1e-5) * g + b

    x = ln(query + mha, p["g1"], p["be1"])
    ff = jax.nn.relu(x @ p["w1"] + p["b1"]) @ p["w2"] + p["b2"]
    return ln(x + ff, p["g2"], p["be2"])


if __name__ == "__main__":
    B, L, S = 2, 8, 8
    d_model, nhead, dim_ff = 32, 4, 64

    ks = jax.random.split(jax.random.PRNGKey(0), 20)

    def w(k, shape, scale=0.05):
        return jax.random.normal(k, shape, dtype=jnp.float32) * scale

    params = {
        "wq": w(ks[0], (d_model, d_model)), "bq": w(ks[1], (1, d_model)),
        "wk": w(ks[2], (d_model, d_model)), "bk": w(ks[3], (1, d_model)),
        "wv": w(ks[4], (d_model, d_model)), "bv": w(ks[5], (1, d_model)),
        "wo": w(ks[6], (d_model, d_model)), "bo": w(ks[7], (1, d_model)),
        "g1": jnp.ones((1, d_model), jnp.float32), "be1": jnp.zeros((1, d_model), jnp.float32),
        "w1": w(ks[8], (d_model, dim_ff)), "b1": w(ks[9], (1, dim_ff)),
        "w2": w(ks[10], (dim_ff, d_model)), "b2": w(ks[11], (1, d_model)),
        "g2": jnp.ones((1, d_model), jnp.float32), "be2": jnp.zeros((1, d_model), jnp.float32),
    }

    query = jax.random.normal(ks[12], (B, L, d_model), dtype=jnp.float32)
    key_t = jax.random.normal(ks[13], (B, S, d_model), dtype=jnp.float32)
    value = jax.random.normal(ks[14], (B, S, d_model), dtype=jnp.float32)
    pos_q = jax.random.normal(ks[15], (B, L, d_model), dtype=jnp.float32)
    pos_k = jax.random.normal(ks[16], (B, S, d_model), dtype=jnp.float32)

    ref = reference_jax(query, key_t, value, pos_q, pos_k, params, nhead)

    # 1) f32 MXU operands, auto batch_block (-> 1 here, grid=2 for 2-TC parts).
    out = jax.block_until_ready(temporal_attention_layer(
        query, key_t, value, pos_q, pos_k, params, nhead,
        compute_dtype=jnp.float32))
    assert out.shape == (B, L, d_model)
    err = float(jnp.max(jnp.abs(out - ref)))
    assert err < 1e-2, f"f32 / auto batch_block max err {err}"

    # 2) f32, whole batch fused into the matmul M dimension.
    out2 = jax.block_until_ready(temporal_attention_layer(
        query, key_t, value, pos_q, pos_k, params, nhead,
        compute_dtype=jnp.float32, batch_block=2))
    err2 = float(jnp.max(jnp.abs(out2 - ref)))
    assert err2 < 1e-2, f"f32 / batch_block=2 max err {err2}"

    # 3) default bf16 MXU operands (f32 accumulation and element-wise math).
    out3 = jax.block_until_ready(temporal_attention_layer(
        query, key_t, value, pos_q, pos_k, params, nhead))
    err3 = float(jnp.max(jnp.abs(out3 - ref)))
    assert err3 < 5e-2, f"bf16 max err {err3}"

    print("KERNEL_OK")
</pallas_src>

<mosaic_0001>
module attributes {stable_mosaic.version = 11 : i64} {
  func.func @_temporal_attention_kernel(%arg0: i32, %arg1: memref<8x128xf32, #tpu.memory_space<vmem>>, %arg2: memref<8x128xf32, #tpu.memory_space<vmem>>, %arg3: memref<8x128xf32, #tpu.memory_space<vmem>>, %arg4: memref<8x128xf32, #tpu.memory_space<vmem>>, %arg5: memref<128x128xf32, #tpu.memory_space<vmem>>, %arg6: memref<1x128xf32, #tpu.memory_space<vmem>>, %arg7: memref<128x128xf32, #tpu.memory_space<vmem>>, %arg8: memref<1x128xf32, #tpu.memory_space<vmem>>, %arg9: memref<128x128xf32, #tpu.memory_space<vmem>>, %arg10: memref<1x128xf32, #tpu.memory_space<vmem>>, %arg11: memref<128x128xf32, #tpu.memory_space<vmem>>, %arg12: memref<1x128xf32, #tpu.memory_space<vmem>>, %arg13: memref<1x128xf32, #tpu.memory_space<vmem>>, %arg14: memref<1x128xf32, #tpu.memory_space<vmem>>, %arg15: memref<128x128xf32, #tpu.memory_space<vmem>>, %arg16: memref<1x128xf32, #tpu.memory_space<vmem>>, %arg17: memref<128x128xf32, #tpu.memory_space<vmem>>, %arg18: memref<1x128xf32, #tpu.memory_space<vmem>>, %arg19: memref<1x128xf32, #tpu.memory_space<vmem>>, %arg20: memref<1x128xf32, #tpu.memory_space<vmem>>, %arg21: memref<8x128xf32, #tpu.memory_space<vmem>>) attributes {dimension_semantics = [#tpu.dimension_semantics<parallel>], iteration_bounds = array<i64: 2>, scalar_prefetch = 0 : i64, scratch_operands = 0 : i64, tpu.core_type = #tpu.core_type<tc>, window_params = [{transform_indices = @transform_0, window_bounds = array<i64: 8, 128>}, {transform_indices = @transform_1, window_bounds = array<i64: 8, 128>}, {transform_indices = @transform_2, window_bounds = array<i64: 8, 128>}, {transform_indices = @transform_3, window_bounds = array<i64: 8, 128>}, {pipeline_mode = #tpu.pipeline_mode<synchronous>, transform_indices = @transform_4, window_bounds = array<i64: 128, 128>}, {pipeline_mode = #tpu.pipeline_mode<synchronous>, transform_indices = @transform_5, window_bounds = array<i64: 1, 128>}, {pipeline_mode = #tpu.pipeline_mode<synchronous>, transform_indices = @transform_6, window_bounds = array<i64: 128, 128>}, {pipeline_mode = #tpu.pipeline_mode<synchronous>, transform_indices = @transform_7, window_bounds = array<i64: 1, 128>}, {pipeline_mode = #tpu.pipeline_mode<synchronous>, transform_indices = @transform_8, window_bounds = array<i64: 128, 128>}, {pipeline_mode = #tpu.pipeline_mode<synchronous>, transform_indices = @transform_9, window_bounds = array<i64: 1, 128>}, {pipeline_mode = #tpu.pipeline_mode<synchronous>, transform_indices = @transform_10, window_bounds = array<i64: 128, 128>}, {pipeline_mode = #tpu.pipeline_mode<synchronous>, transform_indices = @transform_11, window_bounds = array<i64: 1, 128>}, {pipeline_mode = #tpu.pipeline_mode<synchronous>, transform_indices = @transform_12, window_bounds = array<i64: 1, 128>}, {pipeline_mode = #tpu.pipeline_mode<synchronous>, transform_indices = @transform_13, window_bounds = array<i64: 1, 128>}, {pipeline_mode = #tpu.pipeline_mode<synchronous>, transform_indices = @transform_14, window_bounds = array<i64: 128, 128>}, {pipeline_mode = #tpu.pipeline_mode<synchronous>, transform_indices = @transform_15, window_bounds = array<i64: 1, 128>}, {pipeline_mode = #tpu.pipeline_mode<synchronous>, transform_indices = @transform_16, window_bounds = array<i64: 128, 128>}, {pipeline_mode = #tpu.pipeline_mode<synchronous>, transform_indices = @transform_17, window_bounds = array<i64: 1, 128>}, {pipeline_mode = #tpu.pipeline_mode<synchronous>, transform_indices = @transform_18, window_bounds = array<i64: 1, 128>}, {pipeline_mode = #tpu.pipeline_mode<synchronous>, transform_indices = @transform_19, window_bounds = array<i64: 1, 128>}, {transform_indices = @transform_20, window_bounds = array<i64: 8, 128>}]} {
    %c0 = arith.constant 0 : index
    %c0_0 = arith.constant 0 : index
    %0 = vector.load %arg1[%c0, %c0_0] : memref<8x128xf32, #tpu.memory_space<vmem>>, vector<8x128xf32>
    %c0_1 = arith.constant 0 : index
    %c0_2 = arith.constant 0 : index
    %1 = vector.load %arg2[%c0_1, %c0_2] : memref<8x128xf32, #tpu.memory_space<vmem>>, vector<8x128xf32>
    %c0_3 = arith.constant 0 : index
    %c0_4 = arith.constant 0 : index
    %2 = vector.load %arg3[%c0_3, %c0_4] : memref<8x128xf32, #tpu.memory_space<vmem>>, vector<8x128xf32>
    %c0_5 = arith.constant 0 : index
    %c0_6 = arith.constant 0 : index
    %3 = vector.load %arg4[%c0_5, %c0_6] : memref<8x128xf32, #tpu.memory_space<vmem>>, vector<8x128xf32>
    %4 = tpu.iota {dimensions = array<i32: 1>} : vector<1x128xi32>
    %c32_i32 = arith.constant 32 : i32
    %5 = vector.broadcast %c32_i32 : i32 to vector<1x128xi32>
    %6 = arith.cmpi slt, %4, %5 : vector<1x128xi32>
    %c0_7 = arith.constant 0 : index
    %c0_8 = arith.constant 0 : index
    %7 = vector.load %arg5[%c0_7, %c0_8] : memref<128x128xf32, #tpu.memory_space<vmem>>, vector<128x128xf32>
    %cst = arith.constant dense<0.000000e+00> : vector<8x128xf32>
    %8 = tpu.matmul %1, %7, %cst {dimension_numbers = #tpu.dot_dimension_numbers<[1], [0], [0], [1], [0, 0, 1, 1], [], []>} : vector<8x128xf32>, vector<128x128xf32>, vector<8x128xf32> -> vector<8x128xf32>
    %c0_9 = arith.constant 0 : index
    %c0_10 = arith.constant 0 : index
    %9 = vector.load %arg6[%c0_9, %c0_10] : memref<1x128xf32, #tpu.memory_space<vmem>>, vector<1x128xf32>
    %10 = vector.broadcast %9 : vector<1x128xf32> to vector<8x128xf32>
    %11 = arith.addf %8, %10 : vector<8x128xf32>
    %c0_11 = arith.constant 0 : index
    %c0_12 = arith.constant 0 : index
    %12 = vector.load %arg7[%c0_11, %c0_12] : memref<128x128xf32, #tpu.memory_space<vmem>>, vector<128x128xf32>
    %cst_13 = arith.constant dense<0.000000e+00> : vector<8x128xf32>
    %13 = tpu.matmul %2, %12, %cst_13 {dimension_numbers = #tpu.dot_dimension_numbers<[1], [0], [0], [1], [0, 0, 1, 1], [], []>} : vector<8x128xf32>, vector<128x128xf32>, vector<8x128xf32> -> vector<8x128xf32>
    %c0_14 = arith.constant 0 : index
    %c0_15 = arith.constant 0 : index
    %14 = vector.load %arg8[%c0_14, %c0_15] : memref<1x128xf32, #tpu.memory_space<vmem>>, vector<1x128xf32>
    %15 = vector.broadcast %14 : vector<1x128xf32> to vector<8x128xf32>
    %16 = arith.addf %13, %15 : vector<8x128xf32>
    %c0_16 = arith.constant 0 : index
    %c0_17 = arith.constant 0 : index
    %17 = vector.load %arg9[%c0_16, %c0_17] : memref<128x128xf32, #tpu.memory_space<vmem>>, vector<128x128xf32>
    %cst_18 = arith.constant dense<0.000000e+00> : vector<8x128xf32>
    %18 = tpu.matmul %3, %17, %cst_18 {dimension_numbers = #tpu.dot_dimension_numbers<[1], [0], [0], [1], [0, 0, 1, 1], [], []>} : vector<8x128xf32>, vector<128x128xf32>, vector<8x128xf32> -> vector<8x128xf32>
    %c0_19 = arith.constant 0 : index
    %c0_20 = arith.constant 0 : index
    %19 = vector.load %arg10[%c0_19, %c0_20] : memref<1x128xf32, #tpu.memory_space<vmem>>, vector<1x128xf32>
    %20 = vector.broadcast %19 : vector<1x128xf32> to vector<8x128xf32>
    %21 = arith.addf %18, %20 : vector<8x128xf32>
    %22 = vector.extract_strided_slice %11 {offsets = [0, 0], sizes = [8, 8], strides = [1, 1]} : vector<8x128xf32> to vector<8x8xf32>
    %23 = vector.extract_strided_slice %16 {offsets = [0, 0], sizes = [8, 8], strides = [1, 1]} : vector<8x128xf32> to vector<8x8xf32>
    %24 = vector.extract_strided_slice %21 {offsets = [0, 0], sizes = [8, 8], strides = [1, 1]} : vector<8x128xf32> to vector<8x8xf32>
    %cst_21 = arith.constant dense<0.000000e+00> : vector<8x8xf32>
    %25 = tpu.matmul %22, %23, %cst_21 {dimension_numbers = #tpu.dot_dimension_numbers<[1], [1], [0], [0], [0, 0, 1, 0], [], []>} : vector<8x8xf32>, vector<8x8xf32>, vector<8x8xf32> -> vector<8x8xf32>
    %cst_22 = arith.constant dense<0xFF800000> : vector<8xf32>
    %26 = vector.multi_reduction <maximumf>, %25, %cst_22 [1] : vector<8x8xf32> to vector<8xf32>
    %27 = vector.shape_cast %26 : vector<8xf32> to vector<8x1xf32>
    %28 = vector.broadcast %27 : vector<8x1xf32> to vector<8x8xf32>
    %29 = arith.subf %25, %28 : vector<8x8xf32>
    %30 = math.exp %29 : vector<8x8xf32>
    %cst_23 = arith.constant dense<0.000000e+00> : vector<8xf32>
    %31 = vector.multi_reduction <add>, %30, %cst_23 [1] : vector<8x8xf32> to vector<8xf32>
    %32 = vector.shape_cast %31 : vector<8xf32> to vector<8x1xf32>
    %33 = tpu.reciprocal %32 {approx = true} : vector<8x1xf32> -> vector<8x1xf32>
    %34 = vector.broadcast %33 : vector<8x1xf32> to vector<8x8xf32>
    %35 = arith.mulf %30, %34 : vector<8x8xf32>
    %cst_24 = arith.constant dense<0.000000e+00> : vector<8x8xf32>
    %36 = tpu.matmul %35, %24, %cst_24 {dimension_numbers = #tpu.dot_dimension_numbers<[1], [0], [0], [1], [0, 0, 1, 1], [], []>} : vector<8x8xf32>, vector<8x8xf32>, vector<8x8xf32> -> vector<8x8xf32>
    %37 = vector.extract_strided_slice %11 {offsets = [0, 8], sizes = [8, 8], strides = [1, 1]} : vector<8x128xf32> to vector<8x8xf32>
    %38 = vector.extract_strided_slice %16 {offsets = [0, 8], sizes = [8, 8], strides = [1, 1]} : vector<8x128xf32> to vector<8x8xf32>
    %39 = vector.extract_strided_slice %21 {offsets = [0, 8], sizes = [8, 8], strides = [1, 1]} : vector<8x128xf32> to vector<8x8xf32>
    %cst_25 = arith.constant dense<0.000000e+00> : vector<8x8xf32>
    %40 = tpu.matmul %37, %38, %cst_25 {dimension_numbers = #tpu.dot_dimension_numbers<[1], [1], [0], [0], [0, 0, 1, 0], [], []>} : vector<8x8xf32>, vector<8x8xf32>, vector<8x8xf32> -> vector<8x8xf32>
    %cst_26 = arith.constant dense<0xFF800000> : vector<8xf32>
    %41 = vector.multi_reduction <maximumf>, %40, %cst_26 [1] : vector<8x8xf32> to vector<8xf32>
    %42 = vector.shape_cast %41 : vector<8xf32> to vector<8x1xf32>
    %43 = vector.broadcast %42 : vector<8x1xf32> to vector<8x8xf32>
    %44 = arith.subf %40, %43 : vector<8x8xf32>
    %45 = math.exp %44 : vector<8x8xf32>
    %cst_27 = arith.constant dense<0.000000e+00> : vector<8xf32>
    %46 = vector.multi_reduction <add>, %45, %cst_27 [1] : vector<8x8xf32> to vector<8xf32>
    %47 = vector.shape_cast %46 : vector<8xf32> to vector<8x1xf32>
    %48 = tpu.reciprocal %47 {approx = true} : vector<8x1xf32> -> vector<8x1xf32>
    %49 = vector.broadcast %48 : vector<8x1xf32> to vector<8x8xf32>
    %50 = arith.mulf %45, %49 : vector<8x8xf32>
    %cst_28 = arith.constant dense<0.000000e+00> : vector<8x8xf32>
    %51 = tpu.matmul %50, %39, %cst_28 {dimension_numbers = #tpu.dot_dimension_numbers<[1], [0], [0], [1], [0, 0, 1, 1], [], []>} : vector<8x8xf32>, vector<8x8xf32>, vector<8x8xf32> -> vector<8x8xf32>
    %52 = vector.extract_strided_slice %11 {offsets = [0, 16], sizes = [8, 8], strides = [1, 1]} : vector<8x128xf32> to vector<8x8xf32>
    %53 = vector.extract_strided_slice %16 {offsets = [0, 16], sizes = [8, 8], strides = [1, 1]} : vector<8x128xf32> to vector<8x8xf32>
    %54 = vector.extract_strided_slice %21 {offsets = [0, 16], sizes = [8, 8], strides = [1, 1]} : vector<8x128xf32> to vector<8x8xf32>
    %cst_29 = arith.constant dense<0.000000e+00> : vector<8x8xf32>
    %55 = tpu.matmul %52, %53, %cst_29 {dimension_numbers = #tpu.dot_dimension_numbers<[1], [1], [0], [0], [0, 0, 1, 0], [], []>} : vector<8x8xf32>, vector<8x8xf32>, vector<8x8xf32> -> vector<8x8xf32>
    %cst_30 = arith.constant dense<0xFF800000> : vector<8xf32>
    %56 = vector.multi_reduction <maximumf>, %55, %cst_30 [1] : vector<8x8xf32> to vector<8xf32>
    %57 = vector.shape_cast %56 : vector<8xf32> to vector<8x1xf32>
    %58 = vector.broadcast %57 : vector<8x1xf32> to vector<8x8xf32>
    %59 = arith.subf %55, %58 : vector<8x8xf32>
    %60 = math.exp %59 : vector<8x8xf32>
    %cst_31 = arith.constant dense<0.000000e+00> : vector<8xf32>
    %61 = vector.multi_reduction <add>, %60, %cst_31 [1] : vector<8x8xf32> to vector<8xf32>
    %62 = vector.shape_cast %61 : vector<8xf32> to vector<8x1xf32>
    %63 = tpu.reciprocal %62 {approx = true} : vector<8x1xf32> -> vector<8x1xf32>
    %64 = vector.broadcast %63 : vector<8x1xf32> to vector<8x8xf32>
    %65 = arith.mulf %60, %64 : vector<8x8xf32>
    %cst_32 = arith.constant dense<0.000000e+00> : vector<8x8xf32>
    %66 = tpu.matmul %65, %54, %cst_32 {dimension_numbers = #tpu.dot_dimension_numbers<[1], [0], [0], [1], [0, 0, 1, 1], [], []>} : vector<8x8xf32>, vector<8x8xf32>, vector<8x8xf32> -> vector<8x8xf32>
    %67 = vector.extract_strided_slice %11 {offsets = [0, 24], sizes = [8, 8], strides = [1, 1]} : vector<8x128xf32> to vector<8x8xf32>
    %68 = vector.extract_strided_slice %16 {offsets = [0, 24], sizes = [8, 8], strides = [1, 1]} : vector<8x128xf32> to vector<8x8xf32>
    %69 = vector.extract_strided_slice %21 {offsets = [0, 24], sizes = [8, 8], strides = [1, 1]} : vector<8x128xf32> to vector<8x8xf32>
    %cst_33 = arith.constant dense<0.000000e+00> : vector<8x8xf32>
    %70 = tpu.matmul %67, %68, %cst_33 {dimension_numbers = #tpu.dot_dimension_numbers<[1], [1], [0], [0], [0, 0, 1, 0], [], []>} : vector<8x8xf32>, vector<8x8xf32>, vector<8x8xf32> -> vector<8x8xf32>
    %cst_34 = arith.constant dense<0xFF800000> : vector<8xf32>
    %71 = vector.multi_reduction <maximumf>, %70, %cst_34 [1] : vector<8x8xf32> to vector<8xf32>
    %72 = vector.shape_cast %71 : vector<8xf32> to vector<8x1xf32>
    %73 = vector.broadcast %72 : vector<8x1xf32> to vector<8x8xf32>
    %74 = arith.subf %70, %73 : vector<8x8xf32>
    %75 = math.exp %74 : vector<8x8xf32>
    %cst_35 = arith.constant dense<0.000000e+00> : vector<8xf32>
    %76 = vector.multi_reduction <add>, %75, %cst_35 [1] : vector<8x8xf32> to vector<8xf32>
    %77 = vector.shape_cast %76 : vector<8xf32> to vector<8x1xf32>
    %78 = tpu.reciprocal %77 {approx = true} : vector<8x1xf32> -> vector<8x1xf32>
    %79 = vector.broadcast %78 : vector<8x1xf32> to vector<8x8xf32>
    %80 = arith.mulf %75, %79 : vector<8x8xf32>
    %cst_36 = arith.constant dense<0.000000e+00> : vector<8x8xf32>
    %81 = tpu.matmul %80, %69, %cst_36 {dimension_numbers = #tpu.dot_dimension_numbers<[1], [0], [0], [1], [0, 0, 1, 1], [], []>} : vector<8x8xf32>, vector<8x8xf32>, vector<8x8xf32> -> vector<8x8xf32>
    %cst_37 = arith.constant 0.000000e+00 : f32
    %82 = vector.broadcast %cst_37 : f32 to vector<8x96xf32>
    %83 = tpu.concatenate %36, %51, %66, %81, %82 in 1 : vector<8x8xf32>, vector<8x8xf32>, vector<8x8xf32>, vector<8x8xf32>, vector<8x96xf32> -> vector<8x128xf32>
    %c0_38 = arith.constant 0 : index
    %c0_39 = arith.constant 0 : index
    %84 = vector.load %arg11[%c0_38, %c0_39] : memref<128x128xf32, #tpu.memory_space<vmem>>, vector<128x128xf32>
    %cst_40 = arith.constant dense<0.000000e+00> : vector<8x128xf32>
    %85 = tpu.matmul %83, %84, %cst_40 {dimension_numbers = #tpu.dot_dimension_numbers<[1], [0], [0], [1], [0, 0, 1, 1], [], []>} : vector<8x128xf32>, vector<128x128xf32>, vector<8x128xf32> -> vector<8x128xf32>
    %c0_41 = arith.constant 0 : index
    %c0_42 = arith.constant 0 : index
    %86 = vector.load %arg12[%c0_41, %c0_42] : memref<1x128xf32, #tpu.memory_space<vmem>>, vector<1x128xf32>
    %87 = vector.broadcast %86 : vector<1x128xf32> to vector<8x128xf32>
    %88 = arith.addf %85, %87 : vector<8x128xf32>
    %89 = arith.addf %0, %88 : vector<8x128xf32>
    %c0_43 = arith.constant 0 : index
    %c0_44 = arith.constant 0 : index
    %90 = vector.load %arg13[%c0_43, %c0_44] : memref<1x128xf32, #tpu.memory_space<vmem>>, vector<1x128xf32>
    %c0_45 = arith.constant 0 : index
    %c0_46 = arith.constant 0 : index
    %91 = vector.load %arg14[%c0_45, %c0_46] : memref<1x128xf32, #tpu.memory_space<vmem>>, vector<1x128xf32>
    %cst_47 = arith.constant 0.000000e+00 : f32
    %92 = vector.shape_cast %6 : vector<1x128xi1> to vector<1x128xi1>
    %93 = vector.broadcast %92 : vector<1x128xi1> to vector<8x128xi1>
    %94 = vector.broadcast %cst_47 : f32 to vector<8x128xf32>
    %95 = arith.select %93, %89, %94 : vector<8x128xi1>, vector<8x128xf32>
    %cst_48 = arith.constant dense<0.000000e+00> : vector<8xf32>
    %96 = vector.multi_reduction <add>, %95, %cst_48 [1] : vector<8x128xf32> to vector<8xf32>
    %97 = vector.shape_cast %96 : vector<8xf32> to vector<8x1xf32>
    %cst_49 = arith.constant 3.125000e-02 : f32
    %98 = vector.broadcast %cst_49 : f32 to vector<8x1xf32>
    %99 = arith.mulf %97, %98 : vector<8x1xf32>
    %100 = vector.broadcast %99 : vector<8x1xf32> to vector<8x128xf32>
    %101 = arith.subf %95, %100 : vector<8x128xf32>
    %cst_50 = arith.constant 0.000000e+00 : f32
    %102 = vector.shape_cast %6 : vector<1x128xi1> to vector<1x128xi1>
    %103 = vector.broadcast %102 : vector<1x128xi1> to vector<8x128xi1>
    %104 = vector.broadcast %cst_50 : f32 to vector<8x128xf32>
    %105 = arith.select %103, %101, %104 : vector<8x128xi1>, vector<8x128xf32>
    %106 = arith.mulf %105, %105 : vector<8x128xf32>
    %cst_51 = arith.constant dense<0.000000e+00> : vector<8xf32>
    %107 = vector.multi_reduction <add>, %106, %cst_51 [1] : vector<8x128xf32> to vector<8xf32>
    %108 = vector.shape_cast %107 : vector<8xf32> to vector<8x1xf32>
    %cst_52 = arith.constant 3.125000e-02 : f32
    %109 = vector.broadcast %cst_52 : f32 to vector<8x1xf32>
    %110 = arith.mulf %108, %109 : vector<8x1xf32>
    %cst_53 = arith.constant 9.99999974E-6 : f32
    %111 = vector.broadcast %cst_53 : f32 to vector<8x1xf32>
    %112 = arith.addf %110, %111 : vector<8x1xf32>
    %113 = math.rsqrt %112 : vector<8x1xf32>
    %114 = vector.broadcast %113 : vector<8x1xf32> to vector<8x128xf32>
    %115 = arith.mulf %105, %114 : vector<8x128xf32>
    %116 = vector.broadcast %90 : vector<1x128xf32> to vector<8x128xf32>
    %117 = arith.mulf %115, %116 : vector<8x128xf32>
    %118 = vector.broadcast %91 : vector<1x128xf32> to vector<8x128xf32>
    %119 = arith.addf %117, %118 : vector<8x128xf32>
    %cst_54 = arith.constant 0.000000e+00 : f32
    %120 = vector.broadcast %cst_54 : f32 to vector<8x128xf32>
    %c0_55 = arith.constant 0 : index
    %c0_56 = arith.constant 0 : index
    %121 = vector.load %arg15[%c0_55, %c0_56] : memref<128x128xf32, #tpu.memory_space<vmem>>, vector<128x128xf32>
    %cst_57 = arith.constant dense<0.000000e+00> : vector<8x128xf32>
    %122 = tpu.matmul %119, %121, %cst_57 {dimension_numbers = #tpu.dot_dimension_numbers<[1], [0], [0], [1], [0, 0, 1, 1], [], []>} : vector<8x128xf32>, vector<128x128xf32>, vector<8x128xf32> -> vector<8x128xf32>
    %c0_58 = arith.constant 0 : index
    %c0_59 = arith.constant 0 : index
    %123 = vector.load %arg16[%c0_58, %c0_59] : memref<1x128xf32, #tpu.memory_space<vmem>>, vector<1x128xf32>
    %124 = vector.broadcast %123 : vector<1x128xf32> to vector<8x128xf32>
    %125 = arith.addf %122, %124 : vector<8x128xf32>
    %cst_60 = arith.constant 0.000000e+00 : f32
    %126 = vector.broadcast %cst_60 : f32 to vector<8x128xf32>
    %127 = arith.maximumf %125, %126 : vector<8x128xf32>
    %c0_61 = arith.constant 0 : index
    %c0_62 = arith.constant 0 : index
    %128 = vector.load %arg17[%c0_61, %c0_62] : memref<128x128xf32, #tpu.memory_space<vmem>>, vector<128x128xf32>
    %cst_63 = arith.constant dense<0.000000e+00> : vector<8x128xf32>
    %129 = tpu.matmul %127, %128, %cst_63 {dimension_numbers = #tpu.dot_dimension_numbers<[1], [0], [0], [1], [0, 0, 1, 1], [], []>} : vector<8x128xf32>, vector<128x128xf32>, vector<8x128xf32> -> vector<8x128xf32>
    %130 = arith.addf %120, %129 : vector<8x128xf32>
    %c0_64 = arith.constant 0 : index
    %c0_65 = arith.constant 0 : index
    %131 = vector.load %arg18[%c0_64, %c0_65] : memref<1x128xf32, #tpu.memory_space<vmem>>, vector<1x128xf32>
    %132 = vector.broadcast %131 : vector<1x128xf32> to vector<8x128xf32>
    %133 = arith.addf %130, %132 : vector<8x128xf32>
    %134 = arith.addf %119, %133 : vector<8x128xf32>
    %c0_66 = arith.constant 0 : index
    %c0_67 = arith.constant 0 : index
    %135 = vector.load %arg19[%c0_66, %c0_67] : memref<1x128xf32, #tpu.memory_space<vmem>>, vector<1x128xf32>
    %c0_68 = arith.constant 0 : index
    %c0_69 = arith.constant 0 : index
    %136 = vector.load %arg20[%c0_68, %c0_69] : memref<1x128xf32, #tpu.memory_space<vmem>>, vector<1x128xf32>
    %cst_70 = arith.constant 0.000000e+00 : f32
    %137 = vector.shape_cast %6 : vector<1x128xi1> to vector<1x128xi1>
    %138 = vector.broadcast %137 : vector<1x128xi1> to vector<8x128xi1>
    %139 = vector.broadcast %cst_70 : f32 to vector<8x128xf32>
    %140 = arith.select %138, %134, %139 : vector<8x128xi1>, vector<8x128xf32>
    %cst_71 = arith.constant dense<0.000000e+00> : vector<8xf32>
    %141 = vector.multi_reduction <add>, %140, %cst_71 [1] : vector<8x128xf32> to vector<8xf32>
    %142 = vector.shape_cast %141 : vector<8xf32> to vector<8x1xf32>
    %cst_72 = arith.constant 3.125000e-02 : f32
    %143 = vector.broadcast %cst_72 : f32 to vector<8x1xf32>
    %144 = arith.mulf %142, %143 : vector<8x1xf32>
    %145 = vector.broadcast %144 : vector<8x1xf32> to vector<8x128xf32>
    %146 = arith.subf %140, %145 : vector<8x128xf32>
    %cst_73 = arith.constant 0.000000e+00 : f32
    %147 = vector.shape_cast %6 : vector<1x128xi1> to vector<1x128xi1>
    %148 = vector.broadcast %147 : vector<1x128xi1> to vector<8x128xi1>
    %149 = vector.broadcast %cst_73 : f32 to vector<8x128xf32>
    %150 = arith.select %148, %146, %149 : vector<8x128xi1>, vector<8x128xf32>
    %151 = arith.mulf %150, %150 : vector<8x128xf32>
    %cst_74 = arith.constant dense<0.000000e+00> : vector<8xf32>
    %152 = vector.multi_reduction <add>, %151, %cst_74 [1] : vector<8x128xf32> to vector<8xf32>
    %153 = vector.shape_cast %152 : vector<8xf32> to vector<8x1xf32>
    %cst_75 = arith.constant 3.125000e-02 : f32
    %154 = vector.broadcast %cst_75 : f32 to vector<8x1xf32>
    %155 = arith.mulf %153, %154 : vector<8x1xf32>
    %cst_76 = arith.constant 9.99999974E-6 : f32
    %156 = vector.broadcast %cst_76 : f32 to vector<8x1xf32>
    %157 = arith.addf %155, %156 : vector<8x1xf32>
    %158 = math.rsqrt %157 : vector<8x1xf32>
    %159 = vector.broadcast %158 : vector<8x1xf32> to vector<8x128xf32>
    %160 = arith.mulf %150, %159 : vector<8x128xf32>
    %161 = vector.broadcast %135 : vector<1x128xf32> to vector<8x128xf32>
    %162 = arith.mulf %160, %161 : vector<8x128xf32>
    %163 = vector.broadcast %136 : vector<1x128xf32> to vector<8x128xf32>
    %164 = arith.addf %162, %163 : vector<8x128xf32>
    %c0_77 = arith.constant 0 : index
    %c0_78 = arith.constant 0 : index
    %165 = vector.load %arg21[%c0_77, %c0_78] : memref<8x128xf32, #tpu.memory_space<vmem>>, vector<8x128xf32>
    tpu.vector_store %arg21[%c0_77, %c0_78], %164 {strides = array<i32>} : memref<8x128xf32, #tpu.memory_space<vmem>>, vector<8x128xf32>,
    return
  }
  func.func @transform_0(%arg0: i32) -> (i32, i32) {
    %c0_i32 = arith.constant 0 : i32
    %c0_i32_0 = arith.constant 0 : i32
    return %arg0, %c0_i32 : i32, i32
  }
  func.func @transform_1(%arg0: i32) -> (i32, i32) {
    %c0_i32 = arith.constant 0 : i32
    %c0_i32_0 = arith.constant 0 : i32
    return %arg0, %c0_i32 : i32, i32
  }
  func.func @transform_2(%arg0: i32) -> (i32, i32) {
    %c0_i32 = arith.constant 0 : i32
    %c0_i32_0 = arith.constant 0 : i32
    return %arg0, %c0_i32 : i32, i32
  }
  func.func @transform_3(%arg0: i32) -> (i32, i32) {
    %c0_i32 = arith.constant 0 : i32
    %c0_i32_0 = arith.constant 0 : i32
    return %arg0, %c0_i32 : i32, i32
  }
  func.func @transform_4(%arg0: i32) -> (i32, i32) {
    %c0_i32 = arith.constant 0 : i32
    %c0_i32_0 = arith.constant 0 : i32
    %c0_i32_1 = arith.constant 0 : i32
    return %c0_i32, %c0_i32_0 : i32, i32
  }
  func.func @transform_5(%arg0: i32) -> (i32, i32) {
    %c0_i32 = arith.constant 0 : i32
    %c0_i32_0 = arith.constant 0 : i32
    %c0_i32_1 = arith.constant 0 : i32
    return %c0_i32, %c0_i32_0 : i32, i32
  }
  func.func @transform_6(%arg0: i32) -> (i32, i32) {
    %c0_i32 = arith.constant 0 : i32
    %c0_i32_0 = arith.constant 0 : i32
    %c0_i32_1 = arith.constant 0 : i32
    return %c0_i32, %c0_i32_0 : i32, i32
  }
  func.func @transform_7(%arg0: i32) -> (i32, i32) {
    %c0_i32 = arith.constant 0 : i32
    %c0_i32_0 = arith.constant 0 : i32
    %c0_i32_1 = arith.constant 0 : i32
    return %c0_i32, %c0_i32_0 : i32, i32
  }
  func.func @transform_8(%arg0: i32) -> (i32, i32) {
    %c0_i32 = arith.constant 0 : i32
    %c0_i32_0 = arith.constant 0 : i32
    %c0_i32_1 = arith.constant 0 : i32
    return %c0_i32, %c0_i32_0 : i32, i32
  }
  func.func @transform_9(%arg0: i32) -> (i32, i32) {
    %c0_i32 = arith.constant 0 : i32
    %c0_i32_0 = arith.constant 0 : i32
    %c0_i32_1 = arith.constant 0 : i32
    return %c0_i32, %c0_i32_0 : i32, i32
  }
  func.func @transform_10(%arg0: i32) -> (i32, i32) {
    %c0_i32 = arith.constant 0 : i32
    %c0_i32_0 = arith.constant 0 : i32
    %c0_i32_1 = arith.constant 0 : i32
    return %c0_i32, %c0_i32_0 : i32, i32
  }
  func.func @transform_11(%arg0: i32) -> (i32, i32) {
    %c0_i32 = arith.constant 0 : i32
    %c0_i32_0 = arith.constant 0 : i32
    %c0_i32_1 = arith.constant 0 : i32
    return %c0_i32, %c0_i32_0 : i32, i32
  }
  func.func @transform_12(%arg0: i32) -> (i32, i32) {
    %c0_i32 = arith.constant 0 : i32
    %c0_i32_0 = arith.constant 0 : i32
    %c0_i32_1 = arith.constant 0 : i32
    return %c0_i32, %c0_i32_0 : i32, i32
  }
  func.func @transform_13(%arg0: i32) -> (i32, i32) {
    %c0_i32 = arith.constant 0 : i32
    %c0_i32_0 = arith.constant 0 : i32
    %c0_i32_1 = arith.constant 0 : i32
    return %c0_i32, %c0_i32_0 : i32, i32
  }
  func.func @transform_14(%arg0: i32) -> (i32, i32) {
    %c0_i32 = arith.constant 0 : i32
    %c0_i32_0 = arith.constant 0 : i32
    %c0_i32_1 = arith.constant 0 : i32
    return %c0_i32, %c0_i32_0 : i32, i32
  }
  func.func @transform_15(%arg0: i32) -> (i32, i32) {
    %c0_i32 = arith.constant 0 : i32
    %c0_i32_0 = arith.constant 0 : i32
    %c0_i32_1 = arith.constant 0 : i32
    return %c0_i32, %c0_i32_0 : i32, i32
  }
  func.func @transform_16(%arg0: i32) -> (i32, i32) {
    %c0_i32 = arith.constant 0 : i32
    %c0_i32_0 = arith.constant 0 : i32
    %c0_i32_1 = arith.constant 0 : i32
    return %c0_i32, %c0_i32_0 : i32, i32
  }
  func.func @transform_17(%arg0: i32) -> (i32, i32) {
    %c0_i32 = arith.constant 0 : i32
    %c0_i32_0 = arith.constant 0 : i32
    %c0_i32_1 = arith.constant 0 : i32
    return %c0_i32, %c0_i32_0 : i32, i32
  }
  func.func @transform_18(%arg0: i32) -> (i32, i32) {
    %c0_i32 = arith.constant 0 : i32
    %c0_i32_0 = arith.constant 0 : i32
    %c0_i32_1 = arith.constant 0 : i32
    return %c0_i32, %c0_i32_0 : i32, i32
  }
  func.func @transform_19(%arg0: i32) -> (i32, i32) {
    %c0_i32 = arith.constant 0 : i32
    %c0_i32_0 = arith.constant 0 : i32
    %c0_i32_1 = arith.constant 0 : i32
    return %c0_i32, %c0_i32_0 : i32, i32
  }
  func.func @transform_20(%arg0: i32) -> (i32, i32) {
    %c0_i32 = arith.constant 0 : i32
    %c0_i32_0 = arith.constant 0 : i32
    return %arg0, %c0_i32 : i32, i32
  }
}

module attributes {stable_mosaic.version = 11 : i64} {
  func.func @_temporal_attention_kernel(%arg0: i32, %arg1: memref<8x128xf32, #tpu.memory_space<vmem>>, %arg2: memref<8x128xf32, #tpu.memory_space<vmem>>, %arg3: memref<8x128xf32, #tpu.memory_space<vmem>>, %arg4: memref<8x128xf32, #tpu.memory_space<vmem>>, %arg5: memref<128x128xf32, #tpu.memory_space<vmem>>, %arg6: memref<1x128xf32, #tpu.memory_space<vmem>>, %arg7: memref<128x128xf32, #tpu.memory_space<vmem>>, %arg8: memref<1x128xf32, #tpu.memory_space<vmem>>, %arg9: memref<128x128xf32, #tpu.memory_space<vmem>>, %arg10: memref<1x128xf32, #tpu.memory_space<vmem>>, %arg11: memref<128x128xf32, #tpu.memory_space<vmem>>, %arg12: memref<1x128xf32, #tpu.memory_space<vmem>>, %arg13: memref<1x128xf32, #tpu.memory_space<vmem>>, %arg14: memref<1x128xf32, #tpu.memory_space<vmem>>, %arg15: memref<128x128xf32, #tpu.memory_space<vmem>>, %arg16: memref<1x128xf32, #tpu.memory_space<vmem>>, %arg17: memref<128x128xf32, #tpu.memory_space<vmem>>, %arg18: memref<1x128xf32, #tpu.memory_space<vmem>>, %arg19: memref<1x128xf32, #tpu.memory_space<vmem>>, %arg20: memref<1x128xf32, #tpu.memory_space<vmem>>, %arg21: memref<8x128xf32, #tpu.memory_space<vmem>>) attributes {dimension_semantics = [#tpu.dimension_semantics<parallel>], iteration_bounds = array<i64: 2>, scalar_prefetch = 0 : i64, scratch_operands = 0 : i64, tpu.core_type = #tpu.core_type<tc>, window_params = [{transform_indices = @transform_0, window_bounds = array<i64: 8, 128>}, {transform_indices = @transform_1, window_bounds = array<i64: 8, 128>}, {transform_indices = @transform_2, window_bounds = array<i64: 8, 128>}, {transform_indices = @transform_3, window_bounds = array<i64: 8, 128>}, {pipeline_mode = #tpu.pipeline_mode<synchronous>, transform_indices = @transform_4, window_bounds = array<i64: 128, 128>}, {pipeline_mode = #tpu.pipeline_mode<synchronous>, transform_indices = @transform_5, window_bounds = array<i64: 1, 128>}, {pipeline_mode = #tpu.pipeline_mode<synchronous>, transform_indices = @transform_6, window_bounds = array<i64: 128, 128>}, {pipeline_mode = #tpu.pipeline_mode<synchronous>, transform_indices = @transform_7, window_bounds = array<i64: 1, 128>}, {pipeline_mode = #tpu.pipeline_mode<synchronous>, transform_indices = @transform_8, window_bounds = array<i64: 128, 128>}, {pipeline_mode = #tpu.pipeline_mode<synchronous>, transform_indices = @transform_9, window_bounds = array<i64: 1, 128>}, {pipeline_mode = #tpu.pipeline_mode<synchronous>, transform_indices = @transform_10, window_bounds = array<i64: 128, 128>}, {pipeline_mode = #tpu.pipeline_mode<synchronous>, transform_indices = @transform_11, window_bounds = array<i64: 1, 128>}, {pipeline_mode = #tpu.pipeline_mode<synchronous>, transform_indices = @transform_12, window_bounds = array<i64: 1, 128>}, {pipeline_mode = #tpu.pipeline_mode<synchronous>, transform_indices = @transform_13, window_bounds = array<i64: 1, 128>}, {pipeline_mode = #tpu.pipeline_mode<synchronous>, transform_indices = @transform_14, window_bounds = array<i64: 128, 128>}, {pipeline_mode = #tpu.pipeline_mode<synchronous>, transform_indices = @transform_15, window_bounds = array<i64: 1, 128>}, {pipeline_mode = #tpu.pipeline_mode<synchronous>, transform_indices = @transform_16, window_bounds = array<i64: 128, 128>}, {pipeline_mode = #tpu.pipeline_mode<synchronous>, transform_indices = @transform_17, window_bounds = array<i64: 1, 128>}, {pipeline_mode = #tpu.pipeline_mode<synchronous>, transform_indices = @transform_18, window_bounds = array<i64: 1, 128>}, {pipeline_mode = #tpu.pipeline_mode<synchronous>, transform_indices = @transform_19, window_bounds = array<i64: 1, 128>}, {transform_indices = @transform_20, window_bounds = array<i64: 8, 128>}]} {
    %c0 = arith.constant 0 : index
    %c0_0 = arith.constant 0 : index
    %0 = vector.load %arg1[%c0, %c0_0] : memref<8x128xf32, #tpu.memory_space<vmem>>, vector<8x128xf32>
    %c0_1 = arith.constant 0 : index
    %c0_2 = arith.constant 0 : index
    %1 = vector.load %arg2[%c0_1, %c0_2] : memref<8x128xf32, #tpu.memory_space<vmem>>, vector<8x128xf32>
    %c0_3 = arith.constant 0 : index
    %c0_4 = arith.constant 0 : index
    %2 = vector.load %arg3[%c0_3, %c0_4] : memref<8x128xf32, #tpu.memory_space<vmem>>, vector<8x128xf32>
    %c0_5 = arith.constant 0 : index
    %c0_6 = arith.constant 0 : index
    %3 = vector.load %arg4[%c0_5, %c0_6] : memref<8x128xf32, #tpu.memory_space<vmem>>, vector<8x128xf32>
    %4 = tpu.iota {dimensions = array<i32: 1>} : vector<1x128xi32>
    %c32_i32 = arith.constant 32 : i32
    %5 = vector.broadcast %c32_i32 : i32 to vector<1x128xi32>
    %6 = arith.cmpi slt, %4, %5 : vector<1x128xi32>
    %c0_7 = arith.constant 0 : index
    %c0_8 = arith.constant 0 : index
    %7 = vector.load %arg5[%c0_7, %c0_8] : memref<128x128xf32, #tpu.memory_space<vmem>>, vector<128x128xf32>
    %cst = arith.constant dense<0.000000e+00> : vector<8x128xf32>
    %8 = tpu.matmul %1, %7, %cst {dimension_numbers = #tpu.dot_dimension_numbers<[1], [0], [0], [1], [0, 0, 1, 1], [], []>} : vector<8x128xf32>, vector<128x128xf32>, vector<8x128xf32> -> vector<8x128xf32>
    %c0_9 = arith.constant 0 : index
    %c0_10 = arith.constant 0 : index
    %9 = vector.load %arg6[%c0_9, %c0_10] : memref<1x128xf32, #tpu.memory_space<vmem>>, vector<1x128xf32>
    %10 = vector.broadcast %9 : vector<1x128xf32> to vector<8x128xf32>
    %11 = arith.addf %8, %10 : vector<8x128xf32>
    %c0_11 = arith.constant 0 : index
    %c0_12 = arith.constant 0 : index
    %12 = vector.load %arg7[%c0_11, %c0_12] : memref<128x128xf32, #tpu.memory_space<vmem>>, vector<128x128xf32>
    %cst_13 = arith.constant dense<0.000000e+00> : vector<8x128xf32>
    %13 = tpu.matmul %2, %12, %cst_13 {dimension_numbers = #tpu.dot_dimension_numbers<[1], [0], [0], [1], [0, 0, 1, 1], [], []>} : vector<8x128xf32>, vector<128x128xf32>, vector<8x128xf32> -> vector<8x128xf32>
    %c0_14 = arith.constant 0 : index
    %c0_15 = arith.constant 0 : index
    %14 = vector.load %arg8[%c0_14, %c0_15] : memref<1x128xf32, #tpu.memory_space<vmem>>, vector<1x128xf32>
    %15 = vector.broadcast %14 : vector<1x128xf32> to vector<8x128xf32>
    %16 = arith.addf %13, %15 : vector<8x128xf32>
    %c0_16 = arith.constant 0 : index
    %c0_17 = arith.constant 0 : index
    %17 = vector.load %arg9[%c0_16, %c0_17] : memref<128x128xf32, #tpu.memory_space<vmem>>, vector<128x128xf32>
    %cst_18 = arith.constant dense<0.000000e+00> : vector<8x128xf32>
    %18 = tpu.matmul %3, %17, %cst_18 {dimension_numbers = #tpu.dot_dimension_numbers<[1], [0], [0], [1], [0, 0, 1, 1], [], []>} : vector<8x128xf32>, vector<128x128xf32>, vector<8x128xf32> -> vector<8x128xf32>
    %c0_19 = arith.constant 0 : index
    %c0_20 = arith.constant 0 : index
    %19 = vector.load %arg10[%c0_19, %c0_20] : memref<1x128xf32, #tpu.memory_space<vmem>>, vector<1x128xf32>
    %20 = vector.broadcast %19 : vector<1x128xf32> to vector<8x128xf32>
    %21 = arith.addf %18, %20 : vector<8x128xf32>
    %22 = vector.extract_strided_slice %11 {offsets = [0, 0], sizes = [8, 8], strides = [1, 1]} : vector<8x128xf32> to vector<8x8xf32>
    %23 = vector.extract_strided_slice %16 {offsets = [0, 0], sizes = [8, 8], strides = [1, 1]} : vector<8x128xf32> to vector<8x8xf32>
    %24 = vector.extract_strided_slice %21 {offsets = [0, 0], sizes = [8, 8], strides = [1, 1]} : vector<8x128xf32> to vector<8x8xf32>
    %cst_21 = arith.constant dense<0.000000e+00> : vector<8x8xf32>
    %25 = tpu.matmul %22, %23, %cst_21 {dimension_numbers = #tpu.dot_dimension_numbers<[1], [1], [0], [0], [0, 0, 1, 0], [], []>} : vector<8x8xf32>, vector<8x8xf32>, vector<8x8xf32> -> vector<8x8xf32>
    %cst_22 = arith.constant dense<0xFF800000> : vector<8xf32>
    %26 = vector.multi_reduction <maximumf>, %25, %cst_22 [1] : vector<8x8xf32> to vector<8xf32>
    %27 = vector.shape_cast %26 : vector<8xf32> to vector<8x1xf32>
    %28 = vector.broadcast %27 : vector<8x1xf32> to vector<8x8xf32>
    %29 = arith.subf %25, %28 : vector<8x8xf32>
    %30 = math.exp %29 : vector<8x8xf32>
    %cst_23 = arith.constant dense<0.000000e+00> : vector<8xf32>
    %31 = vector.multi_reduction <add>, %30, %cst_23 [1] : vector<8x8xf32> to vector<8xf32>
    %32 = vector.shape_cast %31 : vector<8xf32> to vector<8x1xf32>
    %33 = tpu.reciprocal %32 {approx = true} : vector<8x1xf32> -> vector<8x1xf32>
    %34 = vector.broadcast %33 : vector<8x1xf32> to vector<8x8xf32>
    %35 = arith.mulf %30, %34 : vector<8x8xf32>
    %cst_24 = arith.constant dense<0.000000e+00> : vector<8x8xf32>
    %36 = tpu.matmul %35, %24, %cst_24 {dimension_numbers = #tpu.dot_dimension_numbers<[1], [0], [0], [1], [0, 0, 1, 1], [], []>} : vector<8x8xf32>, vector<8x8xf32>, vector<8x8xf32> -> vector<8x8xf32>
    %37 = vector.extract_strided_slice %11 {offsets = [0, 8], sizes = [8, 8], strides = [1, 1]} : vector<8x128xf32> to vector<8x8xf32>
    %38 = vector.extract_strided_slice %16 {offsets = [0, 8], sizes = [8, 8], strides = [1, 1]} : vector<8x128xf32> to vector<8x8xf32>
    %39 = vector.extract_strided_slice %21 {offsets = [0, 8], sizes = [8, 8], strides = [1, 1]} : vector<8x128xf32> to vector<8x8xf32>
    %cst_25 = arith.constant dense<0.000000e+00> : vector<8x8xf32>
    %40 = tpu.matmul %37, %38, %cst_25 {dimension_numbers = #tpu.dot_dimension_numbers<[1], [1], [0], [0], [0, 0, 1, 0], [], []>} : vector<8x8xf32>, vector<8x8xf32>, vector<8x8xf32> -> vector<8x8xf32>
    %cst_26 = arith.constant dense<0xFF800000> : vector<8xf32>
    %41 = vector.multi_reduction <maximumf>, %40, %cst_26 [1] : vector<8x8xf32> to vector<8xf32>
    %42 = vector.shape_cast %41 : vector<8xf32> to vector<8x1xf32>
    %43 = vector.broadcast %42 : vector<8x1xf32> to vector<8x8xf32>
    %44 = arith.subf %40, %43 : vector<8x8xf32>
    %45 = math.exp %44 : vector<8x8xf32>
    %cst_27 = arith.constant dense<0.000000e+00> : vector<8xf32>
    %46 = vector.multi_reduction <add>, %45, %cst_27 [1] : vector<8x8xf32> to vector<8xf32>
    %47 = vector.shape_cast %46 : vector<8xf32> to vector<8x1xf32>
    %48 = tpu.reciprocal %47 {approx = true} : vector<8x1xf32> -> vector<8x1xf32>
    %49 = vector.broadcast %48 : vector<8x1xf32> to vector<8x8xf32>
    %50 = arith.mulf %45, %49 : vector<8x8xf32>
    %cst_28 = arith.constant dense<0.000000e+00> : vector<8x8xf32>
    %51 = tpu.matmul %50, %39, %cst_28 {dimension_numbers = #tpu.dot_dimension_numbers<[1], [0], [0], [1], [0, 0, 1, 1], [], []>} : vector<8x8xf32>, vector<8x8xf32>, vector<8x8xf32> -> vector<8x8xf32>
    %52 = vector.extract_strided_slice %11 {offsets = [0, 16], sizes = [8, 8], strides = [1, 1]} : vector<8x128xf32> to vector<8x8xf32>
    %53 = vector.extract_strided_slice %16 {offsets = [0, 16], sizes = [8, 8], strides = [1, 1]} : vector<8x128xf32> to vector<8x8xf32>
    %54 = vector.extract_strided_slice %21 {offsets = [0, 16], sizes = [8, 8], strides = [1, 1]} : vector<8x128xf32> to vector<8x8xf32>
    %cst_29 = arith.constant dense<0.000000e+00> : vector<8x8xf32>
    %55 = tpu.matmul %52, %53, %cst_29 {dimension_numbers = #tpu.dot_dimension_numbers<[1], [1], [0], [0], [0, 0, 1, 0], [], []>} : vector<8x8xf32>, vector<8x8xf32>, vector<8x8xf32> -> vector<8x8xf32>
    %cst_30 = arith.constant dense<0xFF800000> : vector<8xf32>
    %56 = vector.multi_reduction <maximumf>, %55, %cst_30 [1] : vector<8x8xf32> to vector<8xf32>
    %57 = vector.shape_cast %56 : vector<8xf32> to vector<8x1xf32>
    %58 = vector.broadcast %57 : vector<8x1xf32> to vector<8x8xf32>
    %59 = arith.subf %55, %58 : vector<8x8xf32>
    %60 = math.exp %59 : vector<8x8xf32>
    %cst_31 = arith.constant dense<0.000000e+00> : vector<8xf32>
    %61 = vector.multi_reduction <add>, %60, %cst_31 [1] : vector<8x8xf32> to vector<8xf32>
    %62 = vector.shape_cast %61 : vector<8xf32> to vector<8x1xf32>
    %63 = tpu.reciprocal %62 {approx = true} : vector<8x1xf32> -> vector<8x1xf32>
    %64 = vector.broadcast %63 : vector<8x1xf32> to vector<8x8xf32>
    %65 = arith.mulf %60, %64 : vector<8x8xf32>
    %cst_32 = arith.constant dense<0.000000e+00> : vector<8x8xf32>
    %66 = tpu.matmul %65, %54, %cst_32 {dimension_numbers = #tpu.dot_dimension_numbers<[1], [0], [0], [1], [0, 0, 1, 1], [], []>} : vector<8x8xf32>, vector<8x8xf32>, vector<8x8xf32> -> vector<8x8xf32>
    %67 = vector.extract_strided_slice %11 {offsets = [0, 24], sizes = [8, 8], strides = [1, 1]} : vector<8x128xf32> to vector<8x8xf32>
    %68 = vector.extract_strided_slice %16 {offsets = [0, 24], sizes = [8, 8], strides = [1, 1]} : vector<8x128xf32> to vector<8x8xf32>
    %69 = vector.extract_strided_slice %21 {offsets = [0, 24], sizes = [8, 8], strides = [1, 1]} : vector<8x128xf32> to vector<8x8xf32>
    %cst_33 = arith.constant dense<0.000000e+00> : vector<8x8xf32>
    %70 = tpu.matmul %67, %68, %cst_33 {dimension_numbers = #tpu.dot_dimension_numbers<[1], [1], [0], [0], [0, 0, 1, 0], [], []>} : vector<8x8xf32>, vector<8x8xf32>, vector<8x8xf32> -> vector<8x8xf32>
    %cst_34 = arith.constant dense<0xFF800000> : vector<8xf32>
    %71 = vector.multi_reduction <maximumf>, %70, %cst_34 [1] : vector<8x8xf32> to vector<8xf32>
    %72 = vector.shape_cast %71 : vector<8xf32> to vector<8x1xf32>
    %73 = vector.broadcast %72 : vector<8x1xf32> to vector<8x8xf32>
    %74 = arith.subf %70, %73 : vector<8x8xf32>
    %75 = math.exp %74 : vector<8x8xf32>
    %cst_35 = arith.constant dense<0.000000e+00> : vector<8xf32>
    %76 = vector.multi_reduction <add>, %75, %cst_35 [1] : vector<8x8xf32> to vector<8xf32>
    %77 = vector.shape_cast %76 : vector<8xf32> to vector<8x1xf32>
    %78 = tpu.reciprocal %77 {approx = true} : vector<8x1xf32> -> vector<8x1xf32>
    %79 = vector.broadcast %78 : vector<8x1xf32> to vector<8x8xf32>
    %80 = arith.mulf %75, %79 : vector<8x8xf32>
    %cst_36 = arith.constant dense<0.000000e+00> : vector<8x8xf32>
    %81 = tpu.matmul %80, %69, %cst_36 {dimension_numbers = #tpu.dot_dimension_numbers<[1], [0], [0], [1], [0, 0, 1, 1], [], []>} : vector<8x8xf32>, vector<8x8xf32>, vector<8x8xf32> -> vector<8x8xf32>
    %cst_37 = arith.constant 0.000000e+00 : f32
    %82 = vector.broadcast %cst_37 : f32 to vector<8x96xf32>
    %83 = tpu.concatenate %36, %51, %66, %81, %82 in 1 : vector<8x8xf32>, vector<8x8xf32>, vector<8x8xf32>, vector<8x8xf32>, vector<8x96xf32> -> vector<8x128xf32>
    %c0_38 = arith.constant 0 : index
    %c0_39 = arith.constant 0 : index
    %84 = vector.load %arg11[%c0_38, %c0_39] : memref<128x128xf32, #tpu.memory_space<vmem>>, vector<128x128xf32>
    %cst_40 = arith.constant dense<0.000000e+00> : vector<8x128xf32>
    %85 = tpu.matmul %83, %84, %cst_40 {dimension_numbers = #tpu.dot_dimension_numbers<[1], [0], [0], [1], [0, 0, 1, 1], [], []>} : vector<8x128xf32>, vector<128x128xf32>, vector<8x128xf32> -> vector<8x128xf32>
    %c0_41 = arith.constant 0 : index
    %c0_42 = arith.constant 0 : index
    %86 = vector.load %arg12[%c0_41, %c0_42] : memref<1x128xf32, #tpu.memory_space<vmem>>, vector<1x128xf32>
    %87 = vector.broadcast %86 : vector<1x128xf32> to vector<8x128xf32>
    %88 = arith.addf %85, %87 : vector<8x128xf32>
    %89 = arith.addf %0, %88 : vector<8x128xf32>
    %c0_43 = arith.constant 0 : index
    %c0_44 = arith.constant 0 : index
    %90 = vector.load %arg13[%c0_43, %c0_44] : memref<1x128xf32, #tpu.memory_space<vmem>>, vector<1x128xf32>
    %c0_45 = arith.constant 0 : index
    %c0_46 = arith.constant 0 : index
    %91 = vector.load %arg14[%c0_45, %c0_46] : memref<1x128xf32, #tpu.memory_space<vmem>>, vector<1x128xf32>
    %cst_47 = arith.constant 0.000000e+00 : f32
    %92 = vector.shape_cast %6 : vector<1x128xi1> to vector<1x128xi1>
    %93 = vector.broadcast %92 : vector<1x128xi1> to vector<8x128xi1>
    %94 = vector.broadcast %cst_47 : f32 to vector<8x128xf32>
    %95 = arith.select %93, %89, %94 : vector<8x128xi1>, vector<8x128xf32>
    %cst_48 = arith.constant dense<0.000000e+00> : vector<8xf32>
    %96 = vector.multi_reduction <add>, %95, %cst_48 [1] : vector<8x128xf32> to vector<8xf32>
    %97 = vector.shape_cast %96 : vector<8xf32> to vector<8x1xf32>
    %cst_49 = arith.constant 3.125000e-02 : f32
    %98 = vector.broadcast %cst_49 : f32 to vector<8x1xf32>
    %99 = arith.mulf %97, %98 : vector<8x1xf32>
    %100 = vector.broadcast %99 : vector<8x1xf32> to vector<8x128xf32>
    %101 = arith.subf %95, %100 : vector<8x128xf32>
    %cst_50 = arith.constant 0.000000e+00 : f32
    %102 = vector.shape_cast %6 : vector<1x128xi1> to vector<1x128xi1>
    %103 = vector.broadcast %102 : vector<1x128xi1> to vector<8x128xi1>
    %104 = vector.broadcast %cst_50 : f32 to vector<8x128xf32>
    %105 = arith.select %103, %101, %104 : vector<8x128xi1>, vector<8x128xf32>
    %106 = arith.mulf %105, %105 : vector<8x128xf32>
    %cst_51 = arith.constant dense<0.000000e+00> : vector<8xf32>
    %107 = vector.multi_reduction <add>, %106, %cst_51 [1] : vector<8x128xf32> to vector<8xf32>
    %108 = vector.shape_cast %107 : vector<8xf32> to vector<8x1xf32>
    %cst_52 = arith.constant 3.125000e-02 : f32
    %109 = vector.broadcast %cst_52 : f32 to vector<8x1xf32>
    %110 = arith.mulf %108, %109 : vector<8x1xf32>
    %cst_53 = arith.constant 9.99999974E-6 : f32
    %111 = vector.broadcast %cst_53 : f32 to vector<8x1xf32>
    %112 = arith.addf %110, %111 : vector<8x1xf32>
    %113 = math.rsqrt %112 : vector<8x1xf32>
    %114 = vector.broadcast %113 : vector<8x1xf32> to vector<8x128xf32>
    %115 = arith.mulf %105, %114 : vector<8x128xf32>
    %116 = vector.broadcast %90 : vector<1x128xf32> to vector<8x128xf32>
    %117 = arith.mulf %115, %116 : vector<8x128xf32>
    %118 = vector.broadcast %91 : vector<1x128xf32> to vector<8x128xf32>
    %119 = arith.addf %117, %118 : vector<8x128xf32>
    %cst_54 = arith.constant 0.000000e+00 : f32
    %120 = vector.broadcast %cst_54 : f32 to vector<8x128xf32>
    %c0_55 = arith.constant 0 : index
    %c0_56 = arith.constant 0 : index
    %121 = vector.load %arg15[%c0_55, %c0_56] : memref<128x128xf32, #tpu.memory_space<vmem>>, vector<128x128xf32>
    %cst_57 = arith.constant dense<0.000000e+00> : vector<8x128xf32>
    %122 = tpu.matmul %119, %121, %cst_57 {dimension_numbers = #tpu.dot_dimension_numbers<[1], [0], [0], [1], [0, 0, 1, 1], [], []>} : vector<8x128xf32>, vector<128x128xf32>, vector<8x128xf32> -> vector<8x128xf32>
    %c0_58 = arith.constant 0 : index
    %c0_59 = arith.constant 0 : index
    %123 = vector.load %arg16[%c0_58, %c0_59] : memref<1x128xf32, #tpu.memory_space<vmem>>, vector<1x128xf32>
    %124 = vector.broadcast %123 : vector<1x128xf32> to vector<8x128xf32>
    %125 = arith.addf %122, %124 : vector<8x128xf32>
    %cst_60 = arith.constant 0.000000e+00 : f32
    %126 = vector.broadcast %cst_60 : f32 to vector<8x128xf32>
    %127 = arith.maximumf %125, %126 : vector<8x128xf32>
    %c0_61 = arith.constant 0 : index
    %c0_62 = arith.constant 0 : index
    %128 = vector.load %arg17[%c0_61, %c0_62] : memref<128x128xf32, #tpu.memory_space<vmem>>, vector<128x128xf32>
    %cst_63 = arith.constant dense<0.000000e+00> : vector<8x128xf32>
    %129 = tpu.matmul %127, %128, %cst_63 {dimension_numbers = #tpu.dot_dimension_numbers<[1], [0], [0], [1], [0, 0, 1, 1], [], []>} : vector<8x128xf32>, vector<128x128xf32>, vector<8x128xf32> -> vector<8x128xf32>
    %130 = arith.addf %120, %129 : vector<8x128xf32>
    %c0_64 = arith.constant 0 : index
    %c0_65 = arith.constant 0 : index
    %131 = vector.load %arg18[%c0_64, %c0_65] : memref<1x128xf32, #tpu.memory_space<vmem>>, vector<1x128xf32>
    %132 = vector.broadcast %131 : vector<1x128xf32> to vector<8x128xf32>
    %133 = arith.addf %130, %132 : vector<8x128xf32>
    %134 = arith.addf %119, %133 : vector<8x128xf32>
    %c0_66 = arith.constant 0 : index
    %c0_67 = arith.constant 0 : index
    %135 = vector.load %arg19[%c0_66, %c0_67] : memref<1x128xf32, #tpu.memory_space<vmem>>, vector<1x128xf32>
    %c0_68 = arith.constant 0 : index
    %c0_69 = arith.constant 0 : index
    %136 = vector.load %arg20[%c0_68, %c0_69] : memref<1x128xf32, #tpu.memory_space<vmem>>, vector<1x128xf32>
    %cst_70 = arith.constant 0.000000e+00 : f32
    %137 = vector.shape_cast %6 : vector<1x128xi1> to vector<1x128xi1>
    %138 = vector.broadcast %137 : vector<1x128xi1> to vector<8x128xi1>
    %139 = vector.broadcast %cst_70 : f32 to vector<8x128xf32>
    %140 = arith.select %138, %134, %139 : vector<8x128xi1>, vector<8x128xf32>
    %cst_71 = arith.constant dense<0.000000e+00> : vector<8xf32>
    %141 = vector.multi_reduction <add>, %140, %cst_71 [1] : vector<8x128xf32> to vector<8xf32>
    %142 = vector.shape_cast %141 : vector<8xf32> to vector<8x1xf32>
    %cst_72 = arith.constant 3.125000e-02 : f32
    %143 = vector.broadcast %cst_72 : f32 to vector<8x1xf32>
    %144 = arith.mulf %142, %143 : vector<8x1xf32>
    %145 = vector.broadcast %144 : vector<8x1xf32> to vector<8x128xf32>
    %146 = arith.subf %140, %145 : vector<8x128xf32>
    %cst_73 = arith.constant 0.000000e+00 : f32
    %147 = vector.shape_cast %6 : vector<1x128xi1> to vector<1x128xi1>
    %148 = vector.broadcast %147 : vector<1x128xi1> to vector<8x128xi1>
    %149 = vector.broadcast %cst_73 : f32 to vector<8x128xf32>
    %150 = arith.select %148, %146, %149 : vector<8x128xi1>, vector<8x128xf32>
    %151 = arith.mulf %150, %150 : vector<8x128xf32>
    %cst_74 = arith.constant dense<0.000000e+00> : vector<8xf32>
    %152 = vector.multi_reduction <add>, %151, %cst_74 [1] : vector<8x128xf32> to vector<8xf32>
    %153 = vector.shape_cast %152 : vector<8xf32> to vector<8x1xf32>
    %cst_75 = arith.constant 3.125000e-02 : f32
    %154 = vector.broadcast %cst_75 : f32 to vector<8x1xf32>
    %155 = arith.mulf %153, %154 : vector<8x1xf32>
    %cst_76 = arith.constant 9.99999974E-6 : f32
    %156 = vector.broadcast %cst_76 : f32 to vector<8x1xf32>
    %157 = arith.addf %155, %156 : vector<8x1xf32>
    %158 = math.rsqrt %157 : vector<8x1xf32>
    %159 = vector.broadcast %158 : vector<8x1xf32> to vector<8x128xf32>
    %160 = arith.mulf %150, %159 : vector<8x128xf32>
    %161 = vector.broadcast %135 : vector<1x128xf32> to vector<8x128xf32>
    %162 = arith.mulf %160, %161 : vector<8x128xf32>
    %163 = vector.broadcast %136 : vector<1x128xf32> to vector<8x128xf32>
    %164 = arith.addf %162, %163 : vector<8x128xf32>
    %c0_77 = arith.constant 0 : index
    %c0_78 = arith.constant 0 : index
    %165 = vector.load %arg21[%c0_77, %c0_78] : memref<8x128xf32, #tpu.memory_space<vmem>>, vector<8x128xf32>
    tpu.vector_store %arg21[%c0_77, %c0_78], %164 {strides = array<i32>} : memref<8x128xf32, #tpu.memory_space<vmem>>, vector<8x128xf32>,
    return
  }
  func.func @transform_0(%arg0: i32) -> (i32, i32) {
    %c0_i32 = arith.constant 0 : i32
    %c0_i32_0 = arith.constant 0 : i32
    return %arg0, %c0_i32 : i32, i32
  }
  func.func @transform_1(%arg0: i32) -> (i32, i32) {
    %c0_i32 = arith.constant 0 : i32
    %c0_i32_0 = arith.constant 0 : i32
    return %arg0, %c0_i32 : i32, i32
  }
  func.func @transform_2(%arg0: i32) -> (i32, i32) {
    %c0_i32 = arith.constant 0 : i32
    %c0_i32_0 = arith.constant 0 : i32
    return %arg0, %c0_i32 : i32, i32
  }
  func.func @transform_3(%arg0: i32) -> (i32, i32) {
    %c0_i32 = arith.constant 0 : i32
    %c0_i32_0 = arith.constant 0 : i32
    return %arg0, %c0_i32 : i32, i32
  }
  func.func @transform_4(%arg0: i32) -> (i32, i32) {
    %c0_i32 = arith.constant 0 : i32
    %c0_i32_0 = arith.constant 0 : i32
    %c0_i32_1 = arith.constant 0 : i32
    return %c0_i32, %c0_i32_0 : i32, i32
  }
  func.func @transform_5(%arg0: i32) -> (i32, i32) {
    %c0_i32 = arith.constant 0 : i32
    %c0_i32_0 = arith.constant 0 : i32
    %c0_i32_1 = arith.constant 0 : i32
    return %c0_i32, %c0_i32_0 : i32, i32
  }
  func.func @transform_6(%arg0: i32) -> (i32, i32) {
    %c0_i32 = arith.constant 0 : i32
    %c0_i32_0 = arith.constant 0 : i32
    %c0_i32_1 = arith.constant 0 : i32
    return %c0_i32, %c0_i32_0 : i32, i32
  }
  func.func @transform_7(%arg0: i32) -> (i32, i32) {
    %c0_i32 = arith.constant 0 : i32
    %c0_i32_0 = arith.constant 0 : i32
    %c0_i32_1 = arith.constant 0 : i32
    return %c0_i32, %c0_i32_0 : i32, i32
  }
  func.func @transform_8(%arg0: i32) -> (i32, i32) {
    %c0_i32 = arith.constant 0 : i32
    %c0_i32_0 = arith.constant 0 : i32
    %c0_i32_1 = arith.constant 0 : i32
    return %c0_i32, %c0_i32_0 : i32, i32
  }
  func.func @transform_9(%arg0: i32) -> (i32, i32) {
    %c0_i32 = arith.constant 0 : i32
    %c0_i32_0 = arith.constant 0 : i32
    %c0_i32_1 = arith.constant 0 : i32
    return %c0_i32, %c0_i32_0 : i32, i32
  }
  func.func @transform_10(%arg0: i32) -> (i32, i32) {
    %c0_i32 = arith.constant 0 : i32
    %c0_i32_0 = arith.constant 0 : i32
    %c0_i32_1 = arith.constant 0 : i32
    return %c0_i32, %c0_i32_0 : i32, i32
  }
  func.func @transform_11(%arg0: i32) -> (i32, i32) {
    %c0_i32 = arith.constant 0 : i32
    %c0_i32_0 = arith.constant 0 : i32
    %c0_i32_1 = arith.constant 0 : i32
    return %c0_i32, %c0_i32_0 : i32, i32
  }
  func.func @transform_12(%arg0: i32) -> (i32, i32) {
    %c0_i32 = arith.constant 0 : i32
    %c0_i32_0 = arith.constant 0 : i32
    %c0_i32_1 = arith.constant 0 : i32
    return %c0_i32, %c0_i32_0 : i32, i32
  }
  func.func @transform_13(%arg0: i32) -> (i32, i32) {
    %c0_i32 = arith.constant 0 : i32
    %c0_i32_0 = arith.constant 0 : i32
    %c0_i32_1 = arith.constant 0 : i32
    return %c0_i32, %c0_i32_0 : i32, i32
  }
  func.func @transform_14(%arg0: i32) -> (i32, i32) {
    %c0_i32 = arith.constant 0 : i32
    %c0_i32_0 = arith.constant 0 : i32
    %c0_i32_1 = arith.constant 0 : i32
    return %c0_i32, %c0_i32_0 : i32, i32
  }
  func.func @transform_15(%arg0: i32) -> (i32, i32) {
    %c0_i32 = arith.constant 0 : i32
    %c0_i32_0 = arith.constant 0 : i32
    %c0_i32_1 = arith.constant 0 : i32
    return %c0_i32, %c0_i32_0 : i32, i32
  }
  func.func @transform_16(%arg0: i32) -> (i32, i32) {
    %c0_i32 = arith.constant 0 : i32
    %c0_i32_0 = arith.constant 0 : i32
    %c0_i32_1 = arith.constant 0 : i32
    return %c0_i32, %c0_i32_0 : i32, i32
  }
  func.func @transform_17(%arg0: i32) -> (i32, i32) {
    %c0_i32 = arith.constant 0 : i32
    %c0_i32_0 = arith.constant 0 : i32
    %c0_i32_1 = arith.constant 0 : i32
    return %c0_i32, %c0_i32_0 : i32, i32
  }
  func.func @transform_18(%arg0: i32) -> (i32, i32) {
    %c0_i32 = arith.constant 0 : i32
    %c0_i32_0 = arith.constant 0 : i32
    %c0_i32_1 = arith.constant 0 : i32
    return %c0_i32, %c0_i32_0 : i32, i32
  }
  func.func @transform_19(%arg0: i32) -> (i32, i32) {
    %c0_i32 = arith.constant 0 : i32
    %c0_i32_0 = arith.constant 0 : i32
    %c0_i32_1 = arith.constant 0 : i32
    return %c0_i32, %c0_i32_0 : i32, i32
  }
  func.func @transform_20(%arg0: i32) -> (i32, i32) {
    %c0_i32 = arith.constant 0 : i32
    %c0_i32_0 = arith.constant 0 : i32
    return %arg0, %c0_i32 : i32, i32
  }
}

</mosaic_0001>

<llo_original>
// kernel: tpu_custom_call.1
$region0: #{tpu_custom_call.1}
  #allocation0 [shape = 'u32[]', space=smem, size = 0x4, offset = 0x4, fixed_abs, tag = 'smem constant byte address 0x4 - core index']
  #allocation1 [shape = 'u32[144,128]{1,0:T(1,128)}', space=vmem, size = 0x12000, scoped, tag = 'internal scratch']
  %s0 = inlined_call_operand.hbm [shape: f32[16,128], index: 0, kind: input, shape index: {}]
  %s1 = inlined_call_operand.hbm [shape: f32[16,128], index: 1, kind: input, shape index: {}]
  %s2 = inlined_call_operand.hbm [shape: f32[16,128], index: 2, kind: input, shape index: {}]
  %s3 = inlined_call_operand.hbm [shape: f32[16,128], index: 3, kind: input, shape index: {}]
  %s4 = inlined_call_operand.hbm [shape: f32[128,128], index: 4, kind: input, shape index: {}]
  %s5 = inlined_call_operand.vmem [shape: f32[1,128], index: 5, kind: input, shape index: {}]
  %s6 = inlined_call_operand.hbm [shape: f32[128,128], index: 6, kind: input, shape index: {}]
  %s7 = inlined_call_operand.vmem [shape: f32[1,128], index: 7, kind: input, shape index: {}]
  %s8 = inlined_call_operand.hbm [shape: f32[128,128], index: 8, kind: input, shape index: {}]
  %s9 = inlined_call_operand.vmem [shape: f32[1,128], index: 9, kind: input, shape index: {}]
  %s10 = inlined_call_operand.hbm [shape: f32[128,128], index: 10, kind: input, shape index: {}]
  %s11 = inlined_call_operand.vmem [shape: f32[1,128], index: 11, kind: input, shape index: {}]
  %s12 = inlined_call_operand.vmem [shape: f32[1,128], index: 12, kind: input, shape index: {}]
  %s13 = inlined_call_operand.vmem [shape: f32[1,128], index: 13, kind: input, shape index: {}]
  %s14 = inlined_call_operand.hbm [shape: f32[128,128], index: 14, kind: input, shape index: {}]
  %s15 = inlined_call_operand.vmem [shape: f32[1,128], index: 15, kind: input, shape index: {}]
  %s16 = inlined_call_operand.hbm [shape: f32[128,128], index: 16, kind: input, shape index: {}]
  %s17 = inlined_call_operand.vmem [shape: f32[1,128], index: 17, kind: input, shape index: {}]
  %s18 = inlined_call_operand.vmem [shape: f32[1,128], index: 18, kind: input, shape index: {}]
  %s19 = inlined_call_operand.vmem [shape: f32[1,128], index: 19, kind: input, shape index: {}]
  %s20 = inlined_call_operand.hbm [shape: f32[16,128], index: 20, kind: output, shape index: {}]
  %s21 = sld [smem:[#allocation0]]
  $region153: #{tpu_custom_call.1} parent=0
    _
  %s23 = ssub.s32 1, %s21
  %s24 = scalar_select 0, %s23, %s21
  $region1: #{tpu_custom_call.1} parent=0
    #allocation2 [shape = 'u8[8192]{0}', space=vmem, size = 0x2000, scoped, tag = 'input window, operand 0']
    #allocation3 [shape = 's32[2]{0}', space=sflag, size = 0x8, scoped, tag = 'scoped memory for tpu_custom_call.1']
    #allocation4 [shape = 's32[2]{0}', space=sflag, size = 0x8, scoped, tag = 'scoped memory for tpu_custom_call.1']
    #allocation5 [shape = 'u8[8192]{0}', space=vmem, size = 0x2000, scoped, tag = 'input window, operand 1']
    #allocation6 [shape = 's32[2]{0}', space=sflag, size = 0x8, scoped, tag = 'scoped memory for tpu_custom_call.1']
    #allocation7 [shape = 'u8[8192]{0}', space=vmem, size = 0x2000, scoped, tag = 'input window, operand 2']
    #allocation8 [shape = 'u8[8192]{0}', space=vmem, size = 0x2000, scoped, tag = 'input window, operand 3']
    #allocation9 [shape = 's32[2]{0}', space=sflag, size = 0x8, scoped, tag = 'scoped memory for tpu_custom_call.1']
    #allocation10 [shape = 'u8[65536]{0}', space=vmem, size = 0x10000, scoped, tag = 'input window, operand 4, single buffered']
    #allocation11 [shape = 'u8[65536]{0}', space=vmem, size = 0x10000, scoped, tag = 'input window, operand 6, single buffered']
    #allocation12 [shape = 's32[1]{0}', space=sflag, size = 0x4, scoped, tag = 'scoped memory for tpu_custom_call.1']
    #allocation13 [shape = 'u8[65536]{0}', space=vmem, size = 0x10000, scoped, tag = 'input window, operand 8, single buffered']
    #allocation14 [shape = 'u8[65536]{0}', space=vmem, size = 0x10000, scoped, tag = 'input window, operand 10, single buffered']
    #allocation15 [shape = 's32[1]{0}', space=sflag, size = 0x4, scoped, tag = 'scoped memory for tpu_custom_call.1']
    #allocation16 [shape = 'u8[65536]{0}', space=vmem, size = 0x10000, scoped, tag = 'input window, operand 14, single buffered']
    #allocation17 [shape = 'u8[65536]{0}', space=vmem, size = 0x10000, scoped, tag = 'input window, operand 16, single buffered']
    #allocation18 [shape = 's32[1]{0}', space=sflag, size = 0x4, scoped, tag = 'scoped memory for tpu_custom_call.1']
    #allocation19 [shape = 'u8[8192]{0}', space=vmem, size = 0x2000, scoped, tag = 'output window, operand 0']
    %25 = vsyncpa [#allocation3], 0
    %s26 = scalar_lea.sflag [#allocation3], 1
    %27 = vsyncpa %s26, 0
    %28 = vsyncpa [#allocation6], 0
    %s29 = scalar_lea.sflag [#allocation6], 1
    %30 = vsyncpa %s29, 0
    %31 = vsyncpa [#allocation9], 0
    %s32 = scalar_lea.sflag [#allocation9], 1
    %33 = vsyncpa %s32, 0
    %34 = vsyncpa [#allocation12], 0
    %35 = vsyncpa [#allocation15], 0
    %36 = vsyncpa [#allocation18], 0
    %37 = vsyncpa [#allocation4], 0
    %s38 = scalar_lea.sflag [#allocation4], 1
    %39 = vsyncpa %s38, 0
    loop: start=0, step=1, limit=4
    $region2: #{tpu_custom_call.1} parent=1 // loop_pre_header
      _
    $region3: #{tpu_custom_call.1} parent=1 // loop_header
      %s41 = sphi 0, %s45
      %p42 = scmp.ge.s32.totalorder %s41, 4
      %s51 = sphi 0, %s53
      %s54 = sphi 0, %s51
      %s55 = sphi 0, %s54
      %s71 = sphi 0, %s55
      %s77 = sphi 0, %s79
      %s80 = sphi 0, %s77
      %s81 = sphi 0, %s80
      %s97 = sphi 0, %s81
      %s103 = sphi 0, %s105
      %s106 = sphi 0, %s103
      %s107 = sphi 0, %s106
      %s123 = sphi 0, %s107
      %s129 = sphi 0, %s131
      %s132 = sphi 0, %s129
      %s133 = sphi 0, %s132
      %s149 = sphi 0, %s133
      %s153 = sphi 0, %s153
      %s155 = sphi 0, %s153
      %s156 = sphi 0, %s155
      %s170 = sphi 0, %s156
      %s174 = sphi 0, %s174
      %s176 = sphi 0, %s174
      %s177 = sphi 0, %s176
      %s191 = sphi 0, %s177
      %s195 = sphi 0, %s195
      %s197 = sphi 0, %s195
      %s198 = sphi 0, %s197
      %s212 = sphi 0, %s198
      %s216 = sphi 0, %s216
      %s218 = sphi 0, %s216
      %s219 = sphi 0, %s218
      %s233 = sphi 0, %s219
      %s237 = sphi 0, %s237
      %s239 = sphi 0, %s237
      %s240 = sphi 0, %s239
      %s254 = sphi 0, %s240
      %s258 = sphi 0, %s258
      %s260 = sphi 0, %s258
      %s261 = sphi 0, %s260
      %s275 = sphi 0, %s261
      %s279 = sphi 0, %s279
      %s281 = sphi 0, %s279
      %s282 = sphi 0, %s281
      %s296 = sphi 0, %s282
      %s300 = sphi 0, %s300
      %s302 = sphi 0, %s300
      %s303 = sphi 0, %s302
      %s317 = sphi 0, %s303
      %s321 = sphi 0, %s321
      %s323 = sphi 0, %s321
      %s324 = sphi 0, %s323
      %s338 = sphi 0, %s324
      %s342 = sphi 0, %s342
      %s344 = sphi 0, %s342
      %s345 = sphi 0, %s344
      %s359 = sphi 0, %s345
      %s363 = sphi 0, %s363
      %s365 = sphi 0, %s363
      %s366 = sphi 0, %s365
      %s380 = sphi 0, %s366
      %s384 = sphi 0, %s384
      %s386 = sphi 0, %s384
      %s387 = sphi 0, %s386
      %s401 = sphi 0, %s387
      %s405 = sphi 0, %s405
      %s407 = sphi 0, %s405
      %s408 = sphi 0, %s407
      %s422 = sphi 0, %s408
      %s426 = sphi 0, %s426
      %s428 = sphi 0, %s426
      %s429 = sphi 0, %s428
      %s443 = sphi 0, %s429
      %s447 = sphi 0, %s447
      %s449 = sphi 0, %s447
      %s450 = sphi 0, %s449
      %s464 = sphi 0, %s450
      %s468 = sphi 0, %s468
      %s470 = sphi 0, %s468
      %s471 = sphi 0, %s470
      %s485 = sphi 0, %s471
      %s491 = sphi 0, %s493
      %s494 = sphi 0, %s491
      %s495 = sphi 0, %s494
      %s511 = sphi 0, %s495
    $region4: #{tpu_custom_call.1} parent=1 // loop_header_branch
      %44 = sbr.rel (%p42) target = $region8
    $region5: #{tpu_custom_call.1} parent=1 // loop_body
      %s46 = ssub.s32 %s41, 1
      %s47 = ssub.s32 %s41, 2
      %s48 = sadd.s32 %s41, 1
      %s49 = ssub.s32 %s41, %s48
      %p50 = scmp.eq.s32.totalorder %s49, 0
      %s52 = sadd.s32 %s51, 1
      %s53 = scalar_select %p50, %s51, %s52
      %p56 = pneg %p50
      %p57 = scmp.eq.s32.totalorder %s41, 1
      %p58 = por %p56, %p57
      %p59 = scmp.ne.s32.totalorder %s51, %s54
      %p60 = scmp.eq.s32.totalorder %s41, 0
      %p61 = por %p59, %p60
      %p62 = scmp.ne.s32.totalorder %s51, %s54
      %p63 = scmp.eq.s32.totalorder %s46, 1
      %p64 = por %p62, %p63
      %p65 = scmp.ne.s32.totalorder %s54, %s55
      %p66 = scmp.eq.s32.totalorder %s46, 0
      %p67 = por %p65, %p66
      %p68 = scmp.ne.s32.totalorder %s54, %s55
      %p69 = scmp.eq.s32.totalorder %s47, 1
      %p70 = por %p68, %p69
      %p72 = scmp.ne.s32.totalorder %s55, %s71
      %p73 = scmp.eq.s32.totalorder %s47, 0
      %p74 = por %p72, %p73
      %s75 = ssub.s32 %s41, %s48
      %p76 = scmp.eq.s32.totalorder %s75, 0
      %s78 = sadd.s32 %s77, 1
      %s79 = scalar_select %p76, %s77, %s78
      %p82 = pneg %p76
      %p83 = scmp.eq.s32.totalorder %s41, 1
      %p84 = por %p82, %p83
      %p85 = scmp.ne.s32.totalorder %s77, %s80
      %p86 = scmp.eq.s32.totalorder %s41, 0
      %p87 = por %p85, %p86
      %p88 = scmp.ne.s32.totalorder %s77, %s80
      %p89 = scmp.eq.s32.totalorder %s46, 1
      %p90 = por %p88, %p89
      %p91 = scmp.ne.s32.totalorder %s80, %s81
      %p92 = scmp.eq.s32.totalorder %s46, 0
      %p93 = por %p91, %p92
      %p94 = scmp.ne.s32.totalorder %s80, %s81
      %p95 = scmp.eq.s32.totalorder %s47, 1
      %p96 = por %p94, %p95
      %p98 = scmp.ne.s32.totalorder %s81, %s97
      %p99 = scmp.eq.s32.totalorder %s47, 0
      %p100 = por %p98, %p99
      %s101 = ssub.s32 %s41, %s48
      %p102 = scmp.eq.s32.totalorder %s101, 0
      %s104 = sadd.s32 %s103, 1
      %s105 = scalar_select %p102, %s103, %s104
      %p108 = pneg %p102
      %p109 = scmp.eq.s32.totalorder %s41, 1
      %p110 = por %p108, %p109
      %p111 = scmp.ne.s32.totalorder %s103, %s106
      %p112 = scmp.eq.s32.totalorder %s41, 0
      %p113 = por %p111, %p112
      %p114 = scmp.ne.s32.totalorder %s103, %s106
      %p115 = scmp.eq.s32.totalorder %s46, 1
      %p116 = por %p114, %p115
      %p117 = scmp.ne.s32.totalorder %s106, %s107
      %p118 = scmp.eq.s32.totalorder %s46, 0
      %p119 = por %p117, %p118
      %p120 = scmp.ne.s32.totalorder %s106, %s107
      %p121 = scmp.eq.s32.totalorder %s47, 1
      %p122 = por %p120, %p121
      %p124 = scmp.ne.s32.totalorder %s107, %s123
      %p125 = scmp.eq.s32.totalorder %s47, 0
      %p126 = por %p124, %p125
      %s127 = ssub.s32 %s41, %s48
      %p128 = scmp.eq.s32.totalorder %s127, 0
      %s130 = sadd.s32 %s129, 1
      %s131 = scalar_select %p128, %s129, %s130
      %p134 = pneg %p128
      %p135 = scmp.eq.s32.totalorder %s41, 1
      %p136 = por %p134, %p135
      %p137 = scmp.ne.s32.totalorder %s129, %s132
      %p138 = scmp.eq.s32.totalorder %s41, 0
      %p139 = por %p137, %p138
      %p140 = scmp.ne.s32.totalorder %s129, %s132
      %p141 = scmp.eq.s32.totalorder %s46, 1
      %p142 = por %p140, %p141
      %p143 = scmp.ne.s32.totalorder %s132, %s133
      %p144 = scmp.eq.s32.totalorder %s46, 0
      %p145 = por %p143, %p144
      %p146 = scmp.ne.s32.totalorder %s132, %s133
      %p147 = scmp.eq.s32.totalorder %s47, 1
      %p148 = por %p146, %p147
      %p150 = scmp.ne.s32.totalorder %s133, %s149
      %p151 = scmp.eq.s32.totalorder %s47, 0
      %p152 = por %p150, %p151
      %s154 = sadd.s32 %s153, 1
      %p157 = scmp.eq.s32.totalorder %s41, 1
      %p158 = scmp.ne.s32.totalorder %s153, %s155
      %p159 = scmp.eq.s32.totalorder %s41, 0
      %p160 = por %p158, %p159
      %p161 = scmp.ne.s32.totalorder %s153, %s155
      %p162 = scmp.eq.s32.totalorder %s46, 1
      %p163 = por %p161, %p162
      %p164 = scmp.ne.s32.totalorder %s155, %s156
      %p165 = scmp.eq.s32.totalorder %s46, 0
      %p166 = por %p164, %p165
      %p167 = scmp.ne.s32.totalorder %s155, %s156
      %p168 = scmp.eq.s32.totalorder %s47, 1
      %p169 = por %p167, %p168
      %p171 = scmp.ne.s32.totalorder %s156, %s170
      %p172 = scmp.eq.s32.totalorder %s47, 0
      %p173 = por %p171, %p172
      %s175 = sadd.s32 %s174, 1
      %p178 = scmp.eq.s32.totalorder %s41, 1
      %p179 = scmp.ne.s32.totalorder %s174, %s176
      %p180 = scmp.eq.s32.totalorder %s41, 0
      %p181 = por %p179, %p180
      %p182 = scmp.ne.s32.totalorder %s174, %s176
      %p183 = scmp.eq.s32.totalorder %s46, 1
      %p184 = por %p182, %p183
      %p185 = scmp.ne.s32.totalorder %s176, %s177
      %p186 = scmp.eq.s32.totalorder %s46, 0
      %p187 = por %p185, %p186
      %p188 = scmp.ne.s32.totalorder %s176, %s177
      %p189 = scmp.eq.s32.totalorder %s47, 1
      %p190 = por %p188, %p189
      %p192 = scmp.ne.s32.totalorder %s177, %s191
      %p193 = scmp.eq.s32.totalorder %s47, 0
      %p194 = por %p192, %p193
      %s196 = sadd.s32 %s195, 1
      %p199 = scmp.eq.s32.totalorder %s41, 1
      %p200 = scmp.ne.s32.totalorder %s195, %s197
      %p201 = scmp.eq.s32.totalorder %s41, 0
      %p202 = por %p200, %p201
      %p203 = scmp.ne.s32.totalorder %s195, %s197
      %p204 = scmp.eq.s32.totalorder %s46, 1
      %p205 = por %p203, %p204
      %p206 = scmp.ne.s32.totalorder %s197, %s198
      %p207 = scmp.eq.s32.totalorder %s46, 0
      %p208 = por %p206, %p207
      %p209 = scmp.ne.s32.totalorder %s197, %s198
      %p210 = scmp.eq.s32.totalorder %s47, 1
      %p211 = por %p209, %p210
      %p213 = scmp.ne.s32.totalorder %s198, %s212
      %p214 = scmp.eq.s32.totalorder %s47, 0
      %p215 = por %p213, %p214
      %s217 = sadd.s32 %s216, 1
      %p220 = scmp.eq.s32.totalorder %s41, 1
      %p221 = scmp.ne.s32.totalorder %s216, %s218
      %p222 = scmp.eq.s32.totalorder %s41, 0
      %p223 = por %p221, %p222
      %p224 = scmp.ne.s32.totalorder %s216, %s218
      %p225 = scmp.eq.s32.totalorder %s46, 1
      %p226 = por %p224, %p225
      %p227 = scmp.ne.s32.totalorder %s218, %s219
      %p228 = scmp.eq.s32.totalorder %s46, 0
      %p229 = por %p227, %p228
      %p230 = scmp.ne.s32.totalorder %s218, %s219
      %p231 = scmp.eq.s32.totalorder %s47, 1
      %p232 = por %p230, %p231
      %p234 = scmp.ne.s32.totalorder %s219, %s233
      %p235 = scmp.eq.s32.totalorder %s47, 0
      %p236 = por %p234, %p235
      %s238 = sadd.s32 %s237, 1
      %p241 = scmp.eq.s32.totalorder %s41, 1
      %p242 = scmp.ne.s32.totalorder %s237, %s239
      %p243 = scmp.eq.s32.totalorder %s41, 0
      %p244 = por %p242, %p243
      %p245 = scmp.ne.s32.totalorder %s237, %s239
      %p246 = scmp.eq.s32.totalorder %s46, 1
      %p247 = por %p245, %p246
      %p248 = scmp.ne.s32.totalorder %s239, %s240
      %p249 = scmp.eq.s32.totalorder %s46, 0
      %p250 = por %p248, %p249
      %p251 = scmp.ne.s32.totalorder %s239, %s240
      %p252 = scmp.eq.s32.totalorder %s47, 1
      %p253 = por %p251, %p252
      %p255 = scmp.ne.s32.totalorder %s240, %s254
      %p256 = scmp.eq.s32.totalorder %s47, 0
      %p257 = por %p255, %p256
      %s259 = sadd.s32 %s258, 1
      %p262 = scmp.eq.s32.totalorder %s41, 1
      %p263 = scmp.ne.s32.totalorder %s258, %s260
      %p264 = scmp.eq.s32.totalorder %s41, 0
      %p265 = por %p263, %p264
      %p266 = scmp.ne.s32.totalorder %s258, %s260
      %p267 = scmp.eq.s32.totalorder %s46, 1
      %p268 = por %p266, %p267
      %p269 = scmp.ne.s32.totalorder %s260, %s261
      %p270 = scmp.eq.s32.totalorder %s46, 0
      %p271 = por %p269, %p270
      %p272 = scmp.ne.s32.totalorder %s260, %s261
      %p273 = scmp.eq.s32.totalorder %s47, 1
      %p274 = por %p272, %p273
      %p276 = scmp.ne.s32.totalorder %s261, %s275
      %p277 = scmp.eq.s32.totalorder %s47, 0
      %p278 = por %p276, %p277
      %s280 = sadd.s32 %s279, 1
      %p283 = scmp.eq.s32.totalorder %s41, 1
      %p284 = scmp.ne.s32.totalorder %s279, %s281
      %p285 = scmp.eq.s32.totalorder %s41, 0
      %p286 = por %p284, %p285
      %p287 = scmp.ne.s32.totalorder %s279, %s281
      %p288 = scmp.eq.s32.totalorder %s46, 1
      %p289 = por %p287, %p288
      %p290 = scmp.ne.s32.totalorder %s281, %s282
      %p291 = scmp.eq.s32.totalorder %s46, 0
      %p292 = por %p290, %p291
      %p293 = scmp.ne.s32.totalorder %s281, %s282
      %p294 = scmp.eq.s32.totalorder %s47, 1
      %p295 = por %p293, %p294
      %p297 = scmp.ne.s32.totalorder %s282, %s296
      %p298 = scmp.eq.s32.totalorder %s47, 0
      %p299 = por %p297, %p298
      %s301 = sadd.s32 %s300, 1
      %p304 = scmp.eq.s32.totalorder %s41, 1
      %p305 = scmp.ne.s32.totalorder %s300, %s302
      %p306 = scmp.eq.s32.totalorder %s41, 0
      %p307 = por %p305, %p306
      %p308 = scmp.ne.s32.totalorder %s300, %s302
      %p309 = scmp.eq.s32.totalorder %s46, 1
      %p310 = por %p308, %p309
      %p311 = scmp.ne.s32.totalorder %s302, %s303
      %p312 = scmp.eq.s32.totalorder %s46, 0
      %p313 = por %p311, %p312
      %p314 = scmp.ne.s32.totalorder %s302, %s303
      %p315 = scmp.eq.s32.totalorder %s47, 1
      %p316 = por %p314, %p315
      %p318 = scmp.ne.s32.totalorder %s303, %s317
      %p319 = scmp.eq.s32.totalorder %s47, 0
      %p320 = por %p318, %p319
      %s322 = sadd.s32 %s321, 1
      %p325 = scmp.eq.s32.totalorder %s41, 1
      %p326 = scmp.ne.s32.totalorder %s321, %s323
      %p327 = scmp.eq.s32.totalorder %s41, 0
      %p328 = por %p326, %p327
      %p329 = scmp.ne.s32.totalorder %s321, %s323
      %p330 = scmp.eq.s32.totalorder %s46, 1
      %p331 = por %p329, %p330
      %p332 = scmp.ne.s32.totalorder %s323, %s324
      %p333 = scmp.eq.s32.totalorder %s46, 0
      %p334 = por %p332, %p333
      %p335 = scmp.ne.s32.totalorder %s323, %s324
      %p336 = scmp.eq.s32.totalorder %s47, 1
      %p337 = por %p335, %p336
      %p339 = scmp.ne.s32.totalorder %s324, %s338
      %p340 = scmp.eq.s32.totalorder %s47, 0
      %p341 = por %p339, %p340
      %s343 = sadd.s32 %s342, 1
      %p346 = scmp.eq.s32.totalorder %s41, 1
      %p347 = scmp.ne.s32.totalorder %s342, %s344
      %p348 = scmp.eq.s32.totalorder %s41, 0
      %p349 = por %p347, %p348
      %p350 = scmp.ne.s32.totalorder %s342, %s344
      %p351 = scmp.eq.s32.totalorder %s46, 1
      %p352 = por %p350, %p351
      %p353 = scmp.ne.s32.totalorder %s344, %s345
      %p354 = scmp.eq.s32.totalorder %s46, 0
      %p355 = por %p353, %p354
      %p356 = scmp.ne.s32.totalorder %s344, %s345
      %p357 = scmp.eq.s32.totalorder %s47, 1
      %p358 = por %p356, %p357
      %p360 = scmp.ne.s32.totalorder %s345, %s359
      %p361 = scmp.eq.s32.totalorder %s47, 0
      %p362 = por %p360, %p361
      %s364 = sadd.s32 %s363, 1
      %p367 = scmp.eq.s32.totalorder %s41, 1
      %p368 = scmp.ne.s32.totalorder %s363, %s365
      %p369 = scmp.eq.s32.totalorder %s41, 0
      %p370 = por %p368, %p369
      %p371 = scmp.ne.s32.totalorder %s363, %s365
      %p372 = scmp.eq.s32.totalorder %s46, 1
      %p373 = por %p371, %p372
      %p374 = scmp.ne.s32.totalorder %s365, %s366
      %p375 = scmp.eq.s32.totalorder %s46, 0
      %p376 = por %p374, %p375
      %p377 = scmp.ne.s32.totalorder %s365, %s366
      %p378 = scmp.eq.s32.totalorder %s47, 1
      %p379 = por %p377, %p378
      %p381 = scmp.ne.s32.totalorder %s366, %s380
      %p382 = scmp.eq.s32.totalorder %s47, 0
      %p383 = por %p381, %p382
      %s385 = sadd.s32 %s384, 1
      %p388 = scmp.eq.s32.totalorder %s41, 1
      %p389 = scmp.ne.s32.totalorder %s384, %s386
      %p390 = scmp.eq.s32.totalorder %s41, 0
      %p391 = por %p389, %p390
      %p392 = scmp.ne.s32.totalorder %s384, %s386
      %p393 = scmp.eq.s32.totalorder %s46, 1
      %p394 = por %p392, %p393
      %p395 = scmp.ne.s32.totalorder %s386, %s387
      %p396 = scmp.eq.s32.totalorder %s46, 0
      %p397 = por %p395, %p396
      %p398 = scmp.ne.s32.totalorder %s386, %s387
      %p399 = scmp.eq.s32.totalorder %s47, 1
      %p400 = por %p398, %p399
      %p402 = scmp.ne.s32.totalorder %s387, %s401
      %p403 = scmp.eq.s32.totalorder %s47, 0
      %p404 = por %p402, %p403
      %s406 = sadd.s32 %s405, 1
      %p409 = scmp.eq.s32.totalorder %s41, 1
      %p410 = scmp.ne.s32.totalorder %s405, %s407
      %p411 = scmp.eq.s32.totalorder %s41, 0
      %p412 = por %p410, %p411
      %p413 = scmp.ne.s32.totalorder %s405, %s407
      %p414 = scmp.eq.s32.totalorder %s46, 1
      %p415 = por %p413, %p414
      %p416 = scmp.ne.s32.totalorder %s407, %s408
      %p417 = scmp.eq.s32.totalorder %s46, 0
      %p418 = por %p416, %p417
      %p419 = scmp.ne.s32.totalorder %s407, %s408
      %p420 = scmp.eq.s32.totalorder %s47, 1
      %p421 = por %p419, %p420
      %p423 = scmp.ne.s32.totalorder %s408, %s422
      %p424 = scmp.eq.s32.totalorder %s47, 0
      %p425 = por %p423, %p424
      %s427 = sadd.s32 %s426, 1
      %p430 = scmp.eq.s32.totalorder %s41, 1
      %p431 = scmp.ne.s32.totalorder %s426, %s428
      %p432 = scmp.eq.s32.totalorder %s41, 0
      %p433 = por %p431, %p432
      %p434 = scmp.ne.s32.totalorder %s426, %s428
      %p435 = scmp.eq.s32.totalorder %s46, 1
      %p436 = por %p434, %p435
      %p437 = scmp.ne.s32.totalorder %s428, %s429
      %p438 = scmp.eq.s32.totalorder %s46, 0
      %p439 = por %p437, %p438
      %p440 = scmp.ne.s32.totalorder %s428, %s429
      %p441 = scmp.eq.s32.totalorder %s47, 1
      %p442 = por %p440, %p441
      %p444 = scmp.ne.s32.totalorder %s429, %s443
      %p445 = scmp.eq.s32.totalorder %s47, 0
      %p446 = por %p444, %p445
      %s448 = sadd.s32 %s447, 1
      %p451 = scmp.eq.s32.totalorder %s41, 1
      %p452 = scmp.ne.s32.totalorder %s447, %s449
      %p453 = scmp.eq.s32.totalorder %s41, 0
      %p454 = por %p452, %p453
      %p455 = scmp.ne.s32.totalorder %s447, %s449
      %p456 = scmp.eq.s32.totalorder %s46, 1
      %p457 = por %p455, %p456
      %p458 = scmp.ne.s32.totalorder %s449, %s450
      %p459 = scmp.eq.s32.totalorder %s46, 0
      %p460 = por %p458, %p459
      %p461 = scmp.ne.s32.totalorder %s449, %s450
      %p462 = scmp.eq.s32.totalorder %s47, 1
      %p463 = por %p461, %p462
      %p465 = scmp.ne.s32.totalorder %s450, %s464
      %p466 = scmp.eq.s32.totalorder %s47, 0
      %p467 = por %p465, %p466
      %s469 = sadd.s32 %s468, 1
      %p472 = scmp.eq.s32.totalorder %s41, 1
      %p473 = scmp.ne.s32.totalorder %s468, %s470
      %p474 = scmp.eq.s32.totalorder %s41, 0
      %p475 = por %p473, %p474
      %p476 = scmp.ne.s32.totalorder %s468, %s470
      %p477 = scmp.eq.s32.totalorder %s46, 1
      %p478 = por %p476, %p477
      %p479 = scmp.ne.s32.totalorder %s470, %s471
      %p480 = scmp.eq.s32.totalorder %s46, 0
      %p481 = por %p479, %p480
      %p482 = scmp.ne.s32.totalorder %s470, %s471
      %p483 = scmp.eq.s32.totalorder %s47, 1
      %p484 = por %p482, %p483
      %p486 = scmp.ne.s32.totalorder %s471, %s485
      %p487 = scmp.eq.s32.totalorder %s47, 0
      %p488 = por %p486, %p487
      %s489 = ssub.s32 %s41, %s48
      %p490 = scmp.eq.s32.totalorder %s489, 0
      %s492 = sadd.s32 %s491, 1
      %s493 = scalar_select %p490, %s491, %s492
      %p496 = pneg %p490
      %p497 = scmp.eq.s32.totalorder %s41, 1
      %p498 = por %p496, %p497
      %p499 = scmp.ne.s32.totalorder %s491, %s494
      %p500 = scmp.eq.s32.totalorder %s41, 0
      %p501 = por %p499, %p500
      %p502 = scmp.ne.s32.totalorder %s491, %s494
      %p503 = scmp.eq.s32.totalorder %s46, 1
      %p504 = por %p502, %p503
      %p505 = scmp.ne.s32.totalorder %s494, %s495
      %p506 = scmp.eq.s32.totalorder %s46, 0
      %p507 = por %p505, %p506
      %p508 = scmp.ne.s32.totalorder %s494, %s495
      %p509 = scmp.eq.s32.totalorder %s47, 1
      %p510 = por %p508, %p509
      %p512 = scmp.ne.s32.totalorder %s495, %s511
      %p513 = scmp.eq.s32.totalorder %s47, 0
      %p514 = por %p512, %p513
      %p515 = scmp.le.s32.totalorder 1, %s41
      %p516 = scmp.lt.s32.totalorder %s41, 3
      %p517 = pnand %p515, %p516
      %p518 = pneg %p517
      // Predicated region
      $region9: #{tpu_custom_call.1} parent=5 // pred_check
        _
      $region10: #{tpu_custom_call.1} parent=5 // pred_check_branch
        %520 = sbr.rel (%p517) target = $region12
      $region11: #{tpu_custom_call.1} parent=5 // pred_region
        %s521 = ssub.s32 %s41, 1
        // Predicated region
        $region13: #{tpu_custom_call.1} parent=11 // pred_check
          %p522 = pneg %p166
        $region14: #{tpu_custom_call.1} parent=11 // pred_check_branch
          %524 = sbr.rel (%p522) target = $region16
        $region15: #{tpu_custom_call.1} parent=11 // pred_region
          %s526 = ssub.s32 2048, 2048
          %527 = vsyncadd [#allocation9], %s526
          %s528 = sshll.u32 [#allocation10], 4
          %s529 = int_to_ptr.vmem [resolvable:$true] %s528
          %534 = dma.hbm_to_vmem [thread:$0]  %s4, 2048, %s529, [#allocation9], 128, 128, 8
        $region16: #{tpu_custom_call.1} parent=11 // pred_fallthru
          _
        // Predicated region
        $region17: #{tpu_custom_call.1} parent=11 // pred_check
          %p535 = pneg %p187
        $region18: #{tpu_custom_call.1} parent=11 // pred_check_branch
          %537 = sbr.rel (%p535) target = $region20
        $region19: #{tpu_custom_call.1} parent=11 // pred_region
          _
        $region20: #{tpu_custom_call.1} parent=11 // pred_fallthru
          _
        // Predicated region
        $region21: #{tpu_custom_call.1} parent=11 // pred_check
          %p538 = pneg %p208
        $region22: #{tpu_custom_call.1} parent=11 // pred_check_branch
          %540 = sbr.rel (%p538) target = $region24
        $region23: #{tpu_custom_call.1} parent=11 // pred_region
          %s542 = ssub.s32 2048, 2048
          %543 = vsyncadd [#allocation12], %s542
          %s544 = sshll.u32 [#allocation11], 4
          %s545 = int_to_ptr.vmem [resolvable:$true] %s544
          %550 = dma.hbm_to_vmem [thread:$0]  %s6, 2048, %s545, [#allocation12], 128, 128, 8
        $region24: #{tpu_custom_call.1} parent=11 // pred_fallthru
          _
        // Predicated region
        $region25: #{tpu_custom_call.1} parent=11 // pred_check
          %p551 = pneg %p229
        $region26: #{tpu_custom_call.1} parent=11 // pred_check_branch
          %553 = sbr.rel (%p551) target = $region28
        $region27: #{tpu_custom_call.1} parent=11 // pred_region
          _
        $region28: #{tpu_custom_call.1} parent=11 // pred_fallthru
          _
        // Predicated region
        $region29: #{tpu_custom_call.1} parent=11 // pred_check
          %p554 = pneg %p250
        $region30: #{tpu_custom_call.1} parent=11 // pred_check_branch
          %556 = sbr.rel (%p554) target = $region32
        $region31: #{tpu_custom_call.1} parent=11 // pred_region
          %s558 = ssub.s32 2048, 2048
          %559 = vsyncadd [#allocation12], %s558
          %s560 = sshll.u32 [#allocation13], 4
          %s561 = int_to_ptr.vmem [resolvable:$true] %s560
          %566 = dma.hbm_to_vmem [thread:$0]  %s8, 2048, %s561, [#allocation12], 128, 128, 8
        $region32: #{tpu_custom_call.1} parent=11 // pred_fallthru
          _
        // Predicated region
        $region33: #{tpu_custom_call.1} parent=11 // pred_check
          %p567 = pneg %p271
        $region34: #{tpu_custom_call.1} parent=11 // pred_check_branch
          %569 = sbr.rel (%p567) target = $region36
        $region35: #{tpu_custom_call.1} parent=11 // pred_region
          _
        $region36: #{tpu_custom_call.1} parent=11 // pred_fallthru
          _
        // Predicated region
        $region37: #{tpu_custom_call.1} parent=11 // pred_check
          %p570 = pneg %p292
        $region38: #{tpu_custom_call.1} parent=11 // pred_check_branch
          %572 = sbr.rel (%p570) target = $region40
        $region39: #{tpu_custom_call.1} parent=11 // pred_region
          %s574 = ssub.s32 2048, 2048
          %575 = vsyncadd [#allocation15], %s574
          %s576 = sshll.u32 [#allocation14], 4
          %s577 = int_to_ptr.vmem [resolvable:$true] %s576
          %582 = dma.hbm_to_vmem [thread:$0]  %s10, 2048, %s577, [#allocation15], 128, 128, 8
        $region40: #{tpu_custom_call.1} parent=11 // pred_fallthru
          _
        // Predicated region
        $region41: #{tpu_custom_call.1} parent=11 // pred_check
          %p583 = pneg %p313
        $region42: #{tpu_custom_call.1} parent=11 // pred_check_branch
          %585 = sbr.rel (%p583) target = $region44
        $region43: #{tpu_custom_call.1} parent=11 // pred_region
          _
        $region44: #{tpu_custom_call.1} parent=11 // pred_fallthru
          _
        // Predicated region
        $region45: #{tpu_custom_call.1} parent=11 // pred_check
          %p586 = pneg %p334
        $region46: #{tpu_custom_call.1} parent=11 // pred_check_branch
          %588 = sbr.rel (%p586) target = $region48
        $region47: #{tpu_custom_call.1} parent=11 // pred_region
          _
        $region48: #{tpu_custom_call.1} parent=11 // pred_fallthru
          _
        // Predicated region
        $region49: #{tpu_custom_call.1} parent=11 // pred_check
          %p589 = pneg %p355
        $region50: #{tpu_custom_call.1} parent=11 // pred_check_branch
          %591 = sbr.rel (%p589) target = $region52
        $region51: #{tpu_custom_call.1} parent=11 // pred_region
          _
        $region52: #{tpu_custom_call.1} parent=11 // pred_fallthru
          _
        // Predicated region
        $region53: #{tpu_custom_call.1} parent=11 // pred_check
          %p592 = pneg %p376
        $region54: #{tpu_custom_call.1} parent=11 // pred_check_branch
          %594 = sbr.rel (%p592) target = $region56
        $region55: #{tpu_custom_call.1} parent=11 // pred_region
          %s596 = ssub.s32 2048, 2048
          %597 = vsyncadd [#allocation15], %s596
          %s598 = sshll.u32 [#allocation16], 4
          %s599 = int_to_ptr.vmem [resolvable:$true] %s598
          %604 = dma.hbm_to_vmem [thread:$0]  %s14, 2048, %s599, [#allocation15], 128, 128, 8
        $region56: #{tpu_custom_call.1} parent=11 // pred_fallthru
          _
        // Predicated region
        $region57: #{tpu_custom_call.1} parent=11 // pred_check
          %p605 = pneg %p397
        $region58: #{tpu_custom_call.1} parent=11 // pred_check_branch
          %607 = sbr.rel (%p605) target = $region60
        $region59: #{tpu_custom_call.1} parent=11 // pred_region
          _
        $region60: #{tpu_custom_call.1} parent=11 // pred_fallthru
          _
        // Predicated region
        $region61: #{tpu_custom_call.1} parent=11 // pred_check
          %p608 = pneg %p418
        $region62: #{tpu_custom_call.1} parent=11 // pred_check_branch
          %610 = sbr.rel (%p608) target = $region64
        $region63: #{tpu_custom_call.1} parent=11 // pred_region
          %s612 = ssub.s32 2048, 2048
          %613 = vsyncadd [#allocation18], %s612
          %s614 = sshll.u32 [#allocation17], 4
          %s615 = int_to_ptr.vmem [resolvable:$true] %s614
          %620 = dma.hbm_to_vmem [thread:$0]  %s16, 2048, %s615, [#allocation18], 128, 128, 8
        $region64: #{tpu_custom_call.1} parent=11 // pred_fallthru
          _
        // Predicated region
        $region65: #{tpu_custom_call.1} parent=11 // pred_check
          %p621 = pneg %p439
        $region66: #{tpu_custom_call.1} parent=11 // pred_check_branch
          %623 = sbr.rel (%p621) target = $region68
        $region67: #{tpu_custom_call.1} parent=11 // pred_region
          _
        $region68: #{tpu_custom_call.1} parent=11 // pred_fallthru
          _
        // Predicated region
        $region69: #{tpu_custom_call.1} parent=11 // pred_check
          %p624 = pneg %p460
        $region70: #{tpu_custom_call.1} parent=11 // pred_check_branch
          %626 = sbr.rel (%p624) target = $region72
        $region71: #{tpu_custom_call.1} parent=11 // pred_region
          _
        $region72: #{tpu_custom_call.1} parent=11 // pred_fallthru
          _
        // Predicated region
        $region73: #{tpu_custom_call.1} parent=11 // pred_check
          %p627 = pneg %p481
        $region74: #{tpu_custom_call.1} parent=11 // pred_check_branch
          %629 = sbr.rel (%p627) target = $region76
        $region75: #{tpu_custom_call.1} parent=11 // pred_region
          _
        $region76: #{tpu_custom_call.1} parent=11 // pred_fallthru
          _
      $region12: #{tpu_custom_call.1} parent=5 // pred_fallthru
        _
      %p630 = scmp.lt.s32.totalorder %s41, 2
      // Predicated region
      $region77: #{tpu_custom_call.1} parent=5 // pred_check
        %p631 = pneg %p630
      $region78: #{tpu_custom_call.1} parent=5 // pred_check_branch
        %633 = sbr.rel (%p631) target = $region80
      $region79: #{tpu_custom_call.1} parent=5 // pred_region
        // Predicated region
        $region81: #{tpu_custom_call.1} parent=79 // pred_check
          %p634 = pneg %p61
        $region82: #{tpu_custom_call.1} parent=79 // pred_check_branch
          %636 = sbr.rel (%p634) target = $region84
        $region83: #{tpu_custom_call.1} parent=79 // pred_region
          %s637 = sand.u32 %s51, 1
          %s638 = scalar_lea.sflag [#allocation3], %s637
          %s639 = sand.u32 %s51, 1
          %s640 = smul.addr %s639, 8
          %s641 = scalar_lea.vmem [#allocation2], %s640
          %s643 = ssub.s32 128, 128
          %644 = vsyncadd %s638, %s643
          %s645 = smul.addr %s41, 128
          %s646 = scalar_lea.hbm %s0, %s645
          %s648 = sshll.u32 %s641, 4
          %s649 = int_to_ptr.vmem [resolvable:$true] %s648
          %651 = dma.hbm_to_vmem [thread:$0]  %s646, 128, %s649, %s638
        $region84: #{tpu_custom_call.1} parent=79 // pred_fallthru
          _
        // Predicated region
        $region85: #{tpu_custom_call.1} parent=79 // pred_check
          %p652 = pneg %p87
        $region86: #{tpu_custom_call.1} parent=79 // pred_check_branch
          %654 = sbr.rel (%p652) target = $region88
        $region87: #{tpu_custom_call.1} parent=79 // pred_region
          %s655 = sand.u32 %s41, 1
          %s656 = scalar_lea.sflag [#allocation6], %s655
          %s657 = sand.u32 %s77, 1
          %s658 = smul.addr %s657, 8
          %s659 = scalar_lea.vmem [#allocation5], %s658
          %s661 = ssub.s32 128, 128
          %662 = vsyncadd %s656, %s661
          %s663 = smul.addr %s41, 128
          %s664 = scalar_lea.hbm %s1, %s663
          %s666 = sshll.u32 %s659, 4
          %s667 = int_to_ptr.vmem [resolvable:$true] %s666
          %669 = dma.hbm_to_vmem [thread:$0]  %s664, 128, %s667, %s656
        $region88: #{tpu_custom_call.1} parent=79 // pred_fallthru
          _
        // Predicated region
        $region89: #{tpu_custom_call.1} parent=79 // pred_check
          %p670 = pneg %p113
        $region90: #{tpu_custom_call.1} parent=79 // pred_check_branch
          %672 = sbr.rel (%p670) target = $region92
        $region91: #{tpu_custom_call.1} parent=79 // pred_region
          %s673 = sand.u32 %s41, 1
          %s674 = scalar_lea.sflag [#allocation6], %s673
          %s675 = sand.u32 %s103, 1
          %s676 = smul.addr %s675, 8
          %s677 = scalar_lea.vmem [#allocation7], %s676
          %s679 = ssub.s32 128, 128
          %680 = vsyncadd %s674, %s679
          %s681 = smul.addr %s41, 128
          %s682 = scalar_lea.hbm %s2, %s681
          %s684 = sshll.u32 %s677, 4
          %s685 = int_to_ptr.vmem [resolvable:$true] %s684
          %687 = dma.hbm_to_vmem [thread:$0]  %s682, 128, %s685, %s674
        $region92: #{tpu_custom_call.1} parent=79 // pred_fallthru
          _
        // Predicated region
        $region93: #{tpu_custom_call.1} parent=79 // pred_check
          %p688 = pneg %p139
        $region94: #{tpu_custom_call.1} parent=79 // pred_check_branch
          %690 = sbr.rel (%p688) target = $region96
        $region95: #{tpu_custom_call.1} parent=79 // pred_region
          %s691 = sand.u32 %s41, 1
          %s692 = scalar_lea.sflag [#allocation9], %s691
          %s693 = sand.u32 %s129, 1
          %s694 = smul.addr %s693, 8
          %s695 = scalar_lea.vmem [#allocation8], %s694
          %s697 = ssub.s32 128, 128
          %698 = vsyncadd %s692, %s697
          %s699 = smul.addr %s41, 128
          %s700 = scalar_lea.hbm %s3, %s699
          %s702 = sshll.u32 %s695, 4
          %s703 = int_to_ptr.vmem [resolvable:$true] %s702
          %705 = dma.hbm_to_vmem [thread:$0]  %s700, 128, %s703, %s692
        $region96: #{tpu_custom_call.1} parent=79 // pred_fallthru
          _
      $region80: #{tpu_custom_call.1} parent=5 // pred_fallthru
        _
      %p706 = scmp.le.s32.totalorder 1, %s41
      %p707 = scmp.lt.s32.totalorder %s41, 3
      %p708 = pnand %p706, %p707
      %p709 = pneg %p708
      // Predicated region
      $region97: #{tpu_custom_call.1} parent=5 // pred_check
        _
      $region98: #{tpu_custom_call.1} parent=5 // pred_check_branch
        %711 = sbr.rel (%p708) target = $region100
      $region99: #{tpu_custom_call.1} parent=5 // pred_region
        %s712 = ssub.s32 %s41, 1
        %s713 = sand.u32 %s54, 1
        %s714 = scalar_lea.sflag [#allocation3], %s713
        %s715 = sand.u32 %s54, 1
        %s716 = smul.addr %s715, 8
        %s717 = scalar_lea.vmem [#allocation2], %s716
        // Predicated region
        $region101: #{tpu_custom_call.1} parent=99 // pred_check
          %p718 = pneg %p67
        $region102: #{tpu_custom_call.1} parent=99 // pred_check_branch
          %720 = sbr.rel (%p718) target = $region104
        $region103: #{tpu_custom_call.1} parent=99 // pred_region
          %721 = dma.done %s714, 128
        $region104: #{tpu_custom_call.1} parent=99 // pred_fallthru
          _
        %s722 = sand.u32 %s46, 1
        %s723 = scalar_lea.sflag [#allocation6], %s722
        %s724 = sand.u32 %s80, 1
        %s725 = smul.addr %s724, 8
        %s726 = scalar_lea.vmem [#allocation5], %s725
        // Predicated region
        $region105: #{tpu_custom_call.1} parent=99 // pred_check
          %p727 = pneg %p93
        $region106: #{tpu_custom_call.1} parent=99 // pred_check_branch
          %729 = sbr.rel (%p727) target = $region108
        $region107: #{tpu_custom_call.1} parent=99 // pred_region
          %730 = dma.done %s723, 128
        $region108: #{tpu_custom_call.1} parent=99 // pred_fallthru
          _
        %s731 = sand.u32 %s46, 1
        %s732 = scalar_lea.sflag [#allocation6], %s731
        %s733 = sand.u32 %s106, 1
        %s734 = smul.addr %s733, 8
        %s735 = scalar_lea.vmem [#allocation7], %s734
        // Predicated region
        $region109: #{tpu_custom_call.1} parent=99 // pred_check
          %p736 = pneg %p119
        $region110: #{tpu_custom_call.1} parent=99 // pred_check_branch
          %738 = sbr.rel (%p736) target = $region112
        $region111: #{tpu_custom_call.1} parent=99 // pred_region
          %739 = dma.done %s732, 128
        $region112: #{tpu_custom_call.1} parent=99 // pred_fallthru
          _
        %s740 = sand.u32 %s46, 1
        %s741 = scalar_lea.sflag [#allocation9], %s740
        %s742 = sand.u32 %s132, 1
        %s743 = smul.addr %s742, 8
        %s744 = scalar_lea.vmem [#allocation8], %s743
        // Predicated region
        $region113: #{tpu_custom_call.1} parent=99 // pred_check
          %p745 = pneg %p145
        $region114: #{tpu_custom_call.1} parent=99 // pred_check_branch
          %747 = sbr.rel (%p745) target = $region116
        $region115: #{tpu_custom_call.1} parent=99 // pred_region
          %748 = dma.done %s741, 128
        $region116: #{tpu_custom_call.1} parent=99 // pred_fallthru
          _
        // Predicated region
        $region117: #{tpu_custom_call.1} parent=99 // pred_check
          %p749 = pneg %p166
        $region118: #{tpu_custom_call.1} parent=99 // pred_check_branch
          %751 = sbr.rel (%p749) target = $region120
        $region119: #{tpu_custom_call.1} parent=99 // pred_region
          %752 = dma.done [#allocation9], 2048
        $region120: #{tpu_custom_call.1} parent=99 // pred_fallthru
          _
        // Predicated region
        $region121: #{tpu_custom_call.1} parent=99 // pred_check
          %p753 = pneg %p208
        $region122: #{tpu_custom_call.1} parent=99 // pred_check_branch
          %755 = sbr.rel (%p753) target = $region124
        $region123: #{tpu_custom_call.1} parent=99 // pred_region
          %756 = dma.done [#allocation12], 2048
        $region124: #{tpu_custom_call.1} parent=99 // pred_fallthru
          _
        // Predicated region
        $region125: #{tpu_custom_call.1} parent=99 // pred_check
          %p757 = pneg %p250
        $region126: #{tpu_custom_call.1} parent=99 // pred_check_branch
          %759 = sbr.rel (%p757) target = $region128
        $region127: #{tpu_custom_call.1} parent=99 // pred_region
          %760 = dma.done [#allocation12], 2048
        $region128: #{tpu_custom_call.1} parent=99 // pred_fallthru
          _
        // Predicated region
        $region129: #{tpu_custom_call.1} parent=99 // pred_check
          %p761 = pneg %p292
        $region130: #{tpu_custom_call.1} parent=99 // pred_check_branch
          %763 = sbr.rel (%p761) target = $region132
        $region131: #{tpu_custom_call.1} parent=99 // pred_region
          %764 = dma.done [#allocation15], 2048
        $region132: #{tpu_custom_call.1} parent=99 // pred_fallthru
          _
        // Predicated region
        $region133: #{tpu_custom_call.1} parent=99 // pred_check
          %p765 = pneg %p376
        $region134: #{tpu_custom_call.1} parent=99 // pred_check_branch
          %767 = sbr.rel (%p765) target = $region136
        $region135: #{tpu_custom_call.1} parent=99 // pred_region
          %768 = dma.done [#allocation15], 2048
        $region136: #{tpu_custom_call.1} parent=99 // pred_fallthru
          _
        // Predicated region
        $region137: #{tpu_custom_call.1} parent=99 // pred_check
          %p769 = pneg %p418
        $region138: #{tpu_custom_call.1} parent=99 // pred_check_branch
          %771 = sbr.rel (%p769) target = $region140
        $region139: #{tpu_custom_call.1} parent=99 // pred_region
          %772 = dma.done [#allocation18], 2048
        $region140: #{tpu_custom_call.1} parent=99 // pred_fallthru
          _
        %s773 = sand.u32 %s54, 1
        %s774 = scalar_lea.sflag [#allocation3], %s773
        %s775 = sand.u32 %s54, 1
        %s776 = smul.addr %s775, 8
        %s777 = scalar_lea.vmem [#allocation2], %s776
        %p778 = pneg %p67
        %p779 = pneg %p64
        %s780 = sand.u32 %s46, 1
        %s781 = scalar_lea.sflag [#allocation6], %s780
        %s782 = sand.u32 %s80, 1
        %s783 = smul.addr %s782, 8
        %s784 = scalar_lea.vmem [#allocation5], %s783
        %p785 = pneg %p93
        %p786 = pneg %p90
        %s787 = sand.u32 %s46, 1
        %s788 = scalar_lea.sflag [#allocation6], %s787
        %s789 = sand.u32 %s106, 1
        %s790 = smul.addr %s789, 8
        %s791 = scalar_lea.vmem [#allocation7], %s790
        %p792 = pneg %p119
        %p793 = pneg %p116
        %s794 = sand.u32 %s46, 1
        %s795 = scalar_lea.sflag [#allocation9], %s794
        %s796 = sand.u32 %s132, 1
        %s797 = smul.addr %s796, 8
        %s798 = scalar_lea.vmem [#allocation8], %s797
        %p799 = pneg %p145
        %p800 = pneg %p142
        %p801 = pneg %p166
        %p802 = pneg %p163
        %p803 = pneg %p187
        %p804 = pneg %p184
        %p805 = pneg %p208
        %p806 = pneg %p205
        %p807 = pneg %p229
        %p808 = pneg %p226
        %p809 = pneg %p250
        %p810 = pneg %p247
        %p811 = pneg %p271
        %p812 = pneg %p268
        %p813 = pneg %p292
        %p814 = pneg %p289
        %p815 = pneg %p313
        %p816 = pneg %p310
        %p817 = pneg %p334
        %p818 = pneg %p331
        %p819 = pneg %p355
        %p820 = pneg %p352
        %p821 = pneg %p376
        %p822 = pneg %p373
        %p823 = pneg %p397
        %p824 = pneg %p394
        %p825 = pneg %p418
        %p826 = pneg %p415
        %p827 = pneg %p439
        %p828 = pneg %p436
        %p829 = pneg %p460
        %p830 = pneg %p457
        %p831 = pneg %p481
        %p832 = pneg %p478
        %p833 = pneg %p507
        %p834 = pneg %p504
        %s835 = sand.u32 %s494, 1
        %s836 = scalar_lea.sflag [#allocation4], %s835
        %s837 = sand.u32 %s494, 1
        %s838 = smul.addr %s837, 8
        %s839 = scalar_lea.vmem [#allocation19], %s838
        %v840 = vld [vmem:[%s717] sm:$0xff]
        %v841 = vld [vmem:[%s726] sm:$0xff]
        %v842 = vld [vmem:[%s735] sm:$0xff]
        %v843 = vld [vmem:[%s744] sm:$0xff]
        %v844 = vlaneseq
        %v845 = vand.u32 %v844, 127
        %vm846 = vcmp.lt.s32.totalorder %v845, 32
        %v847 = vld [vmem:[#allocation10] sm:$0xff]
        %v848 = vld [vmem:[#allocation10 + $0x8] sm:$0xff]
        %v849 = vld [vmem:[#allocation10 + $0x10] sm:$0xff]
        %v850 = vld [vmem:[#allocation10 + $0x18] sm:$0xff]
        %v851 = vld [vmem:[#allocation10 + $0x20] sm:$0xff]
        %v852 = vld [vmem:[#allocation10 + $0x28] sm:$0xff]
        %v853 = vld [vmem:[#allocation10 + $0x30] sm:$0xff]
        %v854 = vld [vmem:[#allocation10 + $0x38] sm:$0xff]
        %v855 = vld [vmem:[#allocation10 + $0x40] sm:$0xff]
        %v856 = vld [vmem:[#allocation10 + $0x48] sm:$0xff]
        %v857 = vld [vmem:[#allocation10 + $0x50] sm:$0xff]
        %v858 = vld [vmem:[#allocation10 + $0x58] sm:$0xff]
        %v859 = vld [vmem:[#allocation10 + $0x60] sm:$0xff]
        %v860 = vld [vmem:[#allocation10 + $0x68] sm:$0xff]
        %v861 = vld [vmem:[#allocation10 + $0x70] sm:$0xff]
        %v862 = vld [vmem:[#allocation10 + $0x78] sm:$0xff]
        %v863 = vld [vmem:[%s5] sm:$0x1]
        %v865 = vlaneseq
        %v866 = vshrl.u32 %v865, 7
        %v867 = vsub.s32 0, %v866
        %v868 = vrot.slane %v863, %v867
        %870 = vmatprep.subr.mxu0 0.0
        %871 = vmatpush1.msra.mxu0 %v847
        %872 = vmatprep.subr.mxu0 0.0
        %873 = vmatpush1.msra.mxu0 %v848
        %874 = vmatprep.subr.mxu0 0.0
        %875 = vmatpush1.msra.mxu0 %v849
        %876 = vmatprep.subr.mxu0 0.0
        %877 = vmatpush1.msra.mxu0 %v850
        %878 = vmatprep.subr.mxu0 0.0
        %879 = vmatpush1.msra.mxu0 %v851
        %880 = vmatprep.subr.mxu0 0.0
        %881 = vmatpush1.msra.mxu0 %v852
        %882 = vmatprep.subr.mxu0 0.0
        %883 = vmatpush1.msra.mxu0 %v853
        %884 = vmatprep.subr.mxu0 0.0
        %885 = vmatpush1.msra.mxu0 %v854
        %886 = vmatprep.subr.mxu0 0.0
        %887 = vmatpush1.msra.mxu0 %v855
        %888 = vmatprep.subr.mxu0 0.0
        %889 = vmatpush1.msra.mxu0 %v856
        %890 = vmatprep.subr.mxu0 0.0
        %891 = vmatpush1.msra.mxu0 %v857
        %892 = vmatprep.subr.mxu0 0.0
        %893 = vmatpush1.msra.mxu0 %v858
        %894 = vmatprep.subr.mxu0 0.0
        %895 = vmatpush1.msra.mxu0 %v859
        %896 = vmatprep.subr.mxu0 0.0
        %897 = vmatpush1.msra.mxu0 %v860
        %898 = vmatprep.subr.mxu0 0.0
        %899 = vmatpush1.msra.mxu0 %v861
        %900 = vmatprep.subr.mxu0 0.0
        %901 = vmatpush1.msra.mxu0 %v862
        %902 = vmatprep.subr.mxu0 0.0
        %903 = vmatpush1.msra.mxu0 0.0
        %904 = vmatprep.subr.mxu0 0.0
        %905 = vmatpush1.msra.mxu0 0.0
        %906 = vmatprep.subr.mxu0 0.0
        %907 = vmatpush1.msra.mxu0 0.0
        %908 = vmatprep.subr.mxu0 0.0
        %909 = vmatpush1.msra.mxu0 0.0
        %910 = vmatprep.subr.mxu0 0.0
        %911 = vmatpush1.msra.mxu0 0.0
        %912 = vmatprep.subr.mxu0 0.0
        %913 = vmatpush1.msra.mxu0 0.0
        %914 = vmatprep.subr.mxu0 0.0
        %915 = vmatpush1.msra.mxu0 0.0
        %916 = vmatprep.subr.mxu0 0.0
        %917 = vmatpush1.msra.mxu0 0.0
        %918 = vmatprep.subr.mxu0 0.0
        %919 = vmatpush1.msra.mxu0 0.0
        %920 = vmatprep.subr.mxu0 0.0
        %921 = vmatpush1.msra.mxu0 0.0
        %922 = vmatprep.subr.mxu0 0.0
        %923 = vmatpush1.msra.mxu0 0.0
        %924 = vmatprep.subr.mxu0 0.0
        %925 = vmatpush1.msra.mxu0 0.0
        %926 = vmatprep.subr.mxu0 0.0
        %927 = vmatpush1.msra.mxu0 0.0
        %928 = vmatprep.subr.mxu0 0.0
        %929 = vmatpush1.msra.mxu0 0.0
        %930 = vmatprep.subr.mxu0 0.0
        %931 = vmatpush1.msra.mxu0 0.0
        %932 = vmatprep.subr.mxu0 0.0
        %933 = vmatpush1.msra.mxu0 0.0
        %934 = vmatprep.mubr.f32.mxu0 0.0
        %935 = vmatmul.mubr.f32.gmra.mrb[0].mxu0 %v841
        %v936 = vpop.f32.mrb[0].mxu0
        %v937 = vadd.f32 %v868, %v936
        %v938 = vpop.f32.mrb[0].mxu0
        %939 = vdwg.mxu0
        %v940 = vld [vmem:[#allocation11] sm:$0xff]
        %v941 = vld [vmem:[#allocation11 + $0x8] sm:$0xff]
        %v942 = vld [vmem:[#allocation11 + $0x10] sm:$0xff]
        %v943 = vld [vmem:[#allocation11 + $0x18] sm:$0xff]
        %v944 = vld [vmem:[#allocation11 + $0x20] sm:$0xff]
        %v945 = vld [vmem:[#allocation11 + $0x28] sm:$0xff]
        %v946 = vld [vmem:[#allocation11 + $0x30] sm:$0xff]
        %v947 = vld [vmem:[#allocation11 + $0x38] sm:$0xff]
        %v948 = vld [vmem:[#allocation11 + $0x40] sm:$0xff]
        %v949 = vld [vmem:[#allocation11 + $0x48] sm:$0xff]
        %v950 = vld [vmem:[#allocation11 + $0x50] sm:$0xff]
        %v951 = vld [vmem:[#allocation11 + $0x58] sm:$0xff]
        %v952 = vld [vmem:[#allocation11 + $0x60] sm:$0xff]
        %v953 = vld [vmem:[#allocation11 + $0x68] sm:$0xff]
        %v954 = vld [vmem:[#allocation11 + $0x70] sm:$0xff]
        %v955 = vld [vmem:[#allocation11 + $0x78] sm:$0xff]
        %v956 = vld [vmem:[%s7] sm:$0x1]
        %v958 = vlaneseq
        %v959 = vshrl.u32 %v958, 7
        %v960 = vsub.s32 0, %v959
        %v961 = vrot.slane %v956, %v960
        %963 = vmatprep.subr.mxu0 0.0
        %964 = vmatpush1.msra.mxu0 %v940
        %965 = vmatprep.subr.mxu0 0.0
        %966 = vmatpush1.msra.mxu0 %v941
        %967 = vmatprep.subr.mxu0 0.0
        %968 = vmatpush1.msra.mxu0 %v942
        %969 = vmatprep.subr.mxu0 0.0
        %970 = vmatpush1.msra.mxu0 %v943
        %971 = vmatprep.subr.mxu0 0.0
        %972 = vmatpush1.msra.mxu0 %v944
        %973 = vmatprep.subr.mxu0 0.0
        %974 = vmatpush1.msra.mxu0 %v945
        %975 = vmatprep.subr.mxu0 0.0
        %976 = vmatpush1.msra.mxu0 %v946
        %977 = vmatprep.subr.mxu0 0.0
        %978 = vmatpush1.msra.mxu0 %v947
        %979 = vmatprep.subr.mxu0 0.0
        %980 = vmatpush1.msra.mxu0 %v948
        %981 = vmatprep.subr.mxu0 0.0
        %982 = vmatpush1.msra.mxu0 %v949
        %983 = vmatprep.subr.mxu0 0.0
        %984 = vmatpush1.msra.mxu0 %v950
        %985 = vmatprep.subr.mxu0 0.0
        %986 = vmatpush1.msra.mxu0 %v951
        %987 = vmatprep.subr.mxu0 0.0
        %988 = vmatpush1.msra.mxu0 %v952
        %989 = vmatprep.subr.mxu0 0.0
        %990 = vmatpush1.msra.mxu0 %v953
        %991 = vmatprep.subr.mxu0 0.0
        %992 = vmatpush1.msra.mxu0 %v954
        %993 = vmatprep.subr.mxu0 0.0
        %994 = vmatpush1.msra.mxu0 %v955
        %995 = vmatprep.subr.mxu0 0.0
        %996 = vmatpush1.msra.mxu0 0.0
        %997 = vmatprep.subr.mxu0 0.0
        %998 = vmatpush1.msra.mxu0 0.0
        %999 = vmatprep.subr.mxu0 0.0
        %1000 = vmatpush1.msra.mxu0 0.0
        %1001 = vmatprep.subr.mxu0 0.0
        %1002 = vmatpush1.msra.mxu0 0.0
        %1003 = vmatprep.subr.mxu0 0.0
        %1004 = vmatpush1.msra.mxu0 0.0
        %1005 = vmatprep.subr.mxu0 0.0
        %1006 = vmatpush1.msra.mxu0 0.0
        %1007 = vmatprep.subr.mxu0 0.0
        %1008 = vmatpush1.msra.mxu0 0.0
        %1009 = vmatprep.subr.mxu0 0.0
        %1010 = vmatpush1.msra.mxu0 0.0
        %1011 = vmatprep.subr.mxu0 0.0
        %1012 = vmatpush1.msra.mxu0 0.0
        %1013 = vmatprep.subr.mxu0 0.0
        %1014 = vmatpush1.msra.mxu0 0.0
        %1015 = vmatprep.subr.mxu0 0.0
        %1016 = vmatpush1.msra.mxu0 0.0
        %1017 = vmatprep.subr.mxu0 0.0
        %1018 = vmatpush1.msra.mxu0 0.0
        %1019 = vmatprep.subr.mxu0 0.0
        %1020 = vmatpush1.msra.mxu0 0.0
        %1021 = vmatprep.subr.mxu0 0.0
        %1022 = vmatpush1.msra.mxu0 0.0
        %1023 = vmatprep.subr.mxu0 0.0
        %1024 = vmatpush1.msra.mxu0 0.0
        %1025 = vmatprep.subr.mxu0 0.0
        %1026 = vmatpush1.msra.mxu0 0.0
        %1027 = vmatprep.mubr.f32.mxu0 0.0
        %1028 = vmatmul.mubr.f32.gmra.mrb[0].mxu0 %v842
        %v1029 = vpop.f32.mrb[0].mxu0
        %v1030 = vadd.f32 %v961, %v1029
        %v1031 = vpop.f32.mrb[0].mxu0
        %1032 = vdwg.mxu0
        %v1033 = vld [vmem:[#allocation13] sm:$0xff]
        %v1034 = vld [vmem:[#allocation13 + $0x8] sm:$0xff]
        %v1035 = vld [vmem:[#allocation13 + $0x10] sm:$0xff]
        %v1036 = vld [vmem:[#allocation13 + $0x18] sm:$0xff]
        %v1037 = vld [vmem:[#allocation13 + $0x20] sm:$0xff]
        %v1038 = vld [vmem:[#allocation13 + $0x28] sm:$0xff]
        %v1039 = vld [vmem:[#allocation13 + $0x30] sm:$0xff]
        %v1040 = vld [vmem:[#allocation13 + $0x38] sm:$0xff]
        %v1041 = vld [vmem:[#allocation13 + $0x40] sm:$0xff]
        %v1042 = vld [vmem:[#allocation13 + $0x48] sm:$0xff]
        %v1043 = vld [vmem:[#allocation13 + $0x50] sm:$0xff]
        %v1044 = vld [vmem:[#allocation13 + $0x58] sm:$0xff]
        %v1045 = vld [vmem:[#allocation13 + $0x60] sm:$0xff]
        %v1046 = vld [vmem:[#allocation13 + $0x68] sm:$0xff]
        %v1047 = vld [vmem:[#allocation13 + $0x70] sm:$0xff]
        %v1048 = vld [vmem:[#allocation13 + $0x78] sm:$0xff]
        %v1049 = vld [vmem:[%s9] sm:$0x1]
        %v1051 = vlaneseq
        %v1052 = vshrl.u32 %v1051, 7
        %v1053 = vsub.s32 0, %v1052
        %v1054 = vrot.slane %v1049, %v1053
        %1056 = vmatprep.subr.mxu0 0.0
        %1057 = vmatpush1.msra.mxu0 %v1033
        %1058 = vmatprep.subr.mxu0 0.0
        %1059 = vmatpush1.msra.mxu0 %v1034
        %1060 = vmatprep.subr.mxu0 0.0
        %1061 = vmatpush1.msra.mxu0 %v1035
        %1062 = vmatprep.subr.mxu0 0.0
        %1063 = vmatpush1.msra.mxu0 %v1036
        %1064 = vmatprep.subr.mxu0 0.0
        %1065 = vmatpush1.msra.mxu0 %v1037
        %1066 = vmatprep.subr.mxu0 0.0
        %1067 = vmatpush1.msra.mxu0 %v1038
        %1068 = vmatprep.subr.mxu0 0.0
        %1069 = vmatpush1.msra.mxu0 %v1039
        %1070 = vmatprep.subr.mxu0 0.0
        %1071 = vmatpush1.msra.mxu0 %v1040
        %1072 = vmatprep.subr.mxu0 0.0
        %1073 = vmatpush1.msra.mxu0 %v1041
        %1074 = vmatprep.subr.mxu0 0.0
        %1075 = vmatpush1.msra.mxu0 %v1042
        %1076 = vmatprep.subr.mxu0 0.0
        %1077 = vmatpush1.msra.mxu0 %v1043
        %1078 = vmatprep.subr.mxu0 0.0
        %1079 = vmatpush1.msra.mxu0 %v1044
        %1080 = vmatprep.subr.mxu0 0.0
        %1081 = vmatpush1.msra.mxu0 %v1045
        %1082 = vmatprep.subr.mxu0 0.0
        %1083 = vmatpush1.msra.mxu0 %v1046
        %1084 = vmatprep.subr.mxu0 0.0
        %1085 = vmatpush1.msra.mxu0 %v1047
        %1086 = vmatprep.subr.mxu0 0.0
        %1087 = vmatpush1.msra.mxu0 %v1048
        %1088 = vmatprep.subr.mxu0 0.0
        %1089 = vmatpush1.msra.mxu0 0.0
        %1090 = vmatprep.subr.mxu0 0.0
        %1091 = vmatpush1.msra.mxu0 0.0
        %1092 = vmatprep.subr.mxu0 0.0
        %1093 = vmatpush1.msra.mxu0 0.0
        %1094 = vmatprep.subr.mxu0 0.0
        %1095 = vmatpush1.msra.mxu0 0.0
        %1096 = vmatprep.subr.mxu0 0.0
        %1097 = vmatpush1.msra.mxu0 0.0
        %1098 = vmatprep.subr.mxu0 0.0
        %1099 = vmatpush1.msra.mxu0 0.0
        %1100 = vmatprep.subr.mxu0 0.0
        %1101 = vmatpush1.msra.mxu0 0.0
        %1102 = vmatprep.subr.mxu0 0.0
        %1103 = vmatpush1.msra.mxu0 0.0
        %1104 = vmatprep.subr.mxu0 0.0
        %1105 = vmatpush1.msra.mxu0 0.0
        %1106 = vmatprep.subr.mxu0 0.0
        %1107 = vmatpush1.msra.mxu0 0.0
        %1108 = vmatprep.subr.mxu0 0.0
        %1109 = vmatpush1.msra.mxu0 0.0
        %1110 = vmatprep.subr.mxu0 0.0
        %1111 = vmatpush1.msra.mxu0 0.0
        %1112 = vmatprep.subr.mxu0 0.0
        %1113 = vmatpush1.msra.mxu0 0.0
        %1114 = vmatprep.subr.mxu0 0.0
        %1115 = vmatpush1.msra.mxu0 0.0
        %1116 = vmatprep.subr.mxu0 0.0
        %1117 = vmatpush1.msra.mxu0 0.0
        %1118 = vmatprep.subr.mxu0 0.0
        %1119 = vmatpush1.msra.mxu0 0.0
        %1120 = vmatprep.mubr.f32.mxu0 0.0
        %1121 = vmatmul.mubr.f32.gmra.mrb[0].mxu0 %v843
        %v1122 = vpop.f32.mrb[0].mxu0
        %v1123 = vadd.f32 %v1054, %v1122
        %v1124 = vpop.f32.mrb[0].mxu0
        %1125 = vdwg.mxu0
        %vm1126 = vcmask 64512
        %v1128 = vsel %vm1126, %v937, 0
        %v1131 = vsel %vm1126, %v1030, 0
        %1133 = vmatprep.subr.mxu0 0.0
        %1134 = vmatpush1.xpose.msra.mxu0 %v1131
        %1135 = vmatprep.subr.mxu0 0.0
        %1136 = vmatpush1.xpose.msra.mxu0 0.0
        %1137 = vmatprep.subr.mxu0 0.0
        %1138 = vmatpush1.xpose.msra.mxu0 0.0
        %1139 = vmatprep.subr.mxu0 0.0
        %1140 = vmatpush1.xpose.msra.mxu0 0.0
        %1141 = vmatprep.subr.mxu0 0.0
        %1142 = vmatpush1.xpose.msra.mxu0 0.0
        %1143 = vmatprep.subr.mxu0 0.0
        %1144 = vmatpush1.xpose.msra.mxu0 0.0
        %1145 = vmatprep.subr.mxu0 0.0
        %1146 = vmatpush1.xpose.msra.mxu0 0.0
        %1147 = vmatprep.subr.mxu0 0.0
        %1148 = vmatpush1.xpose.msra.mxu0 0.0
        %1149 = vmatprep.subr.mxu0 0.0
        %1150 = vmatpush1.xpose.msra.mxu0 0.0
        %1151 = vmatprep.subr.mxu0 0.0
        %1152 = vmatpush1.xpose.msra.mxu0 0.0
        %1153 = vmatprep.subr.mxu0 0.0
        %1154 = vmatpush1.xpose.msra.mxu0 0.0
        %1155 = vmatprep.subr.mxu0 0.0
        %1156 = vmatpush1.xpose.msra.mxu0 0.0
        %1157 = vmatprep.subr.mxu0 0.0
        %1158 = vmatpush1.xpose.msra.mxu0 0.0
        %1159 = vmatprep.subr.mxu0 0.0
        %1160 = vmatpush1.xpose.msra.mxu0 0.0
        %1161 = vmatprep.subr.mxu0 0.0
        %1162 = vmatpush1.xpose.msra.mxu0 0.0
        %1163 = vmatprep.subr.mxu0 0.0
        %1164 = vmatpush1.xpose.msra.mxu0 0.0
        %1165 = vmatprep.subr.mxu0 0.0
        %1166 = vmatpush1.xpose.msra.mxu0 0.0
        %1167 = vmatprep.subr.mxu0 0.0
        %1168 = vmatpush1.xpose.msra.mxu0 0.0
        %1169 = vmatprep.subr.mxu0 0.0
        %1170 = vmatpush1.xpose.msra.mxu0 0.0
        %1171 = vmatprep.subr.mxu0 0.0
        %1172 = vmatpush1.xpose.msra.mxu0 0.0
        %1173 = vmatprep.subr.mxu0 0.0
        %1174 = vmatpush1.xpose.msra.mxu0 0.0
        %1175 = vmatprep.subr.mxu0 0.0
        %1176 = vmatpush1.xpose.msra.mxu0 0.0
        %1177 = vmatprep.subr.mxu0 0.0
        %1178 = vmatpush1.xpose.msra.mxu0 0.0
        %1179 = vmatprep.subr.mxu0 0.0
        %1180 = vmatpush1.xpose.msra.mxu0 0.0
        %1181 = vmatprep.subr.mxu0 0.0
        %1182 = vmatpush1.xpose.msra.mxu0 0.0
        %1183 = vmatprep.subr.mxu0 0.0
        %1184 = vmatpush1.xpose.msra.mxu0 0.0
        %1185 = vmatprep.subr.mxu0 0.0
        %1186 = vmatpush1.xpose.msra.mxu0 0.0
        %1187 = vmatprep.subr.mxu0 0.0
        %1188 = vmatpush1.xpose.msra.mxu0 0.0
        %1189 = vmatprep.subr.mxu0 0.0
        %1190 = vmatpush1.xpose.msra.mxu0 0.0
        %1191 = vmatprep.subr.mxu0 0.0
        %1192 = vmatpush1.xpose.msra.mxu0 0.0
        %1193 = vmatprep.subr.mxu0 0.0
        %1194 = vmatpush1.xpose.msra.mxu0 0.0
        %1195 = vmatprep.subr.mxu0 0.0
        %1196 = vmatpush1.xpose.msra.mxu0 0.0
        %1197 = vmatprep.mubr.f32.mxu0 0.0
        %1198 = vmatmul.mubr.f32.gmra.mrb[0].mxu0 %v1128
        %v1199 = vpop.f32.mrb[0].mxu0
        %v1200 = vadd.f32 0.0, %v1199
        %v1201 = vpop.f32.mrb[0].mxu0
        %1202 = vdwg.mxu0
        %v1203 = vsel %vm1126, %v1200, -inf
        %1204 = vmax.xlane.f32.xlu0 %v1203
        %v1205 = vpop.xlane.xlu0 %1204
        %v1206 = vsub.f32 %v1200, %v1205
        %v1207 = vmul.f32 %v1206, 1.442695
        %v1208 = vpow.pop %v1207
        %v1209 = vsel %vm1126, %v1208, 0.0
        %1210 = vadd.xlane.f32.xlu0 %v1209
        %v1211 = vpop.xlane.xlu0 %1210
        %v1212 = vrcp.pop %v1211
        %v1213 = vmul.f32 %v1208, %v1212
        %v1215 = vsel %vm1126, %v1213, 0
        %1217 = vmatprep.subr.mxu0 0.0
        %1218 = vmatpush1.msra.mxu0 %v1123
        %1219 = vmatprep.subr.mxu0 0.0
        %1220 = vmatpush1.msra.mxu0 0.0
        %1221 = vmatprep.subr.mxu0 0.0
        %1222 = vmatpush1.msra.mxu0 0.0
        %1223 = vmatprep.subr.mxu0 0.0
        %1224 = vmatpush1.msra.mxu0 0.0
        %1225 = vmatprep.subr.mxu0 0.0
        %1226 = vmatpush1.msra.mxu0 0.0
        %1227 = vmatprep.subr.mxu0 0.0
        %1228 = vmatpush1.msra.mxu0 0.0
        %1229 = vmatprep.subr.mxu0 0.0
        %1230 = vmatpush1.msra.mxu0 0.0
        %1231 = vmatprep.subr.mxu0 0.0
        %1232 = vmatpush1.msra.mxu0 0.0
        %1233 = vmatprep.subr.mxu0 0.0
        %1234 = vmatpush1.msra.mxu0 0.0
        %1235 = vmatprep.subr.mxu0 0.0
        %1236 = vmatpush1.msra.mxu0 0.0
        %1237 = vmatprep.subr.mxu0 0.0
        %1238 = vmatpush1.msra.mxu0 0.0
        %1239 = vmatprep.subr.mxu0 0.0
        %1240 = vmatpush1.msra.mxu0 0.0
        %1241 = vmatprep.subr.mxu0 0.0
        %1242 = vmatpush1.msra.mxu0 0.0
        %1243 = vmatprep.subr.mxu0 0.0
        %1244 = vmatpush1.msra.mxu0 0.0
        %1245 = vmatprep.subr.mxu0 0.0
        %1246 = vmatpush1.msra.mxu0 0.0
        %1247 = vmatprep.subr.mxu0 0.0
        %1248 = vmatpush1.msra.mxu0 0.0
        %1249 = vmatprep.subr.mxu0 0.0
        %1250 = vmatpush1.msra.mxu0 0.0
        %1251 = vmatprep.subr.mxu0 0.0
        %1252 = vmatpush1.msra.mxu0 0.0
        %1253 = vmatprep.subr.mxu0 0.0
        %1254 = vmatpush1.msra.mxu0 0.0
        %1255 = vmatprep.subr.mxu0 0.0
        %1256 = vmatpush1.msra.mxu0 0.0
        %1257 = vmatprep.subr.mxu0 0.0
        %1258 = vmatpush1.msra.mxu0 0.0
        %1259 = vmatprep.subr.mxu0 0.0
        %1260 = vmatpush1.msra.mxu0 0.0
        %1261 = vmatprep.subr.mxu0 0.0
        %1262 = vmatpush1.msra.mxu0 0.0
        %1263 = vmatprep.subr.mxu0 0.0
        %1264 = vmatpush1.msra.mxu0 0.0
        %1265 = vmatprep.subr.mxu0 0.0
        %1266 = vmatpush1.msra.mxu0 0.0
        %1267 = vmatprep.subr.mxu0 0.0
        %1268 = vmatpush1.msra.mxu0 0.0
        %1269 = vmatprep.subr.mxu0 0.0
        %1270 = vmatpush1.msra.mxu0 0.0
        %1271 = vmatprep.subr.mxu0 0.0
        %1272 = vmatpush1.msra.mxu0 0.0
        %1273 = vmatprep.subr.mxu0 0.0
        %1274 = vmatpush1.msra.mxu0 0.0
        %1275 = vmatprep.subr.mxu0 0.0
        %1276 = vmatpush1.msra.mxu0 0.0
        %1277 = vmatprep.subr.mxu0 0.0
        %1278 = vmatpush1.msra.mxu0 0.0
        %1279 = vmatprep.subr.mxu0 0.0
        %1280 = vmatpush1.msra.mxu0 0.0
        %1281 = vmatprep.mubr.f32.mxu0 0.0
        %1282 = vmatmul.mubr.f32.gmra.mrb[0].mxu0 %v1215
        %v1283 = vpop.f32.mrb[0].mxu0
        %v1284 = vadd.f32 0.0, %v1283
        %v1285 = vpop.f32.mrb[0].mxu0
        %1286 = vdwg.mxu0
        %1287 = vrot.lane.b32.xlu0 %v937, 120
        %v1288 = vpop.permute.xlu0 %1287
        %1289 = vrot.lane.b32.xlu0 %v1030, 120
        %v1290 = vpop.permute.xlu0 %1289
        %v1291 = vsel %vm1126, %v1288, 0
        %v1293 = vsel %vm1126, %v1290, 0
        %1295 = vmatprep.subr.mxu0 0.0
        %1296 = vmatpush1.xpose.msra.mxu0 %v1293
        %1297 = vmatprep.subr.mxu0 0.0
        %1298 = vmatpush1.xpose.msra.mxu0 0.0
        %1299 = vmatprep.subr.mxu0 0.0
        %1300 = vmatpush1.xpose.msra.mxu0 0.0
        %1301 = vmatprep.subr.mxu0 0.0
        %1302 = vmatpush1.xpose.msra.mxu0 0.0
        %1303 = vmatprep.subr.mxu0 0.0
        %1304 = vmatpush1.xpose.msra.mxu0 0.0
        %1305 = vmatprep.subr.mxu0 0.0
        %1306 = vmatpush1.xpose.msra.mxu0 0.0
        %1307 = vmatprep.subr.mxu0 0.0
        %1308 = vmatpush1.xpose.msra.mxu0 0.0
        %1309 = vmatprep.subr.mxu0 0.0
        %1310 = vmatpush1.xpose.msra.mxu0 0.0
        %1311 = vmatprep.subr.mxu0 0.0
        %1312 = vmatpush1.xpose.msra.mxu0 0.0
        %1313 = vmatprep.subr.mxu0 0.0
        %1314 = vmatpush1.xpose.msra.mxu0 0.0
        %1315 = vmatprep.subr.mxu0 0.0
        %1316 = vmatpush1.xpose.msra.mxu0 0.0
        %1317 = vmatprep.subr.mxu0 0.0
        %1318 = vmatpush1.xpose.msra.mxu0 0.0
        %1319 = vmatprep.subr.mxu0 0.0
        %1320 = vmatpush1.xpose.msra.mxu0 0.0
        %1321 = vmatprep.subr.mxu0 0.0
        %1322 = vmatpush1.xpose.msra.mxu0 0.0
        %1323 = vmatprep.subr.mxu0 0.0
        %1324 = vmatpush1.xpose.msra.mxu0 0.0
        %1325 = vmatprep.subr.mxu0 0.0
        %1326 = vmatpush1.xpose.msra.mxu0 0.0
        %1327 = vmatprep.subr.mxu0 0.0
        %1328 = vmatpush1.xpose.msra.mxu0 0.0
        %1329 = vmatprep.subr.mxu0 0.0
        %1330 = vmatpush1.xpose.msra.mxu0 0.0
        %1331 = vmatprep.subr.mxu0 0.0
        %1332 = vmatpush1.xpose.msra.mxu0 0.0
        %1333 = vmatprep.subr.mxu0 0.0
        %1334 = vmatpush1.xpose.msra.mxu0 0.0
        %1335 = vmatprep.subr.mxu0 0.0
        %1336 = vmatpush1.xpose.msra.mxu0 0.0
        %1337 = vmatprep.subr.mxu0 0.0
        %1338 = vmatpush1.xpose.msra.mxu0 0.0
        %1339 = vmatprep.subr.mxu0 0.0
        %1340 = vmatpush1.xpose.msra.mxu0 0.0
        %1341 = vmatprep.subr.mxu0 0.0
        %1342 = vmatpush1.xpose.msra.mxu0 0.0
        %1343 = vmatprep.subr.mxu0 0.0
        %1344 = vmatpush1.xpose.msra.mxu0 0.0
        %1345 = vmatprep.subr.mxu0 0.0
        %1346 = vmatpush1.xpose.msra.mxu0 0.0
        %1347 = vmatprep.subr.mxu0 0.0
        %1348 = vmatpush1.xpose.msra.mxu0 0.0
        %1349 = vmatprep.subr.mxu0 0.0
        %1350 = vmatpush1.xpose.msra.mxu0 0.0
        %1351 = vmatprep.subr.mxu0 0.0
        %1352 = vmatpush1.xpose.msra.mxu0 0.0
        %1353 = vmatprep.subr.mxu0 0.0
        %1354 = vmatpush1.xpose.msra.mxu0 0.0
        %1355 = vmatprep.subr.mxu0 0.0
        %1356 = vmatpush1.xpose.msra.mxu0 0.0
        %1357 = vmatprep.subr.mxu0 0.0
        %1358 = vmatpush1.xpose.msra.mxu0 0.0
        %1359 = vmatprep.mubr.f32.mxu0 0.0
        %1360 = vmatmul.mubr.f32.gmra.mrb[0].mxu0 %v1291
        %v1361 = vpop.f32.mrb[0].mxu0
        %v1362 = vadd.f32 0.0, %v1361
        %v1363 = vpop.f32.mrb[0].mxu0
        %1364 = vdwg.mxu0
        %v1365 = vsel %vm1126, %v1362, -inf
        %1366 = vmax.xlane.f32.xlu0 %v1365
        %v1367 = vpop.xlane.xlu0 %1366
        %v1368 = vsub.f32 %v1362, %v1367
        %v1369 = vmul.f32 %v1368, 1.442695
        %v1370 = vpow.pop %v1369
        %v1371 = vsel %vm1126, %v1370, 0.0
        %1372 = vadd.xlane.f32.xlu0 %v1371
        %v1373 = vpop.xlane.xlu0 %1372
        %v1374 = vrcp.pop %v1373
        %v1375 = vmul.f32 %v1370, %v1374
        %1377 = vrot.lane.b32.xlu0 %v1123, 120
        %v1378 = vpop.permute.xlu0 %1377
        %v1381 = vsel %vm1126, %v1375, 0
        %1383 = vmatprep.subr.mxu0 0.0
        %1384 = vmatpush1.msra.mxu0 %v1378
        %1385 = vmatprep.subr.mxu0 0.0
        %1386 = vmatpush1.msra.mxu0 0.0
        %1387 = vmatprep.subr.mxu0 0.0
        %1388 = vmatpush1.msra.mxu0 0.0
        %1389 = vmatprep.subr.mxu0 0.0
        %1390 = vmatpush1.msra.mxu0 0.0
        %1391 = vmatprep.subr.mxu0 0.0
        %1392 = vmatpush1.msra.mxu0 0.0
        %1393 = vmatprep.subr.mxu0 0.0
        %1394 = vmatpush1.msra.mxu0 0.0
        %1395 = vmatprep.subr.mxu0 0.0
        %1396 = vmatpush1.msra.mxu0 0.0
        %1397 = vmatprep.subr.mxu0 0.0
        %1398 = vmatpush1.msra.mxu0 0.0
        %1399 = vmatprep.subr.mxu0 0.0
        %1400 = vmatpush1.msra.mxu0 0.0
        %1401 = vmatprep.subr.mxu0 0.0
        %1402 = vmatpush1.msra.mxu0 0.0
        %1403 = vmatprep.subr.mxu0 0.0
        %1404 = vmatpush1.msra.mxu0 0.0
        %1405 = vmatprep.subr.mxu0 0.0
        %1406 = vmatpush1.msra.mxu0 0.0
        %1407 = vmatprep.subr.mxu0 0.0
        %1408 = vmatpush1.msra.mxu0 0.0
        %1409 = vmatprep.subr.mxu0 0.0
        %1410 = vmatpush1.msra.mxu0 0.0
        %1411 = vmatprep.subr.mxu0 0.0
        %1412 = vmatpush1.msra.mxu0 0.0
        %1413 = vmatprep.subr.mxu0 0.0
        %1414 = vmatpush1.msra.mxu0 0.0
        %1415 = vmatprep.subr.mxu0 0.0
        %1416 = vmatpush1.msra.mxu0 0.0
        %1417 = vmatprep.subr.mxu0 0.0
        %1418 = vmatpush1.msra.mxu0 0.0
        %1419 = vmatprep.subr.mxu0 0.0
        %1420 = vmatpush1.msra.mxu0 0.0
        %1421 = vmatprep.subr.mxu0 0.0
        %1422 = vmatpush1.msra.mxu0 0.0
        %1423 = vmatprep.subr.mxu0 0.0
        %1424 = vmatpush1.msra.mxu0 0.0
        %1425 = vmatprep.subr.mxu0 0.0
        %1426 = vmatpush1.msra.mxu0 0.0
        %1427 = vmatprep.subr.mxu0 0.0
        %1428 = vmatpush1.msra.mxu0 0.0
        %1429 = vmatprep.subr.mxu0 0.0
        %1430 = vmatpush1.msra.mxu0 0.0
        %1431 = vmatprep.subr.mxu0 0.0
        %1432 = vmatpush1.msra.mxu0 0.0
        %1433 = vmatprep.subr.mxu0 0.0
        %1434 = vmatpush1.msra.mxu0 0.0
        %1435 = vmatprep.subr.mxu0 0.0
        %1436 = vmatpush1.msra.mxu0 0.0
        %1437 = vmatprep.subr.mxu0 0.0
        %1438 = vmatpush1.msra.mxu0 0.0
        %1439 = vmatprep.subr.mxu0 0.0
        %1440 = vmatpush1.msra.mxu0 0.0
        %1441 = vmatprep.subr.mxu0 0.0
        %1442 = vmatpush1.msra.mxu0 0.0
        %1443 = vmatprep.subr.mxu0 0.0
        %1444 = vmatpush1.msra.mxu0 0.0
        %1445 = vmatprep.subr.mxu0 0.0
        %1446 = vmatpush1.msra.mxu0 0.0
        %1447 = vmatprep.mubr.f32.mxu0 0.0
        %1448 = vmatmul.mubr.f32.gmra.mrb[0].mxu0 %v1381
        %v1449 = vpop.f32.mrb[0].mxu0
        %v1450 = vadd.f32 0.0, %v1449
        %v1451 = vpop.f32.mrb[0].mxu0
        %1452 = vdwg.mxu0
        %1453 = vrot.lane.b32.xlu0 %v937, 112
        %v1454 = vpop.permute.xlu0 %1453
        %1455 = vrot.lane.b32.xlu0 %v1030, 112
        %v1456 = vpop.permute.xlu0 %1455
        %v1457 = vsel %vm1126, %v1454, 0
        %v1459 = vsel %vm1126, %v1456, 0
        %1461 = vmatprep.subr.mxu0 0.0
        %1462 = vmatpush1.xpose.msra.mxu0 %v1459
        %1463 = vmatprep.subr.mxu0 0.0
        %1464 = vmatpush1.xpose.msra.mxu0 0.0
        %1465 = vmatprep.subr.mxu0 0.0
        %1466 = vmatpush1.xpose.msra.mxu0 0.0
        %1467 = vmatprep.subr.mxu0 0.0
        %1468 = vmatpush1.xpose.msra.mxu0 0.0
        %1469 = vmatprep.subr.mxu0 0.0
        %1470 = vmatpush1.xpose.msra.mxu0 0.0
        %1471 = vmatprep.subr.mxu0 0.0
        %1472 = vmatpush1.xpose.msra.mxu0 0.0
        %1473 = vmatprep.subr.mxu0 0.0
        %1474 = vmatpush1.xpose.msra.mxu0 0.0
        %1475 = vmatprep.subr.mxu0 0.0
        %1476 = vmatpush1.xpose.msra.mxu0 0.0
        %1477 = vmatprep.subr.mxu0 0.0
        %1478 = vmatpush1.xpose.msra.mxu0 0.0
        %1479 = vmatprep.subr.mxu0 0.0
        %1480 = vmatpush1.xpose.msra.mxu0 0.0
        %1481 = vmatprep.subr.mxu0 0.0
        %1482 = vmatpush1.xpose.msra.mxu0 0.0
        %1483 = vmatprep.subr.mxu0 0.0
        %1484 = vmatpush1.xpose.msra.mxu0 0.0
        %1485 = vmatprep.subr.mxu0 0.0
        %1486 = vmatpush1.xpose.msra.mxu0 0.0
        %1487 = vmatprep.subr.mxu0 0.0
        %1488 = vmatpush1.xpose.msra.mxu0 0.0
        %1489 = vmatprep.subr.mxu0 0.0
        %1490 = vmatpush1.xpose.msra.mxu0 0.0
        %1491 = vmatprep.subr.mxu0 0.0
        %1492 = vmatpush1.xpose.msra.mxu0 0.0
        %1493 = vmatprep.subr.mxu0 0.0
        %1494 = vmatpush1.xpose.msra.mxu0 0.0
        %1495 = vmatprep.subr.mxu0 0.0
        %1496 = vmatpush1.xpose.msra.mxu0 0.0
        %1497 = vmatprep.subr.mxu0 0.0
        %1498 = vmatpush1.xpose.msra.mxu0 0.0
        %1499 = vmatprep.subr.mxu0 0.0
        %1500 = vmatpush1.xpose.msra.mxu0 0.0
        %1501 = vmatprep.subr.mxu0 0.0
        %1502 = vmatpush1.xpose.msra.mxu0 0.0
        %1503 = vmatprep.subr.mxu0 0.0
        %1504 = vmatpush1.xpose.msra.mxu0 0.0
        %1505 = vmatprep.subr.mxu0 0.0
        %1506 = vmatpush1.xpose.msra.mxu0 0.0
        %1507 = vmatprep.subr.mxu0 0.0
        %1508 = vmatpush1.xpose.msra.mxu0 0.0
        %1509 = vmatprep.subr.mxu0 0.0
        %1510 = vmatpush1.xpose.msra.mxu0 0.0
        %1511 = vmatprep.subr.mxu0 0.0
        %1512 = vmatpush1.xpose.msra.mxu0 0.0
        %1513 = vmatprep.subr.mxu0 0.0
        %1514 = vmatpush1.xpose.msra.mxu0 0.0
        %1515 = vmatprep.subr.mxu0 0.0
        %1516 = vmatpush1.xpose.msra.mxu0 0.0
        %1517 = vmatprep.subr.mxu0 0.0
        %1518 = vmatpush1.xpose.msra.mxu0 0.0
        %1519 = vmatprep.subr.mxu0 0.0
        %1520 = vmatpush1.xpose.msra.mxu0 0.0
        %1521 = vmatprep.subr.mxu0 0.0
        %1522 = vmatpush1.xpose.msra.mxu0 0.0
        %1523 = vmatprep.subr.mxu0 0.0
        %1524 = vmatpush1.xpose.msra.mxu0 0.0
        %1525 = vmatprep.mubr.f32.mxu0 0.0
        %1526 = vmatmul.mubr.f32.gmra.mrb[0].mxu0 %v1457
        %v1527 = vpop.f32.mrb[0].mxu0
        %v1528 = vadd.f32 0.0, %v1527
        %v1529 = vpop.f32.mrb[0].mxu0
        %1530 = vdwg.mxu0
        %v1531 = vsel %vm1126, %v1528, -inf
        %1532 = vmax.xlane.f32.xlu0 %v1531
        %v1533 = vpop.xlane.xlu0 %1532
        %v1534 = vsub.f32 %v1528, %v1533
        %v1535 = vmul.f32 %v1534, 1.442695
        %v1536 = vpow.pop %v1535
        %v1537 = vsel %vm1126, %v1536, 0.0
        %1538 = vadd.xlane.f32.xlu0 %v1537
        %v1539 = vpop.xlane.xlu0 %1538
        %v1540 = vrcp.pop %v1539
        %v1541 = vmul.f32 %v1536, %v1540
        %1542 = vrot.lane.b32.xlu0 %v1123, 112
        %v1543 = vpop.permute.xlu0 %1542
        %v1546 = vsel %vm1126, %v1541, 0
        %1548 = vmatprep.subr.mxu0 0.0
        %1549 = vmatpush1.msra.mxu0 %v1543
        %1550 = vmatprep.subr.mxu0 0.0
        %1551 = vmatpush1.msra.mxu0 0.0
        %1552 = vmatprep.subr.mxu0 0.0
        %1553 = vmatpush1.msra.mxu0 0.0
        %1554 = vmatprep.subr.mxu0 0.0
        %1555 = vmatpush1.msra.mxu0 0.0
        %1556 = vmatprep.subr.mxu0 0.0
        %1557 = vmatpush1.msra.mxu0 0.0
        %1558 = vmatprep.subr.mxu0 0.0
        %1559 = vmatpush1.msra.mxu0 0.0
        %1560 = vmatprep.subr.mxu0 0.0
        %1561 = vmatpush1.msra.mxu0 0.0
        %1562 = vmatprep.subr.mxu0 0.0
        %1563 = vmatpush1.msra.mxu0 0.0
        %1564 = vmatprep.subr.mxu0 0.0
        %1565 = vmatpush1.msra.mxu0 0.0
        %1566 = vmatprep.subr.mxu0 0.0
        %1567 = vmatpush1.msra.mxu0 0.0
        %1568 = vmatprep.subr.mxu0 0.0
        %1569 = vmatpush1.msra.mxu0 0.0
        %1570 = vmatprep.subr.mxu0 0.0
        %1571 = vmatpush1.msra.mxu0 0.0
        %1572 = vmatprep.subr.mxu0 0.0
        %1573 = vmatpush1.msra.mxu0 0.0
        %1574 = vmatprep.subr.mxu0 0.0
        %1575 = vmatpush1.msra.mxu0 0.0
        %1576 = vmatprep.subr.mxu0 0.0
        %1577 = vmatpush1.msra.mxu0 0.0
        %1578 = vmatprep.subr.mxu0 0.0
        %1579 = vmatpush1.msra.mxu0 0.0
        %1580 = vmatprep.subr.mxu0 0.0
        %1581 = vmatpush1.msra.mxu0 0.0
        %1582 = vmatprep.subr.mxu0 0.0
        %1583 = vmatpush1.msra.mxu0 0.0
        %1584 = vmatprep.subr.mxu0 0.0
        %1585 = vmatpush1.msra.mxu0 0.0
        %1586 = vmatprep.subr.mxu0 0.0
        %1587 = vmatpush1.msra.mxu0 0.0
        %1588 = vmatprep.subr.mxu0 0.0
        %1589 = vmatpush1.msra.mxu0 0.0
        %1590 = vmatprep.subr.mxu0 0.0
        %1591 = vmatpush1.msra.mxu0 0.0
        %1592 = vmatprep.subr.mxu0 0.0
        %1593 = vmatpush1.msra.mxu0 0.0
        %1594 = vmatprep.subr.mxu0 0.0
        %1595 = vmatpush1.msra.mxu0 0.0
        %1596 = vmatprep.subr.mxu0 0.0
        %1597 = vmatpush1.msra.mxu0 0.0
        %1598 = vmatprep.subr.mxu0 0.0
        %1599 = vmatpush1.msra.mxu0 0.0
        %1600 = vmatprep.subr.mxu0 0.0
        %1601 = vmatpush1.msra.mxu0 0.0
        %1602 = vmatprep.subr.mxu0 0.0
        %1603 = vmatpush1.msra.mxu0 0.0
        %1604 = vmatprep.subr.mxu0 0.0
        %1605 = vmatpush1.msra.mxu0 0.0
        %1606 = vmatprep.subr.mxu0 0.0
        %1607 = vmatpush1.msra.mxu0 0.0
        %1608 = vmatprep.subr.mxu0 0.0
        %1609 = vmatpush1.msra.mxu0 0.0
        %1610 = vmatprep.subr.mxu0 0.0
        %1611 = vmatpush1.msra.mxu0 0.0
        %1612 = vmatprep.mubr.f32.mxu0 0.0
        %1613 = vmatmul.mubr.f32.gmra.mrb[0].mxu0 %v1546
        %v1614 = vpop.f32.mrb[0].mxu0
        %v1615 = vadd.f32 0.0, %v1614
        %v1616 = vpop.f32.mrb[0].mxu0
        %1617 = vdwg.mxu0
        %1618 = vrot.lane.b32.xlu0 %v937, 104
        %v1619 = vpop.permute.xlu0 %1618
        %1620 = vrot.lane.b32.xlu0 %v1030, 104
        %v1621 = vpop.permute.xlu0 %1620
        %v1622 = vsel %vm1126, %v1619, 0
        %v1624 = vsel %vm1126, %v1621, 0
        %1626 = vmatprep.subr.mxu0 0.0
        %1627 = vmatpush1.xpose.msra.mxu0 %v1624
        %1628 = vmatprep.subr.mxu0 0.0
        %1629 = vmatpush1.xpose.msra.mxu0 0.0
        %1630 = vmatprep.subr.mxu0 0.0
        %1631 = vmatpush1.xpose.msra.mxu0 0.0
        %1632 = vmatprep.subr.mxu0 0.0
        %1633 = vmatpush1.xpose.msra.mxu0 0.0
        %1634 = vmatprep.subr.mxu0 0.0
        %1635 = vmatpush1.xpose.msra.mxu0 0.0
        %1636 = vmatprep.subr.mxu0 0.0
        %1637 = vmatpush1.xpose.msra.mxu0 0.0
        %1638 = vmatprep.subr.mxu0 0.0
        %1639 = vmatpush1.xpose.msra.mxu0 0.0
        %1640 = vmatprep.subr.mxu0 0.0
        %1641 = vmatpush1.xpose.msra.mxu0 0.0
        %1642 = vmatprep.subr.mxu0 0.0
        %1643 = vmatpush1.xpose.msra.mxu0 0.0
        %1644 = vmatprep.subr.mxu0 0.0
        %1645 = vmatpush1.xpose.msra.mxu0 0.0
        %1646 = vmatprep.subr.mxu0 0.0
        %1647 = vmatpush1.xpose.msra.mxu0 0.0
        %1648 = vmatprep.subr.mxu0 0.0
        %1649 = vmatpush1.xpose.msra.mxu0 0.0
        %1650 = vmatprep.subr.mxu0 0.0
        %1651 = vmatpush1.xpose.msra.mxu0 0.0
        %1652 = vmatprep.subr.mxu0 0.0
        %1653 = vmatpush1.xpose.msra.mxu0 0.0
        %1654 = vmatprep.subr.mxu0 0.0
        %1655 = vmatpush1.xpose.msra.mxu0 0.0
        %1656 = vmatprep.subr.mxu0 0.0
        %1657 = vmatpush1.xpose.msra.mxu0 0.0
        %1658 = vmatprep.subr.mxu0 0.0
        %1659 = vmatpush1.xpose.msra.mxu0 0.0
        %1660 = vmatprep.subr.mxu0 0.0
        %1661 = vmatpush1.xpose.msra.mxu0 0.0
        %1662 = vmatprep.subr.mxu0 0.0
        %1663 = vmatpush1.xpose.msra.mxu0 0.0
        %1664 = vmatprep.subr.mxu0 0.0
        %1665 = vmatpush1.xpose.msra.mxu0 0.0
        %1666 = vmatprep.subr.mxu0 0.0
        %1667 = vmatpush1.xpose.msra.mxu0 0.0
        %1668 = vmatprep.subr.mxu0 0.0
        %1669 = vmatpush1.xpose.msra.mxu0 0.0
        %1670 = vmatprep.subr.mxu0 0.0
        %1671 = vmatpush1.xpose.msra.mxu0 0.0
        %1672 = vmatprep.subr.mxu0 0.0
        %1673 = vmatpush1.xpose.msra.mxu0 0.0
        %1674 = vmatprep.subr.mxu0 0.0
        %1675 = vmatpush1.xpose.msra.mxu0 0.0
        %1676 = vmatprep.subr.mxu0 0.0
        %1677 = vmatpush1.xpose.msra.mxu0 0.0
        %1678 = vmatprep.subr.mxu0 0.0
        %1679 = vmatpush1.xpose.msra.mxu0 0.0
        %1680 = vmatprep.subr.mxu0 0.0
        %1681 = vmatpush1.xpose.msra.mxu0 0.0
        %1682 = vmatprep.subr.mxu0 0.0
        %1683 = vmatpush1.xpose.msra.mxu0 0.0
        %1684 = vmatprep.subr.mxu0 0.0
        %1685 = vmatpush1.xpose.msra.mxu0 0.0
        %1686 = vmatprep.subr.mxu0 0.0
        %1687 = vmatpush1.xpose.msra.mxu0 0.0
        %1688 = vmatprep.subr.mxu0 0.0
        %1689 = vmatpush1.xpose.msra.mxu0 0.0
        %1690 = vmatprep.mubr.f32.mxu0 0.0
        %1691 = vmatmul.mubr.f32.gmra.mrb[0].mxu0 %v1622
        %v1692 = vpop.f32.mrb[0].mxu0
        %v1693 = vadd.f32 0.0, %v1692
        %v1694 = vpop.f32.mrb[0].mxu0
        %1695 = vdwg.mxu0
        %v1696 = vsel %vm1126, %v1693, -inf
        %1697 = vmax.xlane.f32.xlu0 %v1696
        %v1698 = vpop.xlane.xlu0 %1697
        %v1699 = vsub.f32 %v1693, %v1698
        %v1700 = vmul.f32 %v1699, 1.442695
        %v1701 = vpow.pop %v1700
        %v1702 = vsel %vm1126, %v1701, 0.0
        %1703 = vadd.xlane.f32.xlu0 %v1702
        %v1704 = vpop.xlane.xlu0 %1703
        %v1705 = vrcp.pop %v1704
        %v1706 = vmul.f32 %v1701, %v1705
        %1707 = vrot.lane.b32.xlu0 %v1123, 104
        %v1708 = vpop.permute.xlu0 %1707
        %v1711 = vsel %vm1126, %v1706, 0
        %1713 = vmatprep.subr.mxu0 0.0
        %1714 = vmatpush1.msra.mxu0 %v1708
        %1715 = vmatprep.subr.mxu0 0.0
        %1716 = vmatpush1.msra.mxu0 0.0
        %1717 = vmatprep.subr.mxu0 0.0
        %1718 = vmatpush1.msra.mxu0 0.0
        %1719 = vmatprep.subr.mxu0 0.0
        %1720 = vmatpush1.msra.mxu0 0.0
        %1721 = vmatprep.subr.mxu0 0.0
        %1722 = vmatpush1.msra.mxu0 0.0
        %1723 = vmatprep.subr.mxu0 0.0
        %1724 = vmatpush1.msra.mxu0 0.0
        %1725 = vmatprep.subr.mxu0 0.0
        %1726 = vmatpush1.msra.mxu0 0.0
        %1727 = vmatprep.subr.mxu0 0.0
        %1728 = vmatpush1.msra.mxu0 0.0
        %1729 = vmatprep.subr.mxu0 0.0
        %1730 = vmatpush1.msra.mxu0 0.0
        %1731 = vmatprep.subr.mxu0 0.0
        %1732 = vmatpush1.msra.mxu0 0.0
        %1733 = vmatprep.subr.mxu0 0.0
        %1734 = vmatpush1.msra.mxu0 0.0
        %1735 = vmatprep.subr.mxu0 0.0
        %1736 = vmatpush1.msra.mxu0 0.0
        %1737 = vmatprep.subr.mxu0 0.0
        %1738 = vmatpush1.msra.mxu0 0.0
        %1739 = vmatprep.subr.mxu0 0.0
        %1740 = vmatpush1.msra.mxu0 0.0
        %1741 = vmatprep.subr.mxu0 0.0
        %1742 = vmatpush1.msra.mxu0 0.0
        %1743 = vmatprep.subr.mxu0 0.0
        %1744 = vmatpush1.msra.mxu0 0.0
        %1745 = vmatprep.subr.mxu0 0.0
        %1746 = vmatpush1.msra.mxu0 0.0
        %1747 = vmatprep.subr.mxu0 0.0
        %1748 = vmatpush1.msra.mxu0 0.0
        %1749 = vmatprep.subr.mxu0 0.0
        %1750 = vmatpush1.msra.mxu0 0.0
        %1751 = vmatprep.subr.mxu0 0.0
        %1752 = vmatpush1.msra.mxu0 0.0
        %1753 = vmatprep.subr.mxu0 0.0
        %1754 = vmatpush1.msra.mxu0 0.0
        %1755 = vmatprep.subr.mxu0 0.0
        %1756 = vmatpush1.msra.mxu0 0.0
        %1757 = vmatprep.subr.mxu0 0.0
        %1758 = vmatpush1.msra.mxu0 0.0
        %1759 = vmatprep.subr.mxu0 0.0
        %1760 = vmatpush1.msra.mxu0 0.0
        %1761 = vmatprep.subr.mxu0 0.0
        %1762 = vmatpush1.msra.mxu0 0.0
        %1763 = vmatprep.subr.mxu0 0.0
        %1764 = vmatpush1.msra.mxu0 0.0
        %1765 = vmatprep.subr.mxu0 0.0
        %1766 = vmatpush1.msra.mxu0 0.0
        %1767 = vmatprep.subr.mxu0 0.0
        %1768 = vmatpush1.msra.mxu0 0.0
        %1769 = vmatprep.subr.mxu0 0.0
        %1770 = vmatpush1.msra.mxu0 0.0
        %1771 = vmatprep.subr.mxu0 0.0
        %1772 = vmatpush1.msra.mxu0 0.0
        %1773 = vmatprep.subr.mxu0 0.0
        %1774 = vmatpush1.msra.mxu0 0.0
        %1775 = vmatprep.subr.mxu0 0.0
        %1776 = vmatpush1.msra.mxu0 0.0
        %1777 = vmatprep.mubr.f32.mxu0 0.0
        %1778 = vmatmul.mubr.f32.gmra.mrb[0].mxu0 %v1711
        %v1779 = vpop.f32.mrb[0].mxu0
        %v1780 = vadd.f32 0.0, %v1779
        %v1781 = vpop.f32.mrb[0].mxu0
        %1782 = vdwg.mxu0
        %1784 = vrot.lane.b32.xlu0 %v1450, 8
        %v1785 = vpop.permute.xlu0 %1784
        %1788 = vrot.lane.b32.xlu0 %v1615, 16
        %v1789 = vpop.permute.xlu0 %1788
        %1792 = vrot.lane.b32.xlu0 %v1780, 24
        %v1793 = vpop.permute.xlu0 %1792
        %v1795 = vsel %vm1126, %v1284, %v1785
        %vm1796 = vcmask 130048
        %v1797 = vsel %vm1796, %v1795, %v1789
        %vm1798 = vcmask 195584
        %v1799 = vsel %vm1798, %v1797, %v1793
        %vm1800 = vcmask 261120
        %v1801 = vsel %vm1800, %v1799, 0.0
        %v1802 = vld [vmem:[#allocation14] sm:$0xff]
        %v1803 = vld [vmem:[#allocation14 + $0x8] sm:$0xff]
        %v1804 = vld [vmem:[#allocation14 + $0x10] sm:$0xff]
        %v1805 = vld [vmem:[#allocation14 + $0x18] sm:$0xff]
        %v1806 = vld [vmem:[#allocation14 + $0x20] sm:$0xff]
        %v1807 = vld [vmem:[#allocation14 + $0x28] sm:$0xff]
        %v1808 = vld [vmem:[#allocation14 + $0x30] sm:$0xff]
        %v1809 = vld [vmem:[#allocation14 + $0x38] sm:$0xff]
        %v1810 = vld [vmem:[#allocation14 + $0x40] sm:$0xff]
        %v1811 = vld [vmem:[#allocation14 + $0x48] sm:$0xff]
        %v1812 = vld [vmem:[#allocation14 + $0x50] sm:$0xff]
        %v1813 = vld [vmem:[#allocation14 + $0x58] sm:$0xff]
        %v1814 = vld [vmem:[#allocation14 + $0x60] sm:$0xff]
        %v1815 = vld [vmem:[#allocation14 + $0x68] sm:$0xff]
        %v1816 = vld [vmem:[#allocation14 + $0x70] sm:$0xff]
        %v1817 = vld [vmem:[#allocation14 + $0x78] sm:$0xff]
        %v1818 = vld [vmem:[%s11] sm:$0x1]
        %v1820 = vlaneseq
        %v1821 = vshrl.u32 %v1820, 7
        %v1822 = vsub.s32 0, %v1821
        %v1823 = vrot.slane %v1818, %v1822
        %1825 = vmatprep.subr.mxu0 0.0
        %1826 = vmatpush1.msra.mxu0 %v1802
        %1827 = vmatprep.subr.mxu0 0.0
        %1828 = vmatpush1.msra.mxu0 %v1803
        %1829 = vmatprep.subr.mxu0 0.0
        %1830 = vmatpush1.msra.mxu0 %v1804
        %1831 = vmatprep.subr.mxu0 0.0
        %1832 = vmatpush1.msra.mxu0 %v1805
        %1833 = vmatprep.subr.mxu0 0.0
        %1834 = vmatpush1.msra.mxu0 %v1806
        %1835 = vmatprep.subr.mxu0 0.0
        %1836 = vmatpush1.msra.mxu0 %v1807
        %1837 = vmatprep.subr.mxu0 0.0
        %1838 = vmatpush1.msra.mxu0 %v1808
        %1839 = vmatprep.subr.mxu0 0.0
        %1840 = vmatpush1.msra.mxu0 %v1809
        %1841 = vmatprep.subr.mxu0 0.0
        %1842 = vmatpush1.msra.mxu0 %v1810
        %1843 = vmatprep.subr.mxu0 0.0
        %1844 = vmatpush1.msra.mxu0 %v1811
        %1845 = vmatprep.subr.mxu0 0.0
        %1846 = vmatpush1.msra.mxu0 %v1812
        %1847 = vmatprep.subr.mxu0 0.0
        %1848 = vmatpush1.msra.mxu0 %v1813
        %1849 = vmatprep.subr.mxu0 0.0
        %1850 = vmatpush1.msra.mxu0 %v1814
        %1851 = vmatprep.subr.mxu0 0.0
        %1852 = vmatpush1.msra.mxu0 %v1815
        %1853 = vmatprep.subr.mxu0 0.0
        %1854 = vmatpush1.msra.mxu0 %v1816
        %1855 = vmatprep.subr.mxu0 0.0
        %1856 = vmatpush1.msra.mxu0 %v1817
        %1857 = vmatprep.subr.mxu0 0.0
        %1858 = vmatpush1.msra.mxu0 0.0
        %1859 = vmatprep.subr.mxu0 0.0
        %1860 = vmatpush1.msra.mxu0 0.0
        %1861 = vmatprep.subr.mxu0 0.0
        %1862 = vmatpush1.msra.mxu0 0.0
        %1863 = vmatprep.subr.mxu0 0.0
        %1864 = vmatpush1.msra.mxu0 0.0
        %1865 = vmatprep.subr.mxu0 0.0
        %1866 = vmatpush1.msra.mxu0 0.0
        %1867 = vmatprep.subr.mxu0 0.0
        %1868 = vmatpush1.msra.mxu0 0.0
        %1869 = vmatprep.subr.mxu0 0.0
        %1870 = vmatpush1.msra.mxu0 0.0
        %1871 = vmatprep.subr.mxu0 0.0
        %1872 = vmatpush1.msra.mxu0 0.0
        %1873 = vmatprep.subr.mxu0 0.0
        %1874 = vmatpush1.msra.mxu0 0.0
        %1875 = vmatprep.subr.mxu0 0.0
        %1876 = vmatpush1.msra.mxu0 0.0
        %1877 = vmatprep.subr.mxu0 0.0
        %1878 = vmatpush1.msra.mxu0 0.0
        %1879 = vmatprep.subr.mxu0 0.0
        %1880 = vmatpush1.msra.mxu0 0.0
        %1881 = vmatprep.subr.mxu0 0.0
        %1882 = vmatpush1.msra.mxu0 0.0
        %1883 = vmatprep.subr.mxu0 0.0
        %1884 = vmatpush1.msra.mxu0 0.0
        %1885 = vmatprep.subr.mxu0 0.0
        %1886 = vmatpush1.msra.mxu0 0.0
        %1887 = vmatprep.subr.mxu0 0.0
        %1888 = vmatpush1.msra.mxu0 0.0
        %1889 = vmatprep.mubr.f32.mxu0 0.0
        %1890 = vmatmul.mubr.f32.gmra.mrb[0].mxu0 %v1801
        %v1891 = vpop.f32.mrb[0].mxu0
        %v1892 = vadd.f32 %v1823, %v1891
        %v1893 = vpop.f32.mrb[0].mxu0
        %1894 = vdwg.mxu0
        %v1895 = vadd.f32 %v840, %v1892
        %v1896 = vld [vmem:[%s12] sm:$0x1]
        %v1897 = vld [vmem:[%s13] sm:$0x1]
        %v1898 = vsel %vm846, 1, 0
        %vm1899 = vcmp.eq.s32.totalorder %v1898, 1
        %v1900 = vsel %vm1899, %v1895, 0.0
        %1901 = vadd.xlane.f32.xlu0 %v1900
        %v1902 = vpop.xlane.xlu0 %1901
        %v1903 = vmul.f32 %v1902, 0.03125
        %v1904 = vsub.f32 %v1900, %v1903
        %v1905 = vsel %vm1899, %v1904, 0.0
        %v1906 = vmul.f32 %v1905, %v1905
        %1907 = vadd.xlane.f32.xlu0 %v1906
        %v1908 = vpop.xlane.xlu0 %1907
        %v1909 = vmul.f32 %v1908, 0.03125
        %v1910 = vadd.f32 %v1909, 1e-05
        %v1911 = vrsqrt.pop %v1910
        %v1912 = vmul.f32 %v1905, %v1911
        %v1914 = vlaneseq
        %v1915 = vshrl.u32 %v1914, 7
        %v1916 = vsub.s32 0, %v1915
        %v1917 = vrot.slane %v1896, %v1916
        %v1919 = vmul.f32 %v1912, %v1917
        %v1921 = vlaneseq
        %v1922 = vshrl.u32 %v1921, 7
        %v1923 = vsub.s32 0, %v1922
        %v1924 = vrot.slane %v1897, %v1923
        %v1926 = vadd.f32 %v1919, %v1924
        %v1927 = vld [vmem:[#allocation16] sm:$0xff]
        %v1928 = vld [vmem:[#allocation16 + $0x8] sm:$0xff]
        %v1929 = vld [vmem:[#allocation16 + $0x10] sm:$0xff]
        %v1930 = vld [vmem:[#allocation16 + $0x18] sm:$0xff]
        %v1931 = vld [vmem:[#allocation16 + $0x20] sm:$0xff]
        %v1932 = vld [vmem:[#allocation16 + $0x28] sm:$0xff]
        %v1933 = vld [vmem:[#allocation16 + $0x30] sm:$0xff]
        %v1934 = vld [vmem:[#allocation16 + $0x38] sm:$0xff]
        %v1935 = vld [vmem:[#allocation16 + $0x40] sm:$0xff]
        %v1936 = vld [vmem:[#allocation16 + $0x48] sm:$0xff]
        %v1937 = vld [vmem:[#allocation16 + $0x50] sm:$0xff]
        %v1938 = vld [vmem:[#allocation16 + $0x58] sm:$0xff]
        %v1939 = vld [vmem:[#allocation16 + $0x60] sm:$0xff]
        %v1940 = vld [vmem:[#allocation16 + $0x68] sm:$0xff]
        %v1941 = vld [vmem:[#allocation16 + $0x70] sm:$0xff]
        %v1942 = vld [vmem:[#allocation16 + $0x78] sm:$0xff]
        %v1943 = vld [vmem:[%s15] sm:$0x1]
        %v1945 = vlaneseq
        %v1946 = vshrl.u32 %v1945, 7
        %v1947 = vsub.s32 0, %v1946
        %v1948 = vrot.slane %v1943, %v1947
        %1950 = vmatprep.subr.mxu0 0.0
        %1951 = vmatpush1.msra.mxu0 %v1927
        %1952 = vmatprep.subr.mxu0 0.0
        %1953 = vmatpush1.msra.mxu0 %v1928
        %1954 = vmatprep.subr.mxu0 0.0
        %1955 = vmatpush1.msra.mxu0 %v1929
        %1956 = vmatprep.subr.mxu0 0.0
        %1957 = vmatpush1.msra.mxu0 %v1930
        %1958 = vmatprep.subr.mxu0 0.0
        %1959 = vmatpush1.msra.mxu0 %v1931
        %1960 = vmatprep.subr.mxu0 0.0
        %1961 = vmatpush1.msra.mxu0 %v1932
        %1962 = vmatprep.subr.mxu0 0.0
        %1963 = vmatpush1.msra.mxu0 %v1933
        %1964 = vmatprep.subr.mxu0 0.0
        %1965 = vmatpush1.msra.mxu0 %v1934
        %1966 = vmatprep.subr.mxu0 0.0
        %1967 = vmatpush1.msra.mxu0 %v1935
        %1968 = vmatprep.subr.mxu0 0.0
        %1969 = vmatpush1.msra.mxu0 %v1936
        %1970 = vmatprep.subr.mxu0 0.0
        %1971 = vmatpush1.msra.mxu0 %v1937
        %1972 = vmatprep.subr.mxu0 0.0
        %1973 = vmatpush1.msra.mxu0 %v1938
        %1974 = vmatprep.subr.mxu0 0.0
        %1975 = vmatpush1.msra.mxu0 %v1939
        %1976 = vmatprep.subr.mxu0 0.0
        %1977 = vmatpush1.msra.mxu0 %v1940
        %1978 = vmatprep.subr.mxu0 0.0
        %1979 = vmatpush1.msra.mxu0 %v1941
        %1980 = vmatprep.subr.mxu0 0.0
        %1981 = vmatpush1.msra.mxu0 %v1942
        %1982 = vmatprep.subr.mxu0 0.0
        %1983 = vmatpush1.msra.mxu0 0.0
        %1984 = vmatprep.subr.mxu0 0.0
        %1985 = vmatpush1.msra.mxu0 0.0
        %1986 = vmatprep.subr.mxu0 0.0
        %1987 = vmatpush1.msra.mxu0 0.0
        %1988 = vmatprep.subr.mxu0 0.0
        %1989 = vmatpush1.msra.mxu0 0.0
        %1990 = vmatprep.subr.mxu0 0.0
        %1991 = vmatpush1.msra.mxu0 0.0
        %1992 = vmatprep.subr.mxu0 0.0
        %1993 = vmatpush1.msra.mxu0 0.0
        %1994 = vmatprep.subr.mxu0 0.0
        %1995 = vmatpush1.msra.mxu0 0.0
        %1996 = vmatprep.subr.mxu0 0.0
        %1997 = vmatpush1.msra.mxu0 0.0
        %1998 = vmatprep.subr.mxu0 0.0
        %1999 = vmatpush1.msra.mxu0 0.0
        %2000 = vmatprep.subr.mxu0 0.0
        %2001 = vmatpush1.msra.mxu0 0.0
        %2002 = vmatprep.subr.mxu0 0.0
        %2003 = vmatpush1.msra.mxu0 0.0
        %2004 = vmatprep.subr.mxu0 0.0
        %2005 = vmatpush1.msra.mxu0 0.0
        %2006 = vmatprep.subr.mxu0 0.0
        %2007 = vmatpush1.msra.mxu0 0.0
        %2008 = vmatprep.subr.mxu0 0.0
        %2009 = vmatpush1.msra.mxu0 0.0
        %2010 = vmatprep.subr.mxu0 0.0
        %2011 = vmatpush1.msra.mxu0 0.0
        %2012 = vmatprep.subr.mxu0 0.0
        %2013 = vmatpush1.msra.mxu0 0.0
        %2014 = vmatprep.mubr.f32.mxu0 0.0
        %2015 = vmatmul.mubr.f32.gmra.mrb[0].mxu0 %v1926
        %v2016 = vpop.f32.mrb[0].mxu0
        %v2017 = vadd.f32 %v1948, %v2016
        %v2018 = vpop.f32.mrb[0].mxu0
        %2019 = vdwg.mxu0
        %v2020 = vmax.f32 %v2017, 0.0
        %v2021 = vld [vmem:[#allocation17] sm:$0xff]
        %v2022 = vld [vmem:[#allocation17 + $0x8] sm:$0xff]
        %v2023 = vld [vmem:[#allocation17 + $0x10] sm:$0xff]
        %v2024 = vld [vmem:[#allocation17 + $0x18] sm:$0xff]
        %v2025 = vld [vmem:[#allocation17 + $0x20] sm:$0xff]
        %v2026 = vld [vmem:[#allocation17 + $0x28] sm:$0xff]
        %v2027 = vld [vmem:[#allocation17 + $0x30] sm:$0xff]
        %v2028 = vld [vmem:[#allocation17 + $0x38] sm:$0xff]
        %v2029 = vld [vmem:[#allocation17 + $0x40] sm:$0xff]
        %v2030 = vld [vmem:[#allocation17 + $0x48] sm:$0xff]
        %v2031 = vld [vmem:[#allocation17 + $0x50] sm:$0xff]
        %v2032 = vld [vmem:[#allocation17 + $0x58] sm:$0xff]
        %v2033 = vld [vmem:[#allocation17 + $0x60] sm:$0xff]
        %v2034 = vld [vmem:[#allocation17 + $0x68] sm:$0xff]
        %v2035 = vld [vmem:[#allocation17 + $0x70] sm:$0xff]
        %v2036 = vld [vmem:[#allocation17 + $0x78] sm:$0xff]
        %v2037 = vld [vmem:[%s17] sm:$0x1]
        %v2039 = vlaneseq
        %v2040 = vshrl.u32 %v2039, 7
        %v2041 = vsub.s32 0, %v2040
        %v2042 = vrot.slane %v2037, %v2041
        %2044 = vmatprep.subr.mxu0 0.0
        %2045 = vmatpush1.msra.mxu0 %v2021
        %2046 = vmatprep.subr.mxu0 0.0
        %2047 = vmatpush1.msra.mxu0 %v2022
        %2048 = vmatprep.subr.mxu0 0.0
        %2049 = vmatpush1.msra.mxu0 %v2023
        %2050 = vmatprep.subr.mxu0 0.0
        %2051 = vmatpush1.msra.mxu0 %v2024
        %2052 = vmatprep.subr.mxu0 0.0
        %2053 = vmatpush1.msra.mxu0 %v2025
        %2054 = vmatprep.subr.mxu0 0.0
        %2055 = vmatpush1.msra.mxu0 %v2026
        %2056 = vmatprep.subr.mxu0 0.0
        %2057 = vmatpush1.msra.mxu0 %v2027
        %2058 = vmatprep.subr.mxu0 0.0
        %2059 = vmatpush1.msra.mxu0 %v2028
        %2060 = vmatprep.subr.mxu0 0.0
        %2061 = vmatpush1.msra.mxu0 %v2029
        %2062 = vmatprep.subr.mxu0 0.0
        %2063 = vmatpush1.msra.mxu0 %v2030
        %2064 = vmatprep.subr.mxu0 0.0
        %2065 = vmatpush1.msra.mxu0 %v2031
        %2066 = vmatprep.subr.mxu0 0.0
        %2067 = vmatpush1.msra.mxu0 %v2032
        %2068 = vmatprep.subr.mxu0 0.0
        %2069 = vmatpush1.msra.mxu0 %v2033
        %2070 = vmatprep.subr.mxu0 0.0
        %2071 = vmatpush1.msra.mxu0 %v2034
        %2072 = vmatprep.subr.mxu0 0.0
        %2073 = vmatpush1.msra.mxu0 %v2035
        %2074 = vmatprep.subr.mxu0 0.0
        %2075 = vmatpush1.msra.mxu0 %v2036
        %2076 = vmatprep.subr.mxu0 0.0
        %2077 = vmatpush1.msra.mxu0 0.0
        %2078 = vmatprep.subr.mxu0 0.0
        %2079 = vmatpush1.msra.mxu0 0.0
        %2080 = vmatprep.subr.mxu0 0.0
        %2081 = vmatpush1.msra.mxu0 0.0
        %2082 = vmatprep.subr.mxu0 0.0
        %2083 = vmatpush1.msra.mxu0 0.0
        %2084 = vmatprep.subr.mxu0 0.0
        %2085 = vmatpush1.msra.mxu0 0.0
        %2086 = vmatprep.subr.mxu0 0.0
        %2087 = vmatpush1.msra.mxu0 0.0
        %2088 = vmatprep.subr.mxu0 0.0
        %2089 = vmatpush1.msra.mxu0 0.0
        %2090 = vmatprep.subr.mxu0 0.0
        %2091 = vmatpush1.msra.mxu0 0.0
        %2092 = vmatprep.subr.mxu0 0.0
        %2093 = vmatpush1.msra.mxu0 0.0
        %2094 = vmatprep.subr.mxu0 0.0
        %2095 = vmatpush1.msra.mxu0 0.0
        %2096 = vmatprep.subr.mxu0 0.0
        %2097 = vmatpush1.msra.mxu0 0.0
        %2098 = vmatprep.subr.mxu0 0.0
        %2099 = vmatpush1.msra.mxu0 0.0
        %2100 = vmatprep.subr.mxu0 0.0
        %2101 = vmatpush1.msra.mxu0 0.0
        %2102 = vmatprep.subr.mxu0 0.0
        %2103 = vmatpush1.msra.mxu0 0.0
        %2104 = vmatprep.subr.mxu0 0.0
        %2105 = vmatpush1.msra.mxu0 0.0
        %2106 = vmatprep.subr.mxu0 0.0
        %2107 = vmatpush1.msra.mxu0 0.0
        %2108 = vmatprep.mubr.f32.mxu0 0.0
        %2109 = vmatmul.mubr.f32.gmra.mrb[0].mxu0 %v2020
        %v2110 = vpop.f32.mrb[0].mxu0
        %v2111 = vadd.f32 %v2042, %v2110
        %v2112 = vpop.f32.mrb[0].mxu0
        %2113 = vdwg.mxu0
        %v2114 = vadd.f32 %v1926, %v2111
        %v2115 = vld [vmem:[%s18] sm:$0x1]
        %v2116 = vld [vmem:[%s19] sm:$0x1]
        %v2117 = vsel %vm1899, %v2114, 0.0
        %2118 = vadd.xlane.f32.xlu0 %v2117
        %v2119 = vpop.xlane.xlu0 %2118
        %v2120 = vmul.f32 %v2119, 0.03125
        %v2121 = vsub.f32 %v2117, %v2120
        %v2122 = vsel %vm1899, %v2121, 0.0
        %v2123 = vmul.f32 %v2122, %v2122
        %2124 = vadd.xlane.f32.xlu0 %v2123
        %v2125 = vpop.xlane.xlu0 %2124
        %v2126 = vmul.f32 %v2125, 0.03125
        %v2127 = vadd.f32 %v2126, 1e-05
        %v2128 = vrsqrt.pop %v2127
        %v2129 = vmul.f32 %v2122, %v2128
        %v2131 = vlaneseq
        %v2132 = vshrl.u32 %v2131, 7
        %v2133 = vsub.s32 0, %v2132
        %v2134 = vrot.slane %v2115, %v2133
        %v2136 = vmul.f32 %v2129, %v2134
        %v2138 = vlaneseq
        %v2139 = vshrl.u32 %v2138, 7
        %v2140 = vsub.s32 0, %v2139
        %v2141 = vrot.slane %v2116, %v2140
        %v2143 = vadd.f32 %v2136, %v2141
        %2144 = vst [vmem:[%s839] sm:$0xff] %v2143
        %s2145 = sand.u32 %s494, 1
        %s2146 = scalar_lea.sflag [#allocation4], %s2145
        %s2147 = sand.u32 %s494, 1
        %s2148 = smul.addr %s2147, 8
        %s2149 = scalar_lea.vmem [#allocation19], %s2148
        // Predicated region
        $region141: #{tpu_custom_call.1} parent=99 // pred_check
          %p2150 = pneg %p504
        $region142: #{tpu_custom_call.1} parent=99 // pred_check_branch
          %2152 = sbr.rel (%p2150) target = $region144
        $region143: #{tpu_custom_call.1} parent=99 // pred_region
          %s2154 = ssub.s32 128, 128
          %2155 = vsyncadd %s2146, %s2154
          %s2156 = smul.addr %s46, 128
          %s2157 = scalar_lea.hbm %s20, %s2156
          %s2159 = sshll.u32 %s2149, 4
          %s2160 = int_to_ptr.vmem [resolvable:$true] %s2159
          %2162 = dma.vmem_to_hbm [thread:$0]  %s2160, 128, %s2157, %s2146
        $region144: #{tpu_custom_call.1} parent=99 // pred_fallthru
          _
      $region100: #{tpu_custom_call.1} parent=5 // pred_fallthru
        _
      %p2163 = scmp.le.s32.totalorder 2, %s41
      // Predicated region
      $region145: #{tpu_custom_call.1} parent=5 // pred_check
        %p2164 = pneg %p2163
      $region146: #{tpu_custom_call.1} parent=5 // pred_check_branch
        %2166 = sbr.rel (%p2164) target = $region148
      $region147: #{tpu_custom_call.1} parent=5 // pred_region
        %s2167 = ssub.s32 %s41, 2
        // Predicated region
        $region149: #{tpu_custom_call.1} parent=147 // pred_check
          %p2168 = pneg %p510
        $region150: #{tpu_custom_call.1} parent=147 // pred_check_branch
          %2170 = sbr.rel (%p2168) target = $region152
        $region151: #{tpu_custom_call.1} parent=147 // pred_region
          %s2171 = sand.u32 %s495, 1
          %s2172 = scalar_lea.sflag [#allocation4], %s2171
          %s2173 = sand.u32 %s495, 1
          %s2174 = smul.addr %s2173, 8
          %s2175 = scalar_lea.vmem [#allocation19], %s2174
          %2176 = dma.done %s2172, 128
        $region152: #{tpu_custom_call.1} parent=147 // pred_fallthru
          _
      $region148: #{tpu_custom_call.1} parent=5 // pred_fallthru
        _
    $region6: #{tpu_custom_call.1} parent=1 // loop_footer
      %s45 = sadd.s32 1, %s41
    $region7: #{tpu_custom_call.1} parent=1 // loop_footer_branch
      %40 = sbr.rel target = $region3
    $region8: #{tpu_custom_call.1} parent=1 // loop_exit
      _
    %2177 = vsyncpa [#allocation3], 1
    %s2178 = scalar_lea.sflag [#allocation3], 1
    %2179 = vsyncpa %s2178, 1
    %2180 = vsyncpa [#allocation6], 1
    %s2181 = scalar_lea.sflag [#allocation6], 1
    %2182 = vsyncpa %s2181, 1
    %2183 = vsyncpa [#allocation9], 1
    %s2184 = scalar_lea.sflag [#allocation9], 1
    %2185 = vsyncpa %s2184, 1
    %2186 = vsyncpa [#allocation12], 1
    %2187 = vsyncpa [#allocation15], 1
    %2188 = vsyncpa [#allocation18], 1
    %2189 = vsyncpa [#allocation4], 1
    %s2190 = scalar_lea.sflag [#allocation4], 1
    %2191 = vsyncpa %s2190, 1

// kernel: tpu_custom_call.1
$region0: #{tpu_custom_call.1}
  #allocation0 [shape = 'u32[]', space=smem, size = 0x4, offset = 0x4, fixed_abs, tag = 'smem constant byte address 0x4 - core index']
  #allocation1 [shape = 'u32[144,128]{1,0:T(1,128)}', space=vmem, size = 0x12000, scoped, tag = 'internal scratch']
  %s0 = inlined_call_operand.hbm [shape: f32[16,128], index: 0, kind: input, shape index: {}]
  %s1 = inlined_call_operand.hbm [shape: f32[16,128], index: 1, kind: input, shape index: {}]
  %s2 = inlined_call_operand.hbm [shape: f32[16,128], index: 2, kind: input, shape index: {}]
  %s3 = inlined_call_operand.hbm [shape: f32[16,128], index: 3, kind: input, shape index: {}]
  %s4 = inlined_call_operand.hbm [shape: f32[128,128], index: 4, kind: input, shape index: {}]
  %s5 = inlined_call_operand.vmem [shape: f32[1,128], index: 5, kind: input, shape index: {}]
  %s6 = inlined_call_operand.hbm [shape: f32[128,128], index: 6, kind: input, shape index: {}]
  %s7 = inlined_call_operand.vmem [shape: f32[1,128], index: 7, kind: input, shape index: {}]
  %s8 = inlined_call_operand.hbm [shape: f32[128,128], index: 8, kind: input, shape index: {}]
  %s9 = inlined_call_operand.vmem [shape: f32[1,128], index: 9, kind: input, shape index: {}]
  %s10 = inlined_call_operand.hbm [shape: f32[128,128], index: 10, kind: input, shape index: {}]
  %s11 = inlined_call_operand.vmem [shape: f32[1,128], index: 11, kind: input, shape index: {}]
  %s12 = inlined_call_operand.vmem [shape: f32[1,128], index: 12, kind: input, shape index: {}]
  %s13 = inlined_call_operand.vmem [shape: f32[1,128], index: 13, kind: input, shape index: {}]
  %s14 = inlined_call_operand.hbm [shape: f32[128,128], index: 14, kind: input, shape index: {}]
  %s15 = inlined_call_operand.vmem [shape: f32[1,128], index: 15, kind: input, shape index: {}]
  %s16 = inlined_call_operand.hbm [shape: f32[128,128], index: 16, kind: input, shape index: {}]
  %s17 = inlined_call_operand.vmem [shape: f32[1,128], index: 17, kind: input, shape index: {}]
  %s18 = inlined_call_operand.vmem [shape: f32[1,128], index: 18, kind: input, shape index: {}]
  %s19 = inlined_call_operand.vmem [shape: f32[1,128], index: 19, kind: input, shape index: {}]
  %s20 = inlined_call_operand.hbm [shape: f32[16,128], index: 20, kind: output, shape index: {}]
  %s21 = sld [smem:[#allocation0]]
  $region153: #{tpu_custom_call.1} parent=0
    _
  %s23 = ssub.s32 1, %s21
  %s24 = scalar_select 0, %s23, %s21
  $region1: #{tpu_custom_call.1} parent=0
    #allocation2 [shape = 'u8[8192]{0}', space=vmem, size = 0x2000, scoped, tag = 'input window, operand 0']
    #allocation3 [shape = 's32[2]{0}', space=sflag, size = 0x8, scoped, tag = 'scoped memory for tpu_custom_call.1']
    #allocation4 [shape = 's32[2]{0}', space=sflag, size = 0x8, scoped, tag = 'scoped memory for tpu_custom_call.1']
    #allocation5 [shape = 'u8[8192]{0}', space=vmem, size = 0x2000, scoped, tag = 'input window, operand 1']
    #allocation6 [shape = 's32[2]{0}', space=sflag, size = 0x8, scoped, tag = 'scoped memory for tpu_custom_call.1']
    #allocation7 [shape = 'u8[8192]{0}', space=vmem, size = 0x2000, scoped, tag = 'input window, operand 2']
    #allocation8 [shape = 'u8[8192]{0}', space=vmem, size = 0x2000, scoped, tag = 'input window, operand 3']
    #allocation9 [shape = 's32[2]{0}', space=sflag, size = 0x8, scoped, tag = 'scoped memory for tpu_custom_call.1']
    #allocation10 [shape = 'u8[65536]{0}', space=vmem, size = 0x10000, scoped, tag = 'input window, operand 4, single buffered']
    #allocation11 [shape = 'u8[65536]{0}', space=vmem, size = 0x10000, scoped, tag = 'input window, operand 6, single buffered']
    #allocation12 [shape = 's32[1]{0}', space=sflag, size = 0x4, scoped, tag = 'scoped memory for tpu_custom_call.1']
    #allocation13 [shape = 'u8[65536]{0}', space=vmem, size = 0x10000, scoped, tag = 'input window, operand 8, single buffered']
    #allocation14 [shape = 'u8[65536]{0}', space=vmem, size = 0x10000, scoped, tag = 'input window, operand 10, single buffered']
    #allocation15 [shape = 's32[1]{0}', space=sflag, size = 0x4, scoped, tag = 'scoped memory for tpu_custom_call.1']
    #allocation16 [shape = 'u8[65536]{0}', space=vmem, size = 0x10000, scoped, tag = 'input window, operand 14, single buffered']
    #allocation17 [shape = 'u8[65536]{0}', space=vmem, size = 0x10000, scoped, tag = 'input window, operand 16, single buffered']
    #allocation18 [shape = 's32[1]{0}', space=sflag, size = 0x4, scoped, tag = 'scoped memory for tpu_custom_call.1']
    #allocation19 [shape = 'u8[8192]{0}', space=vmem, size = 0x2000, scoped, tag = 'output window, operand 0']
    %25 = vsyncpa [#allocation3], 0
    %s26 = scalar_lea.sflag [#allocation3], 1
    %27 = vsyncpa %s26, 0
    %28 = vsyncpa [#allocation6], 0
    %s29 = scalar_lea.sflag [#allocation6], 1
    %30 = vsyncpa %s29, 0
    %31 = vsyncpa [#allocation9], 0
    %s32 = scalar_lea.sflag [#allocation9], 1
    %33 = vsyncpa %s32, 0
    %34 = vsyncpa [#allocation12], 0
    %35 = vsyncpa [#allocation15], 0
    %36 = vsyncpa [#allocation18], 0
    %37 = vsyncpa [#allocation4], 0
    %s38 = scalar_lea.sflag [#allocation4], 1
    %39 = vsyncpa %s38, 0
    loop: start=0, step=1, limit=4
    $region2: #{tpu_custom_call.1} parent=1 // loop_pre_header
      _
    $region3: #{tpu_custom_call.1} parent=1 // loop_header
      %s41 = sphi 0, %s45
      %p42 = scmp.ge.s32.totalorder %s41, 4
      %s51 = sphi 0, %s53
      %s54 = sphi 0, %s51
      %s55 = sphi 0, %s54
      %s71 = sphi 0, %s55
      %s77 = sphi 0, %s79
      %s80 = sphi 0, %s77
      %s81 = sphi 0, %s80
      %s97 = sphi 0, %s81
      %s103 = sphi 0, %s105
      %s106 = sphi 0, %s103
      %s107 = sphi 0, %s106
      %s123 = sphi 0, %s107
      %s129 = sphi 0, %s131
      %s132 = sphi 0, %s129
      %s133 = sphi 0, %s132
      %s149 = sphi 0, %s133
      %s153 = sphi 0, %s153
      %s155 = sphi 0, %s153
      %s156 = sphi 0, %s155
      %s170 = sphi 0, %s156
      %s174 = sphi 0, %s174
      %s176 = sphi 0, %s174
      %s177 = sphi 0, %s176
      %s191 = sphi 0, %s177
      %s195 = sphi 0, %s195
      %s197 = sphi 0, %s195
      %s198 = sphi 0, %s197
      %s212 = sphi 0, %s198
      %s216 = sphi 0, %s216
      %s218 = sphi 0, %s216
      %s219 = sphi 0, %s218
      %s233 = sphi 0, %s219
      %s237 = sphi 0, %s237
      %s239 = sphi 0, %s237
      %s240 = sphi 0, %s239
      %s254 = sphi 0, %s240
      %s258 = sphi 0, %s258
      %s260 = sphi 0, %s258
      %s261 = sphi 0, %s260
      %s275 = sphi 0, %s261
      %s279 = sphi 0, %s279
      %s281 = sphi 0, %s279
      %s282 = sphi 0, %s281
      %s296 = sphi 0, %s282
      %s300 = sphi 0, %s300
      %s302 = sphi 0, %s300
      %s303 = sphi 0, %s302
      %s317 = sphi 0, %s303
      %s321 = sphi 0, %s321
      %s323 = sphi 0, %s321
      %s324 = sphi 0, %s323
      %s338 = sphi 0, %s324
      %s342 = sphi 0, %s342
      %s344 = sphi 0, %s342
      %s345 = sphi 0, %s344
      %s359 = sphi 0, %s345
      %s363 = sphi 0, %s363
      %s365 = sphi 0, %s363
      %s366 = sphi 0, %s365
      %s380 = sphi 0, %s366
      %s384 = sphi 0, %s384
      %s386 = sphi 0, %s384
      %s387 = sphi 0, %s386
      %s401 = sphi 0, %s387
      %s405 = sphi 0, %s405
      %s407 = sphi 0, %s405
      %s408 = sphi 0, %s407
      %s422 = sphi 0, %s408
      %s426 = sphi 0, %s426
      %s428 = sphi 0, %s426
      %s429 = sphi 0, %s428
      %s443 = sphi 0, %s429
      %s447 = sphi 0, %s447
      %s449 = sphi 0, %s447
      %s450 = sphi 0, %s449
      %s464 = sphi 0, %s450
      %s468 = sphi 0, %s468
      %s470 = sphi 0, %s468
      %s471 = sphi 0, %s470
      %s485 = sphi 0, %s471
      %s491 = sphi 0, %s493
      %s494 = sphi 0, %s491
      %s495 = sphi 0, %s494
      %s511 = sphi 0, %s495
    $region4: #{tpu_custom_call.1} parent=1 // loop_header_branch
      %44 = sbr.rel (%p42) target = $region8
    $region5: #{tpu_custom_call.1} parent=1 // loop_body
      %s46 = ssub.s32 %s41, 1
      %s47 = ssub.s32 %s41, 2
      %s48 = sadd.s32 %s41, 1
      %s49 = ssub.s32 %s41, %s48
      %p50 = scmp.eq.s32.totalorder %s49, 0
      %s52 = sadd.s32 %s51, 1
      %s53 = scalar_select %p50, %s51, %s52
      %p56 = pneg %p50
      %p57 = scmp.eq.s32.totalorder %s41, 1
      %p58 = por %p56, %p57
      %p59 = scmp.ne.s32.totalorder %s51, %s54
      %p60 = scmp.eq.s32.totalorder %s41, 0
      %p61 = por %p59, %p60
      %p62 = scmp.ne.s32.totalorder %s51, %s54
      %p63 = scmp.eq.s32.totalorder %s46, 1
      %p64 = por %p62, %p63
      %p65 = scmp.ne.s32.totalorder %s54, %s55
      %p66 = scmp.eq.s32.totalorder %s46, 0
      %p67 = por %p65, %p66
      %p68 = scmp.ne.s32.totalorder %s54, %s55
      %p69 = scmp.eq.s32.totalorder %s47, 1
      %p70 = por %p68, %p69
      %p72 = scmp.ne.s32.totalorder %s55, %s71
      %p73 = scmp.eq.s32.totalorder %s47, 0
      %p74 = por %p72, %p73
      %s75 = ssub.s32 %s41, %s48
      %p76 = scmp.eq.s32.totalorder %s75, 0
      %s78 = sadd.s32 %s77, 1
      %s79 = scalar_select %p76, %s77, %s78
      %p82 = pneg %p76
      %p83 = scmp.eq.s32.totalorder %s41, 1
      %p84 = por %p82, %p83
      %p85 = scmp.ne.s32.totalorder %s77, %s80
      %p86 = scmp.eq.s32.totalorder %s41, 0
      %p87 = por %p85, %p86
      %p88 = scmp.ne.s32.totalorder %s77, %s80
      %p89 = scmp.eq.s32.totalorder %s46, 1
      %p90 = por %p88, %p89
      %p91 = scmp.ne.s32.totalorder %s80, %s81
      %p92 = scmp.eq.s32.totalorder %s46, 0
      %p93 = por %p91, %p92
      %p94 = scmp.ne.s32.totalorder %s80, %s81
      %p95 = scmp.eq.s32.totalorder %s47, 1
      %p96 = por %p94, %p95
      %p98 = scmp.ne.s32.totalorder %s81, %s97
      %p99 = scmp.eq.s32.totalorder %s47, 0
      %p100 = por %p98, %p99
      %s101 = ssub.s32 %s41, %s48
      %p102 = scmp.eq.s32.totalorder %s101, 0
      %s104 = sadd.s32 %s103, 1
      %s105 = scalar_select %p102, %s103, %s104
      %p108 = pneg %p102
      %p109 = scmp.eq.s32.totalorder %s41, 1
      %p110 = por %p108, %p109
      %p111 = scmp.ne.s32.totalorder %s103, %s106
      %p112 = scmp.eq.s32.totalorder %s41, 0
      %p113 = por %p111, %p112
      %p114 = scmp.ne.s32.totalorder %s103, %s106
      %p115 = scmp.eq.s32.totalorder %s46, 1
      %p116 = por %p114, %p115
      %p117 = scmp.ne.s32.totalorder %s106, %s107
      %p118 = scmp.eq.s32.totalorder %s46, 0
      %p119 = por %p117, %p118
      %p120 = scmp.ne.s32.totalorder %s106, %s107
      %p121 = scmp.eq.s32.totalorder %s47, 1
      %p122 = por %p120, %p121
      %p124 = scmp.ne.s32.totalorder %s107, %s123
      %p125 = scmp.eq.s32.totalorder %s47, 0
      %p126 = por %p124, %p125
      %s127 = ssub.s32 %s41, %s48
      %p128 = scmp.eq.s32.totalorder %s127, 0
      %s130 = sadd.s32 %s129, 1
      %s131 = scalar_select %p128, %s129, %s130
      %p134 = pneg %p128
      %p135 = scmp.eq.s32.totalorder %s41, 1
      %p136 = por %p134, %p135
      %p137 = scmp.ne.s32.totalorder %s129, %s132
      %p138 = scmp.eq.s32.totalorder %s41, 0
      %p139 = por %p137, %p138
      %p140 = scmp.ne.s32.totalorder %s129, %s132
      %p141 = scmp.eq.s32.totalorder %s46, 1
      %p142 = por %p140, %p141
      %p143 = scmp.ne.s32.totalorder %s132, %s133
      %p144 = scmp.eq.s32.totalorder %s46, 0
      %p145 = por %p143, %p144
      %p146 = scmp.ne.s32.totalorder %s132, %s133
      %p147 = scmp.eq.s32.totalorder %s47, 1
      %p148 = por %p146, %p147
      %p150 = scmp.ne.s32.totalorder %s133, %s149
      %p151 = scmp.eq.s32.totalorder %s47, 0
      %p152 = por %p150, %p151
      %s154 = sadd.s32 %s153, 1
      %p157 = scmp.eq.s32.totalorder %s41, 1
      %p158 = scmp.ne.s32.totalorder %s153, %s155
      %p159 = scmp.eq.s32.totalorder %s41, 0
      %p160 = por %p158, %p159
      %p161 = scmp.ne.s32.totalorder %s153, %s155
      %p162 = scmp.eq.s32.totalorder %s46, 1
      %p163 = por %p161, %p162
      %p164 = scmp.ne.s32.totalorder %s155, %s156
      %p165 = scmp.eq.s32.totalorder %s46, 0
      %p166 = por %p164, %p165
      %p167 = scmp.ne.s32.totalorder %s155, %s156
      %p168 = scmp.eq.s32.totalorder %s47, 1
      %p169 = por %p167, %p168
      %p171 = scmp.ne.s32.totalorder %s156, %s170
      %p172 = scmp.eq.s32.totalorder %s47, 0
      %p173 = por %p171, %p172
      %s175 = sadd.s32 %s174, 1
      %p178 = scmp.eq.s32.totalorder %s41, 1
      %p179 = scmp.ne.s32.totalorder %s174, %s176
      %p180 = scmp.eq.s32.totalorder %s41, 0
      %p181 = por %p179, %p180
      %p182 = scmp.ne.s32.totalorder %s174, %s176
      %p183 = scmp.eq.s32.totalorder %s46, 1
      %p184 = por %p182, %p183
      %p185 = scmp.ne.s32.totalorder %s176, %s177
      %p186 = scmp.eq.s32.totalorder %s46, 0
      %p187 = por %p185, %p186
      %p188 = scmp.ne.s32.totalorder %s176, %s177
      %p189 = scmp.eq.s32.totalorder %s47, 1
      %p190 = por %p188, %p189
      %p192 = scmp.ne.s32.totalorder %s177, %s191
      %p193 = scmp.eq.s32.totalorder %s47, 0
      %p194 = por %p192, %p193
      %s196 = sadd.s32 %s195, 1
      %p199 = scmp.eq.s32.totalorder %s41, 1
      %p200 = scmp.ne.s32.totalorder %s195, %s197
      %p201 = scmp.eq.s32.totalorder %s41, 0
      %p202 = por %p200, %p201
      %p203 = scmp.ne.s32.totalorder %s195, %s197
      %p204 = scmp.eq.s32.totalorder %s46, 1
      %p205 = por %p203, %p204
      %p206 = scmp.ne.s32.totalorder %s197, %s198
      %p207 = scmp.eq.s32.totalorder %s46, 0
      %p208 = por %p206, %p207
      %p209 = scmp.ne.s32.totalorder %s197, %s198
      %p210 = scmp.eq.s32.totalorder %s47, 1
      %p211 = por %p209, %p210
      %p213 = scmp.ne.s32.totalorder %s198, %s212
      %p214 = scmp.eq.s32.totalorder %s47, 0
      %p215 = por %p213, %p214
      %s217 = sadd.s32 %s216, 1
      %p220 = scmp.eq.s32.totalorder %s41, 1
      %p221 = scmp.ne.s32.totalorder %s216, %s218
      %p222 = scmp.eq.s32.totalorder %s41, 0
      %p223 = por %p221, %p222
      %p224 = scmp.ne.s32.totalorder %s216, %s218
      %p225 = scmp.eq.s32.totalorder %s46, 1
      %p226 = por %p224, %p225
      %p227 = scmp.ne.s32.totalorder %s218, %s219
      %p228 = scmp.eq.s32.totalorder %s46, 0
      %p229 = por %p227, %p228
      %p230 = scmp.ne.s32.totalorder %s218, %s219
      %p231 = scmp.eq.s32.totalorder %s47, 1
      %p232 = por %p230, %p231
      %p234 = scmp.ne.s32.totalorder %s219, %s233
      %p235 = scmp.eq.s32.totalorder %s47, 0
      %p236 = por %p234, %p235
      %s238 = sadd.s32 %s237, 1
      %p241 = scmp.eq.s32.totalorder %s41, 1
      %p242 = scmp.ne.s32.totalorder %s237, %s239
      %p243 = scmp.eq.s32.totalorder %s41, 0
      %p244 = por %p242, %p243
      %p245 = scmp.ne.s32.totalorder %s237, %s239
      %p246 = scmp.eq.s32.totalorder %s46, 1
      %p247 = por %p245, %p246
      %p248 = scmp.ne.s32.totalorder %s239, %s240
      %p249 = scmp.eq.s32.totalorder %s46, 0
      %p250 = por %p248, %p249
      %p251 = scmp.ne.s32.totalorder %s239, %s240
      %p252 = scmp.eq.s32.totalorder %s47, 1
      %p253 = por %p251, %p252
      %p255 = scmp.ne.s32.totalorder %s240, %s254
      %p256 = scmp.eq.s32.totalorder %s47, 0
      %p257 = por %p255, %p256
      %s259 = sadd.s32 %s258, 1
      %p262 = scmp.eq.s32.totalorder %s41, 1
      %p263 = scmp.ne.s32.totalorder %s258, %s260
      %p264 = scmp.eq.s32.totalorder %s41, 0
      %p265 = por %p263, %p264
      %p266 = scmp.ne.s32.totalorder %s258, %s260
      %p267 = scmp.eq.s32.totalorder %s46, 1
      %p268 = por %p266, %p267
      %p269 = scmp.ne.s32.totalorder %s260, %s261
      %p270 = scmp.eq.s32.totalorder %s46, 0
      %p271 = por %p269, %p270
      %p272 = scmp.ne.s32.totalorder %s260, %s261
      %p273 = scmp.eq.s32.totalorder %s47, 1
      %p274 = por %p272, %p273
      %p276 = scmp.ne.s32.totalorder %s261, %s275
      %p277 = scmp.eq.s32.totalorder %s47, 0
      %p278 = por %p276, %p277
      %s280 = sadd.s32 %s279, 1
      %p283 = scmp.eq.s32.totalorder %s41, 1
      %p284 = scmp.ne.s32.totalorder %s279, %s281
      %p285 = scmp.eq.s32.totalorder %s41, 0
      %p286 = por %p284, %p285
      %p287 = scmp.ne.s32.totalorder %s279, %s281
      %p288 = scmp.eq.s32.totalorder %s46, 1
      %p289 = por %p287, %p288
      %p290 = scmp.ne.s32.totalorder %s281, %s282
      %p291 = scmp.eq.s32.totalorder %s46, 0
      %p292 = por %p290, %p291
      %p293 = scmp.ne.s32.totalorder %s281, %s282
      %p294 = scmp.eq.s32.totalorder %s47, 1
      %p295 = por %p293, %p294
      %p297 = scmp.ne.s32.totalorder %s282, %s296
      %p298 = scmp.eq.s32.totalorder %s47, 0
      %p299 = por %p297, %p298
      %s301 = sadd.s32 %s300, 1
      %p304 = scmp.eq.s32.totalorder %s41, 1
      %p305 = scmp.ne.s32.totalorder %s300, %s302
      %p306 = scmp.eq.s32.totalorder %s41, 0
      %p307 = por %p305, %p306
      %p308 = scmp.ne.s32.totalorder %s300, %s302
      %p309 = scmp.eq.s32.totalorder %s46, 1
      %p310 = por %p308, %p309
      %p311 = scmp.ne.s32.totalorder %s302, %s303
      %p312 = scmp.eq.s32.totalorder %s46, 0
      %p313 = por %p311, %p312
      %p314 = scmp.ne.s32.totalorder %s302, %s303
      %p315 = scmp.eq.s32.totalorder %s47, 1
      %p316 = por %p314, %p315
      %p318 = scmp.ne.s32.totalorder %s303, %s317
      %p319 = scmp.eq.s32.totalorder %s47, 0
      %p320 = por %p318, %p319
      %s322 = sadd.s32 %s321, 1
      %p325 = scmp.eq.s32.totalorder %s41, 1
      %p326 = scmp.ne.s32.totalorder %s321, %s323
      %p327 = scmp.eq.s32.totalorder %s41, 0
      %p328 = por %p326, %p327
      %p329 = scmp.ne.s32.totalorder %s321, %s323
      %p330 = scmp.eq.s32.totalorder %s46, 1
      %p331 = por %p329, %p330
      %p332 = scmp.ne.s32.totalorder %s323, %s324
      %p333 = scmp.eq.s32.totalorder %s46, 0
      %p334 = por %p332, %p333
      %p335 = scmp.ne.s32.totalorder %s323, %s324
      %p336 = scmp.eq.s32.totalorder %s47, 1
      %p337 = por %p335, %p336
      %p339 = scmp.ne.s32.totalorder %s324, %s338
      %p340 = scmp.eq.s32.totalorder %s47, 0
      %p341 = por %p339, %p340
      %s343 = sadd.s32 %s342, 1
      %p346 = scmp.eq.s32.totalorder %s41, 1
      %p347 = scmp.ne.s32.totalorder %s342, %s344
      %p348 = scmp.eq.s32.totalorder %s41, 0
      %p349 = por %p347, %p348
      %p350 = scmp.ne.s32.totalorder %s342, %s344
      %p351 = scmp.eq.s32.totalorder %s46, 1
      %p352 = por %p350, %p351
      %p353 = scmp.ne.s32.totalorder %s344, %s345
      %p354 = scmp.eq.s32.totalorder %s46, 0
      %p355 = por %p353, %p354
      %p356 = scmp.ne.s32.totalorder %s344, %s345
      %p357 = scmp.eq.s32.totalorder %s47, 1
      %p358 = por %p356, %p357
      %p360 = scmp.ne.s32.totalorder %s345, %s359
      %p361 = scmp.eq.s32.totalorder %s47, 0
      %p362 = por %p360, %p361
      %s364 = sadd.s32 %s363, 1
      %p367 = scmp.eq.s32.totalorder %s41, 1
      %p368 = scmp.ne.s32.totalorder %s363, %s365
      %p369 = scmp.eq.s32.totalorder %s41, 0
      %p370 = por %p368, %p369
      %p371 = scmp.ne.s32.totalorder %s363, %s365
      %p372 = scmp.eq.s32.totalorder %s46, 1
      %p373 = por %p371, %p372
      %p374 = scmp.ne.s32.totalorder %s365, %s366
      %p375 = scmp.eq.s32.totalorder %s46, 0
      %p376 = por %p374, %p375
      %p377 = scmp.ne.s32.totalorder %s365, %s366
      %p378 = scmp.eq.s32.totalorder %s47, 1
      %p379 = por %p377, %p378
      %p381 = scmp.ne.s32.totalorder %s366, %s380
      %p382 = scmp.eq.s32.totalorder %s47, 0
      %p383 = por %p381, %p382
      %s385 = sadd.s32 %s384, 1
      %p388 = scmp.eq.s32.totalorder %s41, 1
      %p389 = scmp.ne.s32.totalorder %s384, %s386
      %p390 = scmp.eq.s32.totalorder %s41, 0
      %p391 = por %p389, %p390
      %p392 = scmp.ne.s32.totalorder %s384, %s386
      %p393 = scmp.eq.s32.totalorder %s46, 1
      %p394 = por %p392, %p393
      %p395 = scmp.ne.s32.totalorder %s386, %s387
      %p396 = scmp.eq.s32.totalorder %s46, 0
      %p397 = por %p395, %p396
      %p398 = scmp.ne.s32.totalorder %s386, %s387
      %p399 = scmp.eq.s32.totalorder %s47, 1
      %p400 = por %p398, %p399
      %p402 = scmp.ne.s32.totalorder %s387, %s401
      %p403 = scmp.eq.s32.totalorder %s47, 0
      %p404 = por %p402, %p403
      %s406 = sadd.s32 %s405, 1
      %p409 = scmp.eq.s32.totalorder %s41, 1
      %p410 = scmp.ne.s32.totalorder %s405, %s407
      %p411 = scmp.eq.s32.totalorder %s41, 0
      %p412 = por %p410, %p411
      %p413 = scmp.ne.s32.totalorder %s405, %s407
      %p414 = scmp.eq.s32.totalorder %s46, 1
      %p415 = por %p413, %p414
      %p416 = scmp.ne.s32.totalorder %s407, %s408
      %p417 = scmp.eq.s32.totalorder %s46, 0
      %p418 = por %p416, %p417
      %p419 = scmp.ne.s32.totalorder %s407, %s408
      %p420 = scmp.eq.s32.totalorder %s47, 1
      %p421 = por %p419, %p420
      %p423 = scmp.ne.s32.totalorder %s408, %s422
      %p424 = scmp.eq.s32.totalorder %s47, 0
      %p425 = por %p423, %p424
      %s427 = sadd.s32 %s426, 1
      %p430 = scmp.eq.s32.totalorder %s41, 1
      %p431 = scmp.ne.s32.totalorder %s426, %s428
      %p432 = scmp.eq.s32.totalorder %s41, 0
      %p433 = por %p431, %p432
      %p434 = scmp.ne.s32.totalorder %s426, %s428
      %p435 = scmp.eq.s32.totalorder %s46, 1
      %p436 = por %p434, %p435
      %p437 = scmp.ne.s32.totalorder %s428, %s429
      %p438 = scmp.eq.s32.totalorder %s46, 0
      %p439 = por %p437, %p438
      %p440 = scmp.ne.s32.totalorder %s428, %s429
      %p441 = scmp.eq.s32.totalorder %s47, 1
      %p442 = por %p440, %p441
      %p444 = scmp.ne.s32.totalorder %s429, %s443
      %p445 = scmp.eq.s32.totalorder %s47, 0
      %p446 = por %p444, %p445
      %s448 = sadd.s32 %s447, 1
      %p451 = scmp.eq.s32.totalorder %s41, 1
      %p452 = scmp.ne.s32.totalorder %s447, %s449
      %p453 = scmp.eq.s32.totalorder %s41, 0
      %p454 = por %p452, %p453
      %p455 = scmp.ne.s32.totalorder %s447, %s449
      %p456 = scmp.eq.s32.totalorder %s46, 1
      %p457 = por %p455, %p456
      %p458 = scmp.ne.s32.totalorder %s449, %s450
      %p459 = scmp.eq.s32.totalorder %s46, 0
      %p460 = por %p458, %p459
      %p461 = scmp.ne.s32.totalorder %s449, %s450
      %p462 = scmp.eq.s32.totalorder %s47, 1
      %p463 = por %p461, %p462
      %p465 = scmp.ne.s32.totalorder %s450, %s464
      %p466 = scmp.eq.s32.totalorder %s47, 0
      %p467 = por %p465, %p466
      %s469 = sadd.s32 %s468, 1
      %p472 = scmp.eq.s32.totalorder %s41, 1
      %p473 = scmp.ne.s32.totalorder %s468, %s470
      %p474 = scmp.eq.s32.totalorder %s41, 0
      %p475 = por %p473, %p474
      %p476 = scmp.ne.s32.totalorder %s468, %s470
      %p477 = scmp.eq.s32.totalorder %s46, 1
      %p478 = por %p476, %p477
      %p479 = scmp.ne.s32.totalorder %s470, %s471
      %p480 = scmp.eq.s32.totalorder %s46, 0
      %p481 = por %p479, %p480
      %p482 = scmp.ne.s32.totalorder %s470, %s471
      %p483 = scmp.eq.s32.totalorder %s47, 1
      %p484 = por %p482, %p483
      %p486 = scmp.ne.s32.totalorder %s471, %s485
      %p487 = scmp.eq.s32.totalorder %s47, 0
      %p488 = por %p486, %p487
      %s489 = ssub.s32 %s41, %s48
      %p490 = scmp.eq.s32.totalorder %s489, 0
      %s492 = sadd.s32 %s491, 1
      %s493 = scalar_select %p490, %s491, %s492
      %p496 = pneg %p490
      %p497 = scmp.eq.s32.totalorder %s41, 1
      %p498 = por %p496, %p497
      %p499 = scmp.ne.s32.totalorder %s491, %s494
      %p500 = scmp.eq.s32.totalorder %s41, 0
      %p501 = por %p499, %p500
      %p502 = scmp.ne.s32.totalorder %s491, %s494
      %p503 = scmp.eq.s32.totalorder %s46, 1
      %p504 = por %p502, %p503
      %p505 = scmp.ne.s32.totalorder %s494, %s495
      %p506 = scmp.eq.s32.totalorder %s46, 0
      %p507 = por %p505, %p506
      %p508 = scmp.ne.s32.totalorder %s494, %s495
      %p509 = scmp.eq.s32.totalorder %s47, 1
      %p510 = por %p508, %p509
      %p512 = scmp.ne.s32.totalorder %s495, %s511
      %p513 = scmp.eq.s32.totalorder %s47, 0
      %p514 = por %p512, %p513
      %p515 = scmp.le.s32.totalorder 1, %s41
      %p516 = scmp.lt.s32.totalorder %s41, 3
      %p517 = pnand %p515, %p516
      %p518 = pneg %p517
      // Predicated region
      $region9: #{tpu_custom_call.1} parent=5 // pred_check
        _
      $region10: #{tpu_custom_call.1} parent=5 // pred_check_branch
        %520 = sbr.rel (%p517) target = $region12
      $region11: #{tpu_custom_call.1} parent=5 // pred_region
        %s521 = ssub.s32 %s41, 1
        // Predicated region
        $region13: #{tpu_custom_call.1} parent=11 // pred_check
          %p522 = pneg %p166
        $region14: #{tpu_custom_call.1} parent=11 // pred_check_branch
          %524 = sbr.rel (%p522) target = $region16
        $region15: #{tpu_custom_call.1} parent=11 // pred_region
          %s526 = ssub.s32 2048, 2048
          %527 = vsyncadd [#allocation9], %s526
          %s528 = sshll.u32 [#allocation10], 4
          %s529 = int_to_ptr.vmem [resolvable:$true] %s528
          %534 = dma.hbm_to_vmem [thread:$0]  %s4, 2048, %s529, [#allocation9], 128, 128, 8
        $region16: #{tpu_custom_call.1} parent=11 // pred_fallthru
          _
        // Predicated region
        $region17: #{tpu_custom_call.1} parent=11 // pred_check
          %p535 = pneg %p187
        $region18: #{tpu_custom_call.1} parent=11 // pred_check_branch
          %537 = sbr.rel (%p535) target = $region20
        $region19: #{tpu_custom_call.1} parent=11 // pred_region
          _
        $region20: #{tpu_custom_call.1} parent=11 // pred_fallthru
          _
        // Predicated region
        $region21: #{tpu_custom_call.1} parent=11 // pred_check
          %p538 = pneg %p208
        $region22: #{tpu_custom_call.1} parent=11 // pred_check_branch
          %540 = sbr.rel (%p538) target = $region24
        $region23: #{tpu_custom_call.1} parent=11 // pred_region
          %s542 = ssub.s32 2048, 2048
          %543 = vsyncadd [#allocation12], %s542
          %s544 = sshll.u32 [#allocation11], 4
          %s545 = int_to_ptr.vmem [resolvable:$true] %s544
          %550 = dma.hbm_to_vmem [thread:$0]  %s6, 2048, %s545, [#allocation12], 128, 128, 8
        $region24: #{tpu_custom_call.1} parent=11 // pred_fallthru
          _
        // Predicated region
        $region25: #{tpu_custom_call.1} parent=11 // pred_check
          %p551 = pneg %p229
        $region26: #{tpu_custom_call.1} parent=11 // pred_check_branch
          %553 = sbr.rel (%p551) target = $region28
        $region27: #{tpu_custom_call.1} parent=11 // pred_region
          _
        $region28: #{tpu_custom_call.1} parent=11 // pred_fallthru
          _
        // Predicated region
        $region29: #{tpu_custom_call.1} parent=11 // pred_check
          %p554 = pneg %p250
        $region30: #{tpu_custom_call.1} parent=11 // pred_check_branch
          %556 = sbr.rel (%p554) target = $region32
        $region31: #{tpu_custom_call.1} parent=11 // pred_region
          %s558 = ssub.s32 2048, 2048
          %559 = vsyncadd [#allocation12], %s558
          %s560 = sshll.u32 [#allocation13], 4
          %s561 = int_to_ptr.vmem [resolvable:$true] %s560
          %566 = dma.hbm_to_vmem [thread:$0]  %s8, 2048, %s561, [#allocation12], 128, 128, 8
        $region32: #{tpu_custom_call.1} parent=11 // pred_fallthru
          _
        // Predicated region
        $region33: #{tpu_custom_call.1} parent=11 // pred_check
          %p567 = pneg %p271
        $region34: #{tpu_custom_call.1} parent=11 // pred_check_branch
          %569 = sbr.rel (%p567) target = $region36
        $region35: #{tpu_custom_call.1} parent=11 // pred_region
          _
        $region36: #{tpu_custom_call.1} parent=11 // pred_fallthru
          _
        // Predicated region
        $region37: #{tpu_custom_call.1} parent=11 // pred_check
          %p570 = pneg %p292
        $region38: #{tpu_custom_call.1} parent=11 // pred_check_branch
          %572 = sbr.rel (%p570) target = $region40
        $region39: #{tpu_custom_call.1} parent=11 // pred_region
          %s574 = ssub.s32 2048, 2048
          %575 = vsyncadd [#allocation15], %s574
          %s576 = sshll.u32 [#allocation14], 4
          %s577 = int_to_ptr.vmem [resolvable:$true] %s576
          %582 = dma.hbm_to_vmem [thread:$0]  %s10, 2048, %s577, [#allocation15], 128, 128, 8
        $region40: #{tpu_custom_call.1} parent=11 // pred_fallthru
          _
        // Predicated region
        $region41: #{tpu_custom_call.1} parent=11 // pred_check
          %p583 = pneg %p313
        $region42: #{tpu_custom_call.1} parent=11 // pred_check_branch
          %585 = sbr.rel (%p583) target = $region44
        $region43: #{tpu_custom_call.1} parent=11 // pred_region
          _
        $region44: #{tpu_custom_call.1} parent=11 // pred_fallthru
          _
        // Predicated region
        $region45: #{tpu_custom_call.1} parent=11 // pred_check
          %p586 = pneg %p334
        $region46: #{tpu_custom_call.1} parent=11 // pred_check_branch
          %588 = sbr.rel (%p586) target = $region48
        $region47: #{tpu_custom_call.1} parent=11 // pred_region
          _
        $region48: #{tpu_custom_call.1} parent=11 // pred_fallthru
          _
        // Predicated region
        $region49: #{tpu_custom_call.1} parent=11 // pred_check
          %p589 = pneg %p355
        $region50: #{tpu_custom_call.1} parent=11 // pred_check_branch
          %591 = sbr.rel (%p589) target = $region52
        $region51: #{tpu_custom_call.1} parent=11 // pred_region
          _
        $region52: #{tpu_custom_call.1} parent=11 // pred_fallthru
          _
        // Predicated region
        $region53: #{tpu_custom_call.1} parent=11 // pred_check
          %p592 = pneg %p376
        $region54: #{tpu_custom_call.1} parent=11 // pred_check_branch
          %594 = sbr.rel (%p592) target = $region56
        $region55: #{tpu_custom_call.1} parent=11 // pred_region
          %s596 = ssub.s32 2048, 2048
          %597 = vsyncadd [#allocation15], %s596
          %s598 = sshll.u32 [#allocation16], 4
          %s599 = int_to_ptr.vmem [resolvable:$true] %s598
          %604 = dma.hbm_to_vmem [thread:$0]  %s14, 2048, %s599, [#allocation15], 128, 128, 8
        $region56: #{tpu_custom_call.1} parent=11 // pred_fallthru
          _
        // Predicated region
        $region57: #{tpu_custom_call.1} parent=11 // pred_check
          %p605 = pneg %p397
        $region58: #{tpu_custom_call.1} parent=11 // pred_check_branch
          %607 = sbr.rel (%p605) target = $region60
        $region59: #{tpu_custom_call.1} parent=11 // pred_region
          _
        $region60: #{tpu_custom_call.1} parent=11 // pred_fallthru
          _
        // Predicated region
        $region61: #{tpu_custom_call.1} parent=11 // pred_check
          %p608 = pneg %p418
        $region62: #{tpu_custom_call.1} parent=11 // pred_check_branch
          %610 = sbr.rel (%p608) target = $region64
        $region63: #{tpu_custom_call.1} parent=11 // pred_region
          %s612 = ssub.s32 2048, 2048
          %613 = vsyncadd [#allocation18], %s612
          %s614 = sshll.u32 [#allocation17], 4
          %s615 = int_to_ptr.vmem [resolvable:$true] %s614
          %620 = dma.hbm_to_vmem [thread:$0]  %s16, 2048, %s615, [#allocation18], 128, 128, 8
        $region64: #{tpu_custom_call.1} parent=11 // pred_fallthru
          _
        // Predicated region
        $region65: #{tpu_custom_call.1} parent=11 // pred_check
          %p621 = pneg %p439
        $region66: #{tpu_custom_call.1} parent=11 // pred_check_branch
          %623 = sbr.rel (%p621) target = $region68
        $region67: #{tpu_custom_call.1} parent=11 // pred_region
          _
        $region68: #{tpu_custom_call.1} parent=11 // pred_fallthru
          _
        // Predicated region
        $region69: #{tpu_custom_call.1} parent=11 // pred_check
          %p624 = pneg %p460
        $region70: #{tpu_custom_call.1} parent=11 // pred_check_branch
          %626 = sbr.rel (%p624) target = $region72
        $region71: #{tpu_custom_call.1} parent=11 // pred_region
          _
        $region72: #{tpu_custom_call.1} parent=11 // pred_fallthru
          _
        // Predicated region
        $region73: #{tpu_custom_call.1} parent=11 // pred_check
          %p627 = pneg %p481
        $region74: #{tpu_custom_call.1} parent=11 // pred_check_branch
          %629 = sbr.rel (%p627) target = $region76
        $region75: #{tpu_custom_call.1} parent=11 // pred_region
          _
        $region76: #{tpu_custom_call.1} parent=11 // pred_fallthru
          _
      $region12: #{tpu_custom_call.1} parent=5 // pred_fallthru
        _
      %p630 = scmp.lt.s32.totalorder %s41, 2
      // Predicated region
      $region77: #{tpu_custom_call.1} parent=5 // pred_check
        %p631 = pneg %p630
      $region78: #{tpu_custom_call.1} parent=5 // pred_check_branch
        %633 = sbr.rel (%p631) target = $region80
      $region79: #{tpu_custom_call.1} parent=5 // pred_region
        // Predicated region
        $region81: #{tpu_custom_call.1} parent=79 // pred_check
          %p634 = pneg %p61
        $region82: #{tpu_custom_call.1} parent=79 // pred_check_branch
          %636 = sbr.rel (%p634) target = $region84
        $region83: #{tpu_custom_call.1} parent=79 // pred_region
          %s637 = sand.u32 %s51, 1
          %s638 = scalar_lea.sflag [#allocation3], %s637
          %s639 = sand.u32 %s51, 1
          %s640 = smul.addr %s639, 8
          %s641 = scalar_lea.vmem [#allocation2], %s640
          %s643 = ssub.s32 128, 128
          %644 = vsyncadd %s638, %s643
          %s645 = smul.addr %s41, 128
          %s646 = scalar_lea.hbm %s0, %s645
          %s648 = sshll.u32 %s641, 4
          %s649 = int_to_ptr.vmem [resolvable:$true] %s648
          %651 = dma.hbm_to_vmem [thread:$0]  %s646, 128, %s649, %s638
        $region84: #{tpu_custom_call.1} parent=79 // pred_fallthru
          _
        // Predicated region
        $region85: #{tpu_custom_call.1} parent=79 // pred_check
          %p652 = pneg %p87
        $region86: #{tpu_custom_call.1} parent=79 // pred_check_branch
          %654 = sbr.rel (%p652) target = $region88
        $region87: #{tpu_custom_call.1} parent=79 // pred_region
          %s655 = sand.u32 %s41, 1
          %s656 = scalar_lea.sflag [#allocation6], %s655
          %s657 = sand.u32 %s77, 1
          %s658 = smul.addr %s657, 8
          %s659 = scalar_lea.vmem [#allocation5], %s658
          %s661 = ssub.s32 128, 128
          %662 = vsyncadd %s656, %s661
          %s663 = smul.addr %s41, 128
          %s664 = scalar_lea.hbm %s1, %s663
          %s666 = sshll.u32 %s659, 4
          %s667 = int_to_ptr.vmem [resolvable:$true] %s666
          %669 = dma.hbm_to_vmem [thread:$0]  %s664, 128, %s667, %s656
        $region88: #{tpu_custom_call.1} parent=79 // pred_fallthru
          _
        // Predicated region
        $region89: #{tpu_custom_call.1} parent=79 // pred_check
          %p670 = pneg %p113
        $region90: #{tpu_custom_call.1} parent=79 // pred_check_branch
          %672 = sbr.rel (%p670) target = $region92
        $region91: #{tpu_custom_call.1} parent=79 // pred_region
          %s673 = sand.u32 %s41, 1
          %s674 = scalar_lea.sflag [#allocation6], %s673
          %s675 = sand.u32 %s103, 1
          %s676 = smul.addr %s675, 8
          %s677 = scalar_lea.vmem [#allocation7], %s676
          %s679 = ssub.s32 128, 128
          %680 = vsyncadd %s674, %s679
          %s681 = smul.addr %s41, 128
          %s682 = scalar_lea.hbm %s2, %s681
          %s684 = sshll.u32 %s677, 4
          %s685 = int_to_ptr.vmem [resolvable:$true] %s684
          %687 = dma.hbm_to_vmem [thread:$0]  %s682, 128, %s685, %s674
        $region92: #{tpu_custom_call.1} parent=79 // pred_fallthru
          _
        // Predicated region
        $region93: #{tpu_custom_call.1} parent=79 // pred_check
          %p688 = pneg %p139
        $region94: #{tpu_custom_call.1} parent=79 // pred_check_branch
          %690 = sbr.rel (%p688) target = $region96
        $region95: #{tpu_custom_call.1} parent=79 // pred_region
          %s691 = sand.u32 %s41, 1
          %s692 = scalar_lea.sflag [#allocation9], %s691
          %s693 = sand.u32 %s129, 1
          %s694 = smul.addr %s693, 8
          %s695 = scalar_lea.vmem [#allocation8], %s694
          %s697 = ssub.s32 128, 128
          %698 = vsyncadd %s692, %s697
          %s699 = smul.addr %s41, 128
          %s700 = scalar_lea.hbm %s3, %s699
          %s702 = sshll.u32 %s695, 4
          %s703 = int_to_ptr.vmem [resolvable:$true] %s702
          %705 = dma.hbm_to_vmem [thread:$0]  %s700, 128, %s703, %s692
        $region96: #{tpu_custom_call.1} parent=79 // pred_fallthru
          _
      $region80: #{tpu_custom_call.1} parent=5 // pred_fallthru
        _
      %p706 = scmp.le.s32.totalorder 1, %s41
      %p707 = scmp.lt.s32.totalorder %s41, 3
      %p708 = pnand %p706, %p707
      %p709 = pneg %p708
      // Predicated region
      $region97: #{tpu_custom_call.1} parent=5 // pred_check
        _
      $region98: #{tpu_custom_call.1} parent=5 // pred_check_branch
        %711 = sbr.rel (%p708) target = $region100
      $region99: #{tpu_custom_call.1} parent=5 // pred_region
        %s712 = ssub.s32 %s41, 1
        %s713 = sand.u32 %s54, 1
        %s714 = scalar_lea.sflag [#allocation3], %s713
        %s715 = sand.u32 %s54, 1
        %s716 = smul.addr %s715, 8
        %s717 = scalar_lea.vmem [#allocation2], %s716
        // Predicated region
        $region101: #{tpu_custom_call.1} parent=99 // pred_check
          %p718 = pneg %p67
        $region102: #{tpu_custom_call.1} parent=99 // pred_check_branch
          %720 = sbr.rel (%p718) target = $region104
        $region103: #{tpu_custom_call.1} parent=99 // pred_region
          %721 = dma.done %s714, 128
        $region104: #{tpu_custom_call.1} parent=99 // pred_fallthru
          _
        %s722 = sand.u32 %s46, 1
        %s723 = scalar_lea.sflag [#allocation6], %s722
        %s724 = sand.u32 %s80, 1
        %s725 = smul.addr %s724, 8
        %s726 = scalar_lea.vmem [#allocation5], %s725
        // Predicated region
        $region105: #{tpu_custom_call.1} parent=99 // pred_check
          %p727 = pneg %p93
        $region106: #{tpu_custom_call.1} parent=99 // pred_check_branch
          %729 = sbr.rel (%p727) target = $region108
        $region107: #{tpu_custom_call.1} parent=99 // pred_region
          %730 = dma.done %s723, 128
        $region108: #{tpu_custom_call.1} parent=99 // pred_fallthru
          _
        %s731 = sand.u32 %s46, 1
        %s732 = scalar_lea.sflag [#allocation6], %s731
        %s733 = sand.u32 %s106, 1
        %s734 = smul.addr %s733, 8
        %s735 = scalar_lea.vmem [#allocation7], %s734
        // Predicated region
        $region109: #{tpu_custom_call.1} parent=99 // pred_check
          %p736 = pneg %p119
        $region110: #{tpu_custom_call.1} parent=99 // pred_check_branch
          %738 = sbr.rel (%p736) target = $region112
        $region111: #{tpu_custom_call.1} parent=99 // pred_region
          %739 = dma.done %s732, 128
        $region112: #{tpu_custom_call.1} parent=99 // pred_fallthru
          _
        %s740 = sand.u32 %s46, 1
        %s741 = scalar_lea.sflag [#allocation9], %s740
        %s742 = sand.u32 %s132, 1
        %s743 = smul.addr %s742, 8
        %s744 = scalar_lea.vmem [#allocation8], %s743
        // Predicated region
        $region113: #{tpu_custom_call.1} parent=99 // pred_check
          %p745 = pneg %p145
        $region114: #{tpu_custom_call.1} parent=99 // pred_check_branch
          %747 = sbr.rel (%p745) target = $region116
        $region115: #{tpu_custom_call.1} parent=99 // pred_region
          %748 = dma.done %s741, 128
        $region116: #{tpu_custom_call.1} parent=99 // pred_fallthru
          _
        // Predicated region
        $region117: #{tpu_custom_call.1} parent=99 // pred_check
          %p749 = pneg %p166
        $region118: #{tpu_custom_call.1} parent=99 // pred_check_branch
          %751 = sbr.rel (%p749) target = $region120
        $region119: #{tpu_custom_call.1} parent=99 // pred_region
          %752 = dma.done [#allocation9], 2048
        $region120: #{tpu_custom_call.1} parent=99 // pred_fallthru
          _
        // Predicated region
        $region121: #{tpu_custom_call.1} parent=99 // pred_check
          %p753 = pneg %p208
        $region122: #{tpu_custom_call.1} parent=99 // pred_check_branch
          %755 = sbr.rel (%p753) target = $region124
        $region123: #{tpu_custom_call.1} parent=99 // pred_region
          %756 = dma.done [#allocation12], 2048
        $region124: #{tpu_custom_call.1} parent=99 // pred_fallthru
          _
        // Predicated region
        $region125: #{tpu_custom_call.1} parent=99 // pred_check
          %p757 = pneg %p250
        $region126: #{tpu_custom_call.1} parent=99 // pred_check_branch
          %759 = sbr.rel (%p757) target = $region128
        $region127: #{tpu_custom_call.1} parent=99 // pred_region
          %760 = dma.done [#allocation12], 2048
        $region128: #{tpu_custom_call.1} parent=99 // pred_fallthru
          _
        // Predicated region
        $region129: #{tpu_custom_call.1} parent=99 // pred_check
          %p761 = pneg %p292
        $region130: #{tpu_custom_call.1} parent=99 // pred_check_branch
          %763 = sbr.rel (%p761) target = $region132
        $region131: #{tpu_custom_call.1} parent=99 // pred_region
          %764 = dma.done [#allocation15], 2048
        $region132: #{tpu_custom_call.1} parent=99 // pred_fallthru
          _
        // Predicated region
        $region133: #{tpu_custom_call.1} parent=99 // pred_check
          %p765 = pneg %p376
        $region134: #{tpu_custom_call.1} parent=99 // pred_check_branch
          %767 = sbr.rel (%p765) target = $region136
        $region135: #{tpu_custom_call.1} parent=99 // pred_region
          %768 = dma.done [#allocation15], 2048
        $region136: #{tpu_custom_call.1} parent=99 // pred_fallthru
          _
        // Predicated region
        $region137: #{tpu_custom_call.1} parent=99 // pred_check
          %p769 = pneg %p418
        $region138: #{tpu_custom_call.1} parent=99 // pred_check_branch
          %771 = sbr.rel (%p769) target = $region140
        $region139: #{tpu_custom_call.1} parent=99 // pred_region
          %772 = dma.done [#allocation18], 2048
        $region140: #{tpu_custom_call.1} parent=99 // pred_fallthru
          _
        %s773 = sand.u32 %s54, 1
        %s774 = scalar_lea.sflag [#allocation3], %s773
        %s775 = sand.u32 %s54, 1
        %s776 = smul.addr %s775, 8
        %s777 = scalar_lea.vmem [#allocation2], %s776
        %p778 = pneg %p67
        %p779 = pneg %p64
        %s780 = sand.u32 %s46, 1
        %s781 = scalar_lea.sflag [#allocation6], %s780
        %s782 = sand.u32 %s80, 1
        %s783 = smul.addr %s782, 8
        %s784 = scalar_lea.vmem [#allocation5], %s783
        %p785 = pneg %p93
        %p786 = pneg %p90
        %s787 = sand.u32 %s46, 1
        %s788 = scalar_lea.sflag [#allocation6], %s787
        %s789 = sand.u32 %s106, 1
        %s790 = smul.addr %s789, 8
        %s791 = scalar_lea.vmem [#allocation7], %s790
        %p792 = pneg %p119
        %p793 = pneg %p116
        %s794 = sand.u32 %s46, 1
        %s795 = scalar_lea.sflag [#allocation9], %s794
        %s796 = sand.u32 %s132, 1
        %s797 = smul.addr %s796, 8
        %s798 = scalar_lea.vmem [#allocation8], %s797
        %p799 = pneg %p145
        %p800 = pneg %p142
        %p801 = pneg %p166
        %p802 = pneg %p163
        %p803 = pneg %p187
        %p804 = pneg %p184
        %p805 = pneg %p208
        %p806 = pneg %p205
        %p807 = pneg %p229
        %p808 = pneg %p226
        %p809 = pneg %p250
        %p810 = pneg %p247
        %p811 = pneg %p271
        %p812 = pneg %p268
        %p813 = pneg %p292
        %p814 = pneg %p289
        %p815 = pneg %p313
        %p816 = pneg %p310
        %p817 = pneg %p334
        %p818 = pneg %p331
        %p819 = pneg %p355
        %p820 = pneg %p352
        %p821 = pneg %p376
        %p822 = pneg %p373
        %p823 = pneg %p397
        %p824 = pneg %p394
        %p825 = pneg %p418
        %p826 = pneg %p415
        %p827 = pneg %p439
        %p828 = pneg %p436
        %p829 = pneg %p460
        %p830 = pneg %p457
        %p831 = pneg %p481
        %p832 = pneg %p478
        %p833 = pneg %p507
        %p834 = pneg %p504
        %s835 = sand.u32 %s494, 1
        %s836 = scalar_lea.sflag [#allocation4], %s835
        %s837 = sand.u32 %s494, 1
        %s838 = smul.addr %s837, 8
        %s839 = scalar_lea.vmem [#allocation19], %s838
        %v840 = vld [vmem:[%s717] sm:$0xff]
        %v841 = vld [vmem:[%s726] sm:$0xff]
        %v842 = vld [vmem:[%s735] sm:$0xff]
        %v843 = vld [vmem:[%s744] sm:$0xff]
        %v844 = vlaneseq
        %v845 = vand.u32 %v844, 127
        %vm846 = vcmp.lt.s32.totalorder %v845, 32
        %v847 = vld [vmem:[#allocation10] sm:$0xff]
        %v848 = vld [vmem:[#allocation10 + $0x8] sm:$0xff]
        %v849 = vld [vmem:[#allocation10 + $0x10] sm:$0xff]
        %v850 = vld [vmem:[#allocation10 + $0x18] sm:$0xff]
        %v851 = vld [vmem:[#allocation10 + $0x20] sm:$0xff]
        %v852 = vld [vmem:[#allocation10 + $0x28] sm:$0xff]
        %v853 = vld [vmem:[#allocation10 + $0x30] sm:$0xff]
        %v854 = vld [vmem:[#allocation10 + $0x38] sm:$0xff]
        %v855 = vld [vmem:[#allocation10 + $0x40] sm:$0xff]
        %v856 = vld [vmem:[#allocation10 + $0x48] sm:$0xff]
        %v857 = vld [vmem:[#allocation10 + $0x50] sm:$0xff]
        %v858 = vld [vmem:[#allocation10 + $0x58] sm:$0xff]
        %v859 = vld [vmem:[#allocation10 + $0x60] sm:$0xff]
        %v860 = vld [vmem:[#allocation10 + $0x68] sm:$0xff]
        %v861 = vld [vmem:[#allocation10 + $0x70] sm:$0xff]
        %v862 = vld [vmem:[#allocation10 + $0x78] sm:$0xff]
        %v863 = vld [vmem:[%s5] sm:$0x1]
        %v865 = vlaneseq
        %v866 = vshrl.u32 %v865, 7
        %v867 = vsub.s32 0, %v866
        %v868 = vrot.slane %v863, %v867
        %870 = vmatprep.subr.mxu0 0.0
        %871 = vmatpush1.msra.mxu0 %v847
        %872 = vmatprep.subr.mxu0 0.0
        %873 = vmatpush1.msra.mxu0 %v848
        %874 = vmatprep.subr.mxu0 0.0
        %875 = vmatpush1.msra.mxu0 %v849
        %876 = vmatprep.subr.mxu0 0.0
        %877 = vmatpush1.msra.mxu0 %v850
        %878 = vmatprep.subr.mxu0 0.0
        %879 = vmatpush1.msra.mxu0 %v851
        %880 = vmatprep.subr.mxu0 0.0
        %881 = vmatpush1.msra.mxu0 %v852
        %882 = vmatprep.subr.mxu0 0.0
        %883 = vmatpush1.msra.mxu0 %v853
        %884 = vmatprep.subr.mxu0 0.0
        %885 = vmatpush1.msra.mxu0 %v854
        %886 = vmatprep.subr.mxu0 0.0
        %887 = vmatpush1.msra.mxu0 %v855
        %888 = vmatprep.subr.mxu0 0.0
        %889 = vmatpush1.msra.mxu0 %v856
        %890 = vmatprep.subr.mxu0 0.0
        %891 = vmatpush1.msra.mxu0 %v857
        %892 = vmatprep.subr.mxu0 0.0
        %893 = vmatpush1.msra.mxu0 %v858
        %894 = vmatprep.subr.mxu0 0.0
        %895 = vmatpush1.msra.mxu0 %v859
        %896 = vmatprep.subr.mxu0 0.0
        %897 = vmatpush1.msra.mxu0 %v860
        %898 = vmatprep.subr.mxu0 0.0
        %899 = vmatpush1.msra.mxu0 %v861
        %900 = vmatprep.subr.mxu0 0.0
        %901 = vmatpush1.msra.mxu0 %v862
        %902 = vmatprep.subr.mxu0 0.0
        %903 = vmatpush1.msra.mxu0 0.0
        %904 = vmatprep.subr.mxu0 0.0
        %905 = vmatpush1.msra.mxu0 0.0
        %906 = vmatprep.subr.mxu0 0.0
        %907 = vmatpush1.msra.mxu0 0.0
        %908 = vmatprep.subr.mxu0 0.0
        %909 = vmatpush1.msra.mxu0 0.0
        %910 = vmatprep.subr.mxu0 0.0
        %911 = vmatpush1.msra.mxu0 0.0
        %912 = vmatprep.subr.mxu0 0.0
        %913 = vmatpush1.msra.mxu0 0.0
        %914 = vmatprep.subr.mxu0 0.0
        %915 = vmatpush1.msra.mxu0 0.0
        %916 = vmatprep.subr.mxu0 0.0
        %917 = vmatpush1.msra.mxu0 0.0
        %918 = vmatprep.subr.mxu0 0.0
        %919 = vmatpush1.msra.mxu0 0.0
        %920 = vmatprep.subr.mxu0 0.0
        %921 = vmatpush1.msra.mxu0 0.0
        %922 = vmatprep.subr.mxu0 0.0
        %923 = vmatpush1.msra.mxu0 0.0
        %924 = vmatprep.subr.mxu0 0.0
        %925 = vmatpush1.msra.mxu0 0.0
        %926 = vmatprep.subr.mxu0 0.0
        %927 = vmatpush1.msra.mxu0 0.0
        %928 = vmatprep.subr.mxu0 0.0
        %929 = vmatpush1.msra.mxu0 0.0
        %930 = vmatprep.subr.mxu0 0.0
        %931 = vmatpush1.msra.mxu0 0.0
        %932 = vmatprep.subr.mxu0 0.0
        %933 = vmatpush1.msra.mxu0 0.0
        %934 = vmatprep.mubr.f32.mxu0 0.0
        %935 = vmatmul.mubr.f32.gmra.mrb[0].mxu0 %v841
        %v936 = vpop.f32.mrb[0].mxu0
        %v937 = vadd.f32 %v868, %v936
        %v938 = vpop.f32.mrb[0].mxu0
        %939 = vdwg.mxu0
        %v940 = vld [vmem:[#allocation11] sm:$0xff]
        %v941 = vld [vmem:[#allocation11 + $0x8] sm:$0xff]
        %v942 = vld [vmem:[#allocation11 + $0x10] sm:$0xff]
        %v943 = vld [vmem:[#allocation11 + $0x18] sm:$0xff]
        %v944 = vld [vmem:[#allocation11 + $0x20] sm:$0xff]
        %v945 = vld [vmem:[#allocation11 + $0x28] sm:$0xff]
        %v946 = vld [vmem:[#allocation11 + $0x30] sm:$0xff]
        %v947 = vld [vmem:[#allocation11 + $0x38] sm:$0xff]
        %v948 = vld [vmem:[#allocation11 + $0x40] sm:$0xff]
        %v949 = vld [vmem:[#allocation11 + $0x48] sm:$0xff]
        %v950 = vld [vmem:[#allocation11 + $0x50] sm:$0xff]
        %v951 = vld [vmem:[#allocation11 + $0x58] sm:$0xff]
        %v952 = vld [vmem:[#allocation11 + $0x60] sm:$0xff]
        %v953 = vld [vmem:[#allocation11 + $0x68] sm:$0xff]
        %v954 = vld [vmem:[#allocation11 + $0x70] sm:$0xff]
        %v955 = vld [vmem:[#allocation11 + $0x78] sm:$0xff]
        %v956 = vld [vmem:[%s7] sm:$0x1]
        %v958 = vlaneseq
        %v959 = vshrl.u32 %v958, 7
        %v960 = vsub.s32 0, %v959
        %v961 = vrot.slane %v956, %v960
        %963 = vmatprep.subr.mxu0 0.0
        %964 = vmatpush1.msra.mxu0 %v940
        %965 = vmatprep.subr.mxu0 0.0
        %966 = vmatpush1.msra.mxu0 %v941
        %967 = vmatprep.subr.mxu0 0.0
        %968 = vmatpush1.msra.mxu0 %v942
        %969 = vmatprep.subr.mxu0 0.0
        %970 = vmatpush1.msra.mxu0 %v943
        %971 = vmatprep.subr.mxu0 0.0
        %972 = vmatpush1.msra.mxu0 %v944
        %973 = vmatprep.subr.mxu0 0.0
        %974 = vmatpush1.msra.mxu0 %v945
        %975 = vmatprep.subr.mxu0 0.0
        %976 = vmatpush1.msra.mxu0 %v946
        %977 = vmatprep.subr.mxu0 0.0
        %978 = vmatpush1.msra.mxu0 %v947
        %979 = vmatprep.subr.mxu0 0.0
        %980 = vmatpush1.msra.mxu0 %v948
        %981 = vmatprep.subr.mxu0 0.0
        %982 = vmatpush1.msra.mxu0 %v949
        %983 = vmatprep.subr.mxu0 0.0
        %984 = vmatpush1.msra.mxu0 %v950
        %985 = vmatprep.subr.mxu0 0.0
        %986 = vmatpush1.msra.mxu0 %v951
        %987 = vmatprep.subr.mxu0 0.0
        %988 = vmatpush1.msra.mxu0 %v952
        %989 = vmatprep.subr.mxu0 0.0
        %990 = vmatpush1.msra.mxu0 %v953
        %991 = vmatprep.subr.mxu0 0.0
        %992 = vmatpush1.msra.mxu0 %v954
        %993 = vmatprep.subr.mxu0 0.0
        %994 = vmatpush1.msra.mxu0 %v955
        %995 = vmatprep.subr.mxu0 0.0
        %996 = vmatpush1.msra.mxu0 0.0
        %997 = vmatprep.subr.mxu0 0.0
        %998 = vmatpush1.msra.mxu0 0.0
        %999 = vmatprep.subr.mxu0 0.0
        %1000 = vmatpush1.msra.mxu0 0.0
        %1001 = vmatprep.subr.mxu0 0.0
        %1002 = vmatpush1.msra.mxu0 0.0
        %1003 = vmatprep.subr.mxu0 0.0
        %1004 = vmatpush1.msra.mxu0 0.0
        %1005 = vmatprep.subr.mxu0 0.0
        %1006 = vmatpush1.msra.mxu0 0.0
        %1007 = vmatprep.subr.mxu0 0.0
        %1008 = vmatpush1.msra.mxu0 0.0
        %1009 = vmatprep.subr.mxu0 0.0
        %1010 = vmatpush1.msra.mxu0 0.0
        %1011 = vmatprep.subr.mxu0 0.0
        %1012 = vmatpush1.msra.mxu0 0.0
        %1013 = vmatprep.subr.mxu0 0.0
        %1014 = vmatpush1.msra.mxu0 0.0
        %1015 = vmatprep.subr.mxu0 0.0
        %1016 = vmatpush1.msra.mxu0 0.0
        %1017 = vmatprep.subr.mxu0 0.0
        %1018 = vmatpush1.msra.mxu0 0.0
        %1019 = vmatprep.subr.mxu0 0.0
        %1020 = vmatpush1.msra.mxu0 0.0
        %1021 = vmatprep.subr.mxu0 0.0
        %1022 = vmatpush1.msra.mxu0 0.0
        %1023 = vmatprep.subr.mxu0 0.0
        %1024 = vmatpush1.msra.mxu0 0.0
        %1025 = vmatprep.subr.mxu0 0.0
        %1026 = vmatpush1.msra.mxu0 0.0
        %1027 = vmatprep.mubr.f32.mxu0 0.0
        %1028 = vmatmul.mubr.f32.gmra.mrb[0].mxu0 %v842
        %v1029 = vpop.f32.mrb[0].mxu0
        %v1030 = vadd.f32 %v961, %v1029
        %v1031 = vpop.f32.mrb[0].mxu0
        %1032 = vdwg.mxu0
        %v1033 = vld [vmem:[#allocation13] sm:$0xff]
        %v1034 = vld [vmem:[#allocation13 + $0x8] sm:$0xff]
        %v1035 = vld [vmem:[#allocation13 + $0x10] sm:$0xff]
        %v1036 = vld [vmem:[#allocation13 + $0x18] sm:$0xff]
        %v1037 = vld [vmem:[#allocation13 + $0x20] sm:$0xff]
        %v1038 = vld [vmem:[#allocation13 + $0x28] sm:$0xff]
        %v1039 = vld [vmem:[#allocation13 + $0x30] sm:$0xff]
        %v1040 = vld [vmem:[#allocation13 + $0x38] sm:$0xff]
        %v1041 = vld [vmem:[#allocation13 + $0x40] sm:$0xff]
        %v1042 = vld [vmem:[#allocation13 + $0x48] sm:$0xff]
        %v1043 = vld [vmem:[#allocation13 + $0x50] sm:$0xff]
        %v1044 = vld [vmem:[#allocation13 + $0x58] sm:$0xff]
        %v1045 = vld [vmem:[#allocation13 + $0x60] sm:$0xff]
        %v1046 = vld [vmem:[#allocation13 + $0x68] sm:$0xff]
        %v1047 = vld [vmem:[#allocation13 + $0x70] sm:$0xff]
        %v1048 = vld [vmem:[#allocation13 + $0x78] sm:$0xff]
        %v1049 = vld [vmem:[%s9] sm:$0x1]
        %v1051 = vlaneseq
        %v1052 = vshrl.u32 %v1051, 7
        %v1053 = vsub.s32 0, %v1052
        %v1054 = vrot.slane %v1049, %v1053
        %1056 = vmatprep.subr.mxu0 0.0
        %1057 = vmatpush1.msra.mxu0 %v1033
        %1058 = vmatprep.subr.mxu0 0.0
        %1059 = vmatpush1.msra.mxu0 %v1034
        %1060 = vmatprep.subr.mxu0 0.0
        %1061 = vmatpush1.msra.mxu0 %v1035
        %1062 = vmatprep.subr.mxu0 0.0
        %1063 = vmatpush1.msra.mxu0 %v1036
        %1064 = vmatprep.subr.mxu0 0.0
        %1065 = vmatpush1.msra.mxu0 %v1037
        %1066 = vmatprep.subr.mxu0 0.0
        %1067 = vmatpush1.msra.mxu0 %v1038
        %1068 = vmatprep.subr.mxu0 0.0
        %1069 = vmatpush1.msra.mxu0 %v1039
        %1070 = vmatprep.subr.mxu0 0.0
        %1071 = vmatpush1.msra.mxu0 %v1040
        %1072 = vmatprep.subr.mxu0 0.0
        %1073 = vmatpush1.msra.mxu0 %v1041
        %1074 = vmatprep.subr.mxu0 0.0
        %1075 = vmatpush1.msra.mxu0 %v1042
        %1076 = vmatprep.subr.mxu0 0.0
        %1077 = vmatpush1.msra.mxu0 %v1043
        %1078 = vmatprep.subr.mxu0 0.0
        %1079 = vmatpush1.msra.mxu0 %v1044
        %1080 = vmatprep.subr.mxu0 0.0
        %1081 = vmatpush1.msra.mxu0 %v1045
        %1082 = vmatprep.subr.mxu0 0.0
        %1083 = vmatpush1.msra.mxu0 %v1046
        %1084 = vmatprep.subr.mxu0 0.0
        %1085 = vmatpush1.msra.mxu0 %v1047
        %1086 = vmatprep.subr.mxu0 0.0
        %1087 = vmatpush1.msra.mxu0 %v1048
        %1088 = vmatprep.subr.mxu0 0.0
        %1089 = vmatpush1.msra.mxu0 0.0
        %1090 = vmatprep.subr.mxu0 0.0
        %1091 = vmatpush1.msra.mxu0 0.0
        %1092 = vmatprep.subr.mxu0 0.0
        %1093 = vmatpush1.msra.mxu0 0.0
        %1094 = vmatprep.subr.mxu0 0.0
        %1095 = vmatpush1.msra.mxu0 0.0
        %1096 = vmatprep.subr.mxu0 0.0
        %1097 = vmatpush1.msra.mxu0 0.0
        %1098 = vmatprep.subr.mxu0 0.0
        %1099 = vmatpush1.msra.mxu0 0.0
        %1100 = vmatprep.subr.mxu0 0.0
        %1101 = vmatpush1.msra.mxu0 0.0
        %1102 = vmatprep.subr.mxu0 0.0
        %1103 = vmatpush1.msra.mxu0 0.0
        %1104 = vmatprep.subr.mxu0 0.0
        %1105 = vmatpush1.msra.mxu0 0.0
        %1106 = vmatprep.subr.mxu0 0.0
        %1107 = vmatpush1.msra.mxu0 0.0
        %1108 = vmatprep.subr.mxu0 0.0
        %1109 = vmatpush1.msra.mxu0 0.0
        %1110 = vmatprep.subr.mxu0 0.0
        %1111 = vmatpush1.msra.mxu0 0.0
        %1112 = vmatprep.subr.mxu0 0.0
        %1113 = vmatpush1.msra.mxu0 0.0
        %1114 = vmatprep.subr.mxu0 0.0
        %1115 = vmatpush1.msra.mxu0 0.0
        %1116 = vmatprep.subr.mxu0 0.0
        %1117 = vmatpush1.msra.mxu0 0.0
        %1118 = vmatprep.subr.mxu0 0.0
        %1119 = vmatpush1.msra.mxu0 0.0
        %1120 = vmatprep.mubr.f32.mxu0 0.0
        %1121 = vmatmul.mubr.f32.gmra.mrb[0].mxu0 %v843
        %v1122 = vpop.f32.mrb[0].mxu0
        %v1123 = vadd.f32 %v1054, %v1122
        %v1124 = vpop.f32.mrb[0].mxu0
        %1125 = vdwg.mxu0
        %vm1126 = vcmask 64512
        %v1128 = vsel %vm1126, %v937, 0
        %v1131 = vsel %vm1126, %v1030, 0
        %1133 = vmatprep.subr.mxu0 0.0
        %1134 = vmatpush1.xpose.msra.mxu0 %v1131
        %1135 = vmatprep.subr.mxu0 0.0
        %1136 = vmatpush1.xpose.msra.mxu0 0.0
        %1137 = vmatprep.subr.mxu0 0.0
        %1138 = vmatpush1.xpose.msra.mxu0 0.0
        %1139 = vmatprep.subr.mxu0 0.0
        %1140 = vmatpush1.xpose.msra.mxu0 0.0
        %1141 = vmatprep.subr.mxu0 0.0
        %1142 = vmatpush1.xpose.msra.mxu0 0.0
        %1143 = vmatprep.subr.mxu0 0.0
        %1144 = vmatpush1.xpose.msra.mxu0 0.0
        %1145 = vmatprep.subr.mxu0 0.0
        %1146 = vmatpush1.xpose.msra.mxu0 0.0
        %1147 = vmatprep.subr.mxu0 0.0
        %1148 = vmatpush1.xpose.msra.mxu0 0.0
        %1149 = vmatprep.subr.mxu0 0.0
        %1150 = vmatpush1.xpose.msra.mxu0 0.0
        %1151 = vmatprep.subr.mxu0 0.0
        %1152 = vmatpush1.xpose.msra.mxu0 0.0
        %1153 = vmatprep.subr.mxu0 0.0
        %1154 = vmatpush1.xpose.msra.mxu0 0.0
        %1155 = vmatprep.subr.mxu0 0.0
        %1156 = vmatpush1.xpose.msra.mxu0 0.0
        %1157 = vmatprep.subr.mxu0 0.0
        %1158 = vmatpush1.xpose.msra.mxu0 0.0
        %1159 = vmatprep.subr.mxu0 0.0
        %1160 = vmatpush1.xpose.msra.mxu0 0.0
        %1161 = vmatprep.subr.mxu0 0.0
        %1162 = vmatpush1.xpose.msra.mxu0 0.0
        %1163 = vmatprep.subr.mxu0 0.0
        %1164 = vmatpush1.xpose.msra.mxu0 0.0
        %1165 = vmatprep.subr.mxu0 0.0
        %1166 = vmatpush1.xpose.msra.mxu0 0.0
        %1167 = vmatprep.subr.mxu0 0.0
        %1168 = vmatpush1.xpose.msra.mxu0 0.0
        %1169 = vmatprep.subr.mxu0 0.0
        %1170 = vmatpush1.xpose.msra.mxu0 0.0
        %1171 = vmatprep.subr.mxu0 0.0
        %1172 = vmatpush1.xpose.msra.mxu0 0.0
        %1173 = vmatprep.subr.mxu0 0.0
        %1174 = vmatpush1.xpose.msra.mxu0 0.0
        %1175 = vmatprep.subr.mxu0 0.0
        %1176 = vmatpush1.xpose.msra.mxu0 0.0
        %1177 = vmatprep.subr.mxu0 0.0
        %1178 = vmatpush1.xpose.msra.mxu0 0.0
        %1179 = vmatprep.subr.mxu0 0.0
        %1180 = vmatpush1.xpose.msra.mxu0 0.0
        %1181 = vmatprep.subr.mxu0 0.0
        %1182 = vmatpush1.xpose.msra.mxu0 0.0
        %1183 = vmatprep.subr.mxu0 0.0
        %1184 = vmatpush1.xpose.msra.mxu0 0.0
        %1185 = vmatprep.subr.mxu0 0.0
        %1186 = vmatpush1.xpose.msra.mxu0 0.0
        %1187 = vmatprep.subr.mxu0 0.0
        %1188 = vmatpush1.xpose.msra.mxu0 0.0
        %1189 = vmatprep.subr.mxu0 0.0
        %1190 = vmatpush1.xpose.msra.mxu0 0.0
        %1191 = vmatprep.subr.mxu0 0.0
        %1192 = vmatpush1.xpose.msra.mxu0 0.0
        %1193 = vmatprep.subr.mxu0 0.0
        %1194 = vmatpush1.xpose.msra.mxu0 0.0
        %1195 = vmatprep.subr.mxu0 0.0
        %1196 = vmatpush1.xpose.msra.mxu0 0.0
        %1197 = vmatprep.mubr.f32.mxu0 0.0
        %1198 = vmatmul.mubr.f32.gmra.mrb[0].mxu0 %v1128
        %v1199 = vpop.f32.mrb[0].mxu0
        %v1200 = vadd.f32 0.0, %v1199
        %v1201 = vpop.f32.mrb[0].mxu0
        %1202 = vdwg.mxu0
        %v1203 = vsel %vm1126, %v1200, -inf
        %1204 = vmax.xlane.f32.xlu0 %v1203
        %v1205 = vpop.xlane.xlu0 %1204
        %v1206 = vsub.f32 %v1200, %v1205
        %v1207 = vmul.f32 %v1206, 1.442695
        %v1208 = vpow.pop %v1207
        %v1209 = vsel %vm1126, %v1208, 0.0
        %1210 = vadd.xlane.f32.xlu0 %v1209
        %v1211 = vpop.xlane.xlu0 %1210
        %v1212 = vrcp.pop %v1211
        %v1213 = vmul.f32 %v1208, %v1212
        %v1215 = vsel %vm1126, %v1213, 0
        %1217 = vmatprep.subr.mxu0 0.0
        %1218 = vmatpush1.msra.mxu0 %v1123
        %1219 = vmatprep.subr.mxu0 0.0
        %1220 = vmatpush1.msra.mxu0 0.0
        %1221 = vmatprep.subr.mxu0 0.0
        %1222 = vmatpush1.msra.mxu0 0.0
        %1223 = vmatprep.subr.mxu0 0.0
        %1224 = vmatpush1.msra.mxu0 0.0
        %1225 = vmatprep.subr.mxu0 0.0
        %1226 = vmatpush1.msra.mxu0 0.0
        %1227 = vmatprep.subr.mxu0 0.0
        %1228 = vmatpush1.msra.mxu0 0.0
        %1229 = vmatprep.subr.mxu0 0.0
        %1230 = vmatpush1.msra.mxu0 0.0
        %1231 = vmatprep.subr.mxu0 0.0
        %1232 = vmatpush1.msra.mxu0 0.0
        %1233 = vmatprep.subr.mxu0 0.0
        %1234 = vmatpush1.msra.mxu0 0.0
        %1235 = vmatprep.subr.mxu0 0.0
        %1236 = vmatpush1.msra.mxu0 0.0
        %1237 = vmatprep.subr.mxu0 0.0
        %1238 = vmatpush1.msra.mxu0 0.0
        %1239 = vmatprep.subr.mxu0 0.0
        %1240 = vmatpush1.msra.mxu0 0.0
        %1241 = vmatprep.subr.mxu0 0.0
        %1242 = vmatpush1.msra.mxu0 0.0
        %1243 = vmatprep.subr.mxu0 0.0
        %1244 = vmatpush1.msra.mxu0 0.0
        %1245 = vmatprep.subr.mxu0 0.0
        %1246 = vmatpush1.msra.mxu0 0.0
        %1247 = vmatprep.subr.mxu0 0.0
        %1248 = vmatpush1.msra.mxu0 0.0
        %1249 = vmatprep.subr.mxu0 0.0
        %1250 = vmatpush1.msra.mxu0 0.0
        %1251 = vmatprep.subr.mxu0 0.0
        %1252 = vmatpush1.msra.mxu0 0.0
        %1253 = vmatprep.subr.mxu0 0.0
        %1254 = vmatpush1.msra.mxu0 0.0
        %1255 = vmatprep.subr.mxu0 0.0
        %1256 = vmatpush1.msra.mxu0 0.0
        %1257 = vmatprep.subr.mxu0 0.0
        %1258 = vmatpush1.msra.mxu0 0.0
        %1259 = vmatprep.subr.mxu0 0.0
        %1260 = vmatpush1.msra.mxu0 0.0
        %1261 = vmatprep.subr.mxu0 0.0
        %1262 = vmatpush1.msra.mxu0 0.0
        %1263 = vmatprep.subr.mxu0 0.0
        %1264 = vmatpush1.msra.mxu0 0.0
        %1265 = vmatprep.subr.mxu0 0.0
        %1266 = vmatpush1.msra.mxu0 0.0
        %1267 = vmatprep.subr.mxu0 0.0
        %1268 = vmatpush1.msra.mxu0 0.0
        %1269 = vmatprep.subr.mxu0 0.0
        %1270 = vmatpush1.msra.mxu0 0.0
        %1271 = vmatprep.subr.mxu0 0.0
        %1272 = vmatpush1.msra.mxu0 0.0
        %1273 = vmatprep.subr.mxu0 0.0
        %1274 = vmatpush1.msra.mxu0 0.0
        %1275 = vmatprep.subr.mxu0 0.0
        %1276 = vmatpush1.msra.mxu0 0.0
        %1277 = vmatprep.subr.mxu0 0.0
        %1278 = vmatpush1.msra.mxu0 0.0
        %1279 = vmatprep.subr.mxu0 0.0
        %1280 = vmatpush1.msra.mxu0 0.0
        %1281 = vmatprep.mubr.f32.mxu0 0.0
        %1282 = vmatmul.mubr.f32.gmra.mrb[0].mxu0 %v1215
        %v1283 = vpop.f32.mrb[0].mxu0
        %v1284 = vadd.f32 0.0, %v1283
        %v1285 = vpop.f32.mrb[0].mxu0
        %1286 = vdwg.mxu0
        %1287 = vrot.lane.b32.xlu0 %v937, 120
        %v1288 = vpop.permute.xlu0 %1287
        %1289 = vrot.lane.b32.xlu0 %v1030, 120
        %v1290 = vpop.permute.xlu0 %1289
        %v1291 = vsel %vm1126, %v1288, 0
        %v1293 = vsel %vm1126, %v1290, 0
        %1295 = vmatprep.subr.mxu0 0.0
        %1296 = vmatpush1.xpose.msra.mxu0 %v1293
        %1297 = vmatprep.subr.mxu0 0.0
        %1298 = vmatpush1.xpose.msra.mxu0 0.0
        %1299 = vmatprep.subr.mxu0 0.0
        %1300 = vmatpush1.xpose.msra.mxu0 0.0
        %1301 = vmatprep.subr.mxu0 0.0
        %1302 = vmatpush1.xpose.msra.mxu0 0.0
        %1303 = vmatprep.subr.mxu0 0.0
        %1304 = vmatpush1.xpose.msra.mxu0 0.0
        %1305 = vmatprep.subr.mxu0 0.0
        %1306 = vmatpush1.xpose.msra.mxu0 0.0
        %1307 = vmatprep.subr.mxu0 0.0
        %1308 = vmatpush1.xpose.msra.mxu0 0.0
        %1309 = vmatprep.subr.mxu0 0.0
        %1310 = vmatpush1.xpose.msra.mxu0 0.0
        %1311 = vmatprep.subr.mxu0 0.0
        %1312 = vmatpush1.xpose.msra.mxu0 0.0
        %1313 = vmatprep.subr.mxu0 0.0
        %1314 = vmatpush1.xpose.msra.mxu0 0.0
        %1315 = vmatprep.subr.mxu0 0.0
        %1316 = vmatpush1.xpose.msra.mxu0 0.0
        %1317 = vmatprep.subr.mxu0 0.0
        %1318 = vmatpush1.xpose.msra.mxu0 0.0
        %1319 = vmatprep.subr.mxu0 0.0
        %1320 = vmatpush1.xpose.msra.mxu0 0.0
        %1321 = vmatprep.subr.mxu0 0.0
        %1322 = vmatpush1.xpose.msra.mxu0 0.0
        %1323 = vmatprep.subr.mxu0 0.0
        %1324 = vmatpush1.xpose.msra.mxu0 0.0
        %1325 = vmatprep.subr.mxu0 0.0
        %1326 = vmatpush1.xpose.msra.mxu0 0.0
        %1327 = vmatprep.subr.mxu0 0.0
        %1328 = vmatpush1.xpose.msra.mxu0 0.0
        %1329 = vmatprep.subr.mxu0 0.0
        %1330 = vmatpush1.xpose.msra.mxu0 0.0
        %1331 = vmatprep.subr.mxu0 0.0
        %1332 = vmatpush1.xpose.msra.mxu0 0.0
        %1333 = vmatprep.subr.mxu0 0.0
        %1334 = vmatpush1.xpose.msra.mxu0 0.0
        %1335 = vmatprep.subr.mxu0 0.0
        %1336 = vmatpush1.xpose.msra.mxu0 0.0
        %1337 = vmatprep.subr.mxu0 0.0
        %1338 = vmatpush1.xpose.msra.mxu0 0.0
        %1339 = vmatprep.subr.mxu0 0.0
        %1340 = vmatpush1.xpose.msra.mxu0 0.0
        %1341 = vmatprep.subr.mxu0 0.0
        %1342 = vmatpush1.xpose.msra.mxu0 0.0
        %1343 = vmatprep.subr.mxu0 0.0
        %1344 = vmatpush1.xpose.msra.mxu0 0.0
        %1345 = vmatprep.subr.mxu0 0.0
        %1346 = vmatpush1.xpose.msra.mxu0 0.0
        %1347 = vmatprep.subr.mxu0 0.0
        %1348 = vmatpush1.xpose.msra.mxu0 0.0
        %1349 = vmatprep.subr.mxu0 0.0
        %1350 = vmatpush1.xpose.msra.mxu0 0.0
        %1351 = vmatprep.subr.mxu0 0.0
        %1352 = vmatpush1.xpose.msra.mxu0 0.0
        %1353 = vmatprep.subr.mxu0 0.0
        %1354 = vmatpush1.xpose.msra.mxu0 0.0
        %1355 = vmatprep.subr.mxu0 0.0
        %1356 = vmatpush1.xpose.msra.mxu0 0.0
        %1357 = vmatprep.subr.mxu0 0.0
        %1358 = vmatpush1.xpose.msra.mxu0 0.0
        %1359 = vmatprep.mubr.f32.mxu0 0.0
        %1360 = vmatmul.mubr.f32.gmra.mrb[0].mxu0 %v1291
        %v1361 = vpop.f32.mrb[0].mxu0
        %v1362 = vadd.f32 0.0, %v1361
        %v1363 = vpop.f32.mrb[0].mxu0
        %1364 = vdwg.mxu0
        %v1365 = vsel %vm1126, %v1362, -inf
        %1366 = vmax.xlane.f32.xlu0 %v1365
        %v1367 = vpop.xlane.xlu0 %1366
        %v1368 = vsub.f32 %v1362, %v1367
        %v1369 = vmul.f32 %v1368, 1.442695
        %v1370 = vpow.pop %v1369
        %v1371 = vsel %vm1126, %v1370, 0.0
        %1372 = vadd.xlane.f32.xlu0 %v1371
        %v1373 = vpop.xlane.xlu0 %1372
        %v1374 = vrcp.pop %v1373
        %v1375 = vmul.f32 %v1370, %v1374
        %1377 = vrot.lane.b32.xlu0 %v1123, 120
        %v1378 = vpop.permute.xlu0 %1377
        %v1381 = vsel %vm1126, %v1375, 0
        %1383 = vmatprep.subr.mxu0 0.0
        %1384 = vmatpush1.msra.mxu0 %v1378
        %1385 = vmatprep.subr.mxu0 0.0
        %1386 = vmatpush1.msra.mxu0 0.0
        %1387 = vmatprep.subr.mxu0 0.0
        %1388 = vmatpush1.msra.mxu0 0.0
        %1389 = vmatprep.subr.mxu0 0.0
        %1390 = vmatpush1.msra.mxu0 0.0
        %1391 = vmatprep.subr.mxu0 0.0
        %1392 = vmatpush1.msra.mxu0 0.0
        %1393 = vmatprep.subr.mxu0 0.0
        %1394 = vmatpush1.msra.mxu0 0.0
        %1395 = vmatprep.subr.mxu0 0.0
        %1396 = vmatpush1.msra.mxu0 0.0
        %1397 = vmatprep.subr.mxu0 0.0
        %1398 = vmatpush1.msra.mxu0 0.0
        %1399 = vmatprep.subr.mxu0 0.0
        %1400 = vmatpush1.msra.mxu0 0.0
        %1401 = vmatprep.subr.mxu0 0.0
        %1402 = vmatpush1.msra.mxu0 0.0
        %1403 = vmatprep.subr.mxu0 0.0
        %1404 = vmatpush1.msra.mxu0 0.0
        %1405 = vmatprep.subr.mxu0 0.0
        %1406 = vmatpush1.msra.mxu0 0.0
        %1407 = vmatprep.subr.mxu0 0.0
        %1408 = vmatpush1.msra.mxu0 0.0
        %1409 = vmatprep.subr.mxu0 0.0
        %1410 = vmatpush1.msra.mxu0 0.0
        %1411 = vmatprep.subr.mxu0 0.0
        %1412 = vmatpush1.msra.mxu0 0.0
        %1413 = vmatprep.subr.mxu0 0.0
        %1414 = vmatpush1.msra.mxu0 0.0
        %1415 = vmatprep.subr.mxu0 0.0
        %1416 = vmatpush1.msra.mxu0 0.0
        %1417 = vmatprep.subr.mxu0 0.0
        %1418 = vmatpush1.msra.mxu0 0.0
        %1419 = vmatprep.subr.mxu0 0.0
        %1420 = vmatpush1.msra.mxu0 0.0
        %1421 = vmatprep.subr.mxu0 0.0
        %1422 = vmatpush1.msra.mxu0 0.0
        %1423 = vmatprep.subr.mxu0 0.0
        %1424 = vmatpush1.msra.mxu0 0.0
        %1425 = vmatprep.subr.mxu0 0.0
        %1426 = vmatpush1.msra.mxu0 0.0
        %1427 = vmatprep.subr.mxu0 0.0
        %1428 = vmatpush1.msra.mxu0 0.0
        %1429 = vmatprep.subr.mxu0 0.0
        %1430 = vmatpush1.msra.mxu0 0.0
        %1431 = vmatprep.subr.mxu0 0.0
        %1432 = vmatpush1.msra.mxu0 0.0
        %1433 = vmatprep.subr.mxu0 0.0
        %1434 = vmatpush1.msra.mxu0 0.0
        %1435 = vmatprep.subr.mxu0 0.0
        %1436 = vmatpush1.msra.mxu0 0.0
        %1437 = vmatprep.subr.mxu0 0.0
        %1438 = vmatpush1.msra.mxu0 0.0
        %1439 = vmatprep.subr.mxu0 0.0
        %1440 = vmatpush1.msra.mxu0 0.0
        %1441 = vmatprep.subr.mxu0 0.0
        %1442 = vmatpush1.msra.mxu0 0.0
        %1443 = vmatprep.subr.mxu0 0.0
        %1444 = vmatpush1.msra.mxu0 0.0
        %1445 = vmatprep.subr.mxu0 0.0
        %1446 = vmatpush1.msra.mxu0 0.0
        %1447 = vmatprep.mubr.f32.mxu0 0.0
        %1448 = vmatmul.mubr.f32.gmra.mrb[0].mxu0 %v1381
        %v1449 = vpop.f32.mrb[0].mxu0
        %v1450 = vadd.f32 0.0, %v1449
        %v1451 = vpop.f32.mrb[0].mxu0
        %1452 = vdwg.mxu0
        %1453 = vrot.lane.b32.xlu0 %v937, 112
        %v1454 = vpop.permute.xlu0 %1453
        %1455 = vrot.lane.b32.xlu0 %v1030, 112
        %v1456 = vpop.permute.xlu0 %1455
        %v1457 = vsel %vm1126, %v1454, 0
        %v1459 = vsel %vm1126, %v1456, 0
        %1461 = vmatprep.subr.mxu0 0.0
        %1462 = vmatpush1.xpose.msra.mxu0 %v1459
        %1463 = vmatprep.subr.mxu0 0.0
        %1464 = vmatpush1.xpose.msra.mxu0 0.0
        %1465 = vmatprep.subr.mxu0 0.0
        %1466 = vmatpush1.xpose.msra.mxu0 0.0
        %1467 = vmatprep.subr.mxu0 0.0
        %1468 = vmatpush1.xpose.msra.mxu0 0.0
        %1469 = vmatprep.subr.mxu0 0.0
        %1470 = vmatpush1.xpose.msra.mxu0 0.0
        %1471 = vmatprep.subr.mxu0 0.0
        %1472 = vmatpush1.xpose.msra.mxu0 0.0
        %1473 = vmatprep.subr.mxu0 0.0
        %1474 = vmatpush1.xpose.msra.mxu0 0.0
        %1475 = vmatprep.subr.mxu0 0.0
        %1476 = vmatpush1.xpose.msra.mxu0 0.0
        %1477 = vmatprep.subr.mxu0 0.0
        %1478 = vmatpush1.xpose.msra.mxu0 0.0
        %1479 = vmatprep.subr.mxu0 0.0
        %1480 = vmatpush1.xpose.msra.mxu0 0.0
        %1481 = vmatprep.subr.mxu0 0.0
        %1482 = vmatpush1.xpose.msra.mxu0 0.0
        %1483 = vmatprep.subr.mxu0 0.0
        %1484 = vmatpush1.xpose.msra.mxu0 0.0
        %1485 = vmatprep.subr.mxu0 0.0
        %1486 = vmatpush1.xpose.msra.mxu0 0.0
        %1487 = vmatprep.subr.mxu0 0.0
        %1488 = vmatpush1.xpose.msra.mxu0 0.0
        %1489 = vmatprep.subr.mxu0 0.0
        %1490 = vmatpush1.xpose.msra.mxu0 0.0
        %1491 = vmatprep.subr.mxu0 0.0
        %1492 = vmatpush1.xpose.msra.mxu0 0.0
        %1493 = vmatprep.subr.mxu0 0.0
        %1494 = vmatpush1.xpose.msra.mxu0 0.0
        %1495 = vmatprep.subr.mxu0 0.0
        %1496 = vmatpush1.xpose.msra.mxu0 0.0
        %1497 = vmatprep.subr.mxu0 0.0
        %1498 = vmatpush1.xpose.msra.mxu0 0.0
        %1499 = vmatprep.subr.mxu0 0.0
        %1500 = vmatpush1.xpose.msra.mxu0 0.0
        %1501 = vmatprep.subr.mxu0 0.0
        %1502 = vmatpush1.xpose.msra.mxu0 0.0
        %1503 = vmatprep.subr.mxu0 0.0
        %1504 = vmatpush1.xpose.msra.mxu0 0.0
        %1505 = vmatprep.subr.mxu0 0.0
        %1506 = vmatpush1.xpose.msra.mxu0 0.0
        %1507 = vmatprep.subr.mxu0 0.0
        %1508 = vmatpush1.xpose.msra.mxu0 0.0
        %1509 = vmatprep.subr.mxu0 0.0
        %1510 = vmatpush1.xpose.msra.mxu0 0.0
        %1511 = vmatprep.subr.mxu0 0.0
        %1512 = vmatpush1.xpose.msra.mxu0 0.0
        %1513 = vmatprep.subr.mxu0 0.0
        %1514 = vmatpush1.xpose.msra.mxu0 0.0
        %1515 = vmatprep.subr.mxu0 0.0
        %1516 = vmatpush1.xpose.msra.mxu0 0.0
        %1517 = vmatprep.subr.mxu0 0.0
        %1518 = vmatpush1.xpose.msra.mxu0 0.0
        %1519 = vmatprep.subr.mxu0 0.0
        %1520 = vmatpush1.xpose.msra.mxu0 0.0
        %1521 = vmatprep.subr.mxu0 0.0
        %1522 = vmatpush1.xpose.msra.mxu0 0.0
        %1523 = vmatprep.subr.mxu0 0.0
        %1524 = vmatpush1.xpose.msra.mxu0 0.0
        %1525 = vmatprep.mubr.f32.mxu0 0.0
        %1526 = vmatmul.mubr.f32.gmra.mrb[0].mxu0 %v1457
        %v1527 = vpop.f32.mrb[0].mxu0
        %v1528 = vadd.f32 0.0, %v1527
        %v1529 = vpop.f32.mrb[0].mxu0
        %1530 = vdwg.mxu0
        %v1531 = vsel %vm1126, %v1528, -inf
        %1532 = vmax.xlane.f32.xlu0 %v1531
        %v1533 = vpop.xlane.xlu0 %1532
        %v1534 = vsub.f32 %v1528, %v1533
        %v1535 = vmul.f32 %v1534, 1.442695
        %v1536 = vpow.pop %v1535
        %v1537 = vsel %vm1126, %v1536, 0.0
        %1538 = vadd.xlane.f32.xlu0 %v1537
        %v1539 = vpop.xlane.xlu0 %1538
        %v1540 = vrcp.pop %v1539
        %v1541 = vmul.f32 %v1536, %v1540
        %1542 = vrot.lane.b32.xlu0 %v1123, 112
        %v1543 = vpop.permute.xlu0 %1542
        %v1546 = vsel %vm1126, %v1541, 0
        %1548 = vmatprep.subr.mxu0 0.0
        %1549 = vmatpush1.msra.mxu0 %v1543
        %1550 = vmatprep.subr.mxu0 0.0
        %1551 = vmatpush1.msra.mxu0 0.0
        %1552 = vmatprep.subr.mxu0 0.0
        %1553 = vmatpush1.msra.mxu0 0.0
        %1554 = vmatprep.subr.mxu0 0.0
        %1555 = vmatpush1.msra.mxu0 0.0
        %1556 = vmatprep.subr.mxu0 0.0
        %1557 = vmatpush1.msra.mxu0 0.0
        %1558 = vmatprep.subr.mxu0 0.0
        %1559 = vmatpush1.msra.mxu0 0.0
        %1560 = vmatprep.subr.mxu0 0.0
        %1561 = vmatpush1.msra.mxu0 0.0
        %1562 = vmatprep.subr.mxu0 0.0
        %1563 = vmatpush1.msra.mxu0 0.0
        %1564 = vmatprep.subr.mxu0 0.0
        %1565 = vmatpush1.msra.mxu0 0.0
        %1566 = vmatprep.subr.mxu0 0.0
        %1567 = vmatpush1.msra.mxu0 0.0
        %1568 = vmatprep.subr.mxu0 0.0
        %1569 = vmatpush1.msra.mxu0 0.0
        %1570 = vmatprep.subr.mxu0 0.0
        %1571 = vmatpush1.msra.mxu0 0.0
        %1572 = vmatprep.subr.mxu0 0.0
        %1573 = vmatpush1.msra.mxu0 0.0
        %1574 = vmatprep.subr.mxu0 0.0
        %1575 = vmatpush1.msra.mxu0 0.0
        %1576 = vmatprep.subr.mxu0 0.0
        %1577 = vmatpush1.msra.mxu0 0.0
        %1578 = vmatprep.subr.mxu0 0.0
        %1579 = vmatpush1.msra.mxu0 0.0
        %1580 = vmatprep.subr.mxu0 0.0
        %1581 = vmatpush1.msra.mxu0 0.0
        %1582 = vmatprep.subr.mxu0 0.0
        %1583 = vmatpush1.msra.mxu0 0.0
        %1584 = vmatprep.subr.mxu0 0.0
        %1585 = vmatpush1.msra.mxu0 0.0
        %1586 = vmatprep.subr.mxu0 0.0
        %1587 = vmatpush1.msra.mxu0 0.0
        %1588 = vmatprep.subr.mxu0 0.0
        %1589 = vmatpush1.msra.mxu0 0.0
        %1590 = vmatprep.subr.mxu0 0.0
        %1591 = vmatpush1.msra.mxu0 0.0
        %1592 = vmatprep.subr.mxu0 0.0
        %1593 = vmatpush1.msra.mxu0 0.0
        %1594 = vmatprep.subr.mxu0 0.0
        %1595 = vmatpush1.msra.mxu0 0.0
        %1596 = vmatprep.subr.mxu0 0.0
        %1597 = vmatpush1.msra.mxu0 0.0
        %1598 = vmatprep.subr.mxu0 0.0
        %1599 = vmatpush1.msra.mxu0 0.0
        %1600 = vmatprep.subr.mxu0 0.0
        %1601 = vmatpush1.msra.mxu0 0.0
        %1602 = vmatprep.subr.mxu0 0.0
        %1603 = vmatpush1.msra.mxu0 0.0
        %1604 = vmatprep.subr.mxu0 0.0
        %1605 = vmatpush1.msra.mxu0 0.0
        %1606 = vmatprep.subr.mxu0 0.0
        %1607 = vmatpush1.msra.mxu0 0.0
        %1608 = vmatprep.subr.mxu0 0.0
        %1609 = vmatpush1.msra.mxu0 0.0
        %1610 = vmatprep.subr.mxu0 0.0
        %1611 = vmatpush1.msra.mxu0 0.0
        %1612 = vmatprep.mubr.f32.mxu0 0.0
        %1613 = vmatmul.mubr.f32.gmra.mrb[0].mxu0 %v1546
        %v1614 = vpop.f32.mrb[0].mxu0
        %v1615 = vadd.f32 0.0, %v1614
        %v1616 = vpop.f32.mrb[0].mxu0
        %1617 = vdwg.mxu0
        %1618 = vrot.lane.b32.xlu0 %v937, 104
        %v1619 = vpop.permute.xlu0 %1618
        %1620 = vrot.lane.b32.xlu0 %v1030, 104
        %v1621 = vpop.permute.xlu0 %1620
        %v1622 = vsel %vm1126, %v1619, 0
        %v1624 = vsel %vm1126, %v1621, 0
        %1626 = vmatprep.subr.mxu0 0.0
        %1627 = vmatpush1.xpose.msra.mxu0 %v1624
        %1628 = vmatprep.subr.mxu0 0.0
        %1629 = vmatpush1.xpose.msra.mxu0 0.0
        %1630 = vmatprep.subr.mxu0 0.0
        %1631 = vmatpush1.xpose.msra.mxu0 0.0
        %1632 = vmatprep.subr.mxu0 0.0
        %1633 = vmatpush1.xpose.msra.mxu0 0.0
        %1634 = vmatprep.subr.mxu0 0.0
        %1635 = vmatpush1.xpose.msra.mxu0 0.0
        %1636 = vmatprep.subr.mxu0 0.0
        %1637 = vmatpush1.xpose.msra.mxu0 0.0
        %1638 = vmatprep.subr.mxu0 0.0
        %1639 = vmatpush1.xpose.msra.mxu0 0.0
        %1640 = vmatprep.subr.mxu0 0.0
        %1641 = vmatpush1.xpose.msra.mxu0 0.0
        %1642 = vmatprep.subr.mxu0 0.0
        %1643 = vmatpush1.xpose.msra.mxu0 0.0
        %1644 = vmatprep.subr.mxu0 0.0
        %1645 = vmatpush1.xpose.msra.mxu0 0.0
        %1646 = vmatprep.subr.mxu0 0.0
        %1647 = vmatpush1.xpose.msra.mxu0 0.0
        %1648 = vmatprep.subr.mxu0 0.0
        %1649 = vmatpush1.xpose.msra.mxu0 0.0
        %1650 = vmatprep.subr.mxu0 0.0
        %1651 = vmatpush1.xpose.msra.mxu0 0.0
        %1652 = vmatprep.subr.mxu0 0.0
        %1653 = vmatpush1.xpose.msra.mxu0 0.0
        %1654 = vmatprep.subr.mxu0 0.0
        %1655 = vmatpush1.xpose.msra.mxu0 0.0
        %1656 = vmatprep.subr.mxu0 0.0
        %1657 = vmatpush1.xpose.msra.mxu0 0.0
        %1658 = vmatprep.subr.mxu0 0.0
        %1659 = vmatpush1.xpose.msra.mxu0 0.0
        %1660 = vmatprep.subr.mxu0 0.0
        %1661 = vmatpush1.xpose.msra.mxu0 0.0
        %1662 = vmatprep.subr.mxu0 0.0
        %1663 = vmatpush1.xpose.msra.mxu0 0.0
        %1664 = vmatprep.subr.mxu0 0.0
        %1665 = vmatpush1.xpose.msra.mxu0 0.0
        %1666 = vmatprep.subr.mxu0 0.0
        %1667 = vmatpush1.xpose.msra.mxu0 0.0
        %1668 = vmatprep.subr.mxu0 0.0
        %1669 = vmatpush1.xpose.msra.mxu0 0.0
        %1670 = vmatprep.subr.mxu0 0.0
        %1671 = vmatpush1.xpose.msra.mxu0 0.0
        %1672 = vmatprep.subr.mxu0 0.0
        %1673 = vmatpush1.xpose.msra.mxu0 0.0
        %1674 = vmatprep.subr.mxu0 0.0
        %1675 = vmatpush1.xpose.msra.mxu0 0.0
        %1676 = vmatprep.subr.mxu0 0.0
        %1677 = vmatpush1.xpose.msra.mxu0 0.0
        %1678 = vmatprep.subr.mxu0 0.0
        %1679 = vmatpush1.xpose.msra.mxu0 0.0
        %1680 = vmatprep.subr.mxu0 0.0
        %1681 = vmatpush1.xpose.msra.mxu0 0.0
        %1682 = vmatprep.subr.mxu0 0.0
        %1683 = vmatpush1.xpose.msra.mxu0 0.0
        %1684 = vmatprep.subr.mxu0 0.0
        %1685 = vmatpush1.xpose.msra.mxu0 0.0
        %1686 = vmatprep.subr.mxu0 0.0
        %1687 = vmatpush1.xpose.msra.mxu0 0.0
        %1688 = vmatprep.subr.mxu0 0.0
        %1689 = vmatpush1.xpose.msra.mxu0 0.0
        %1690 = vmatprep.mubr.f32.mxu0 0.0
        %1691 = vmatmul.mubr.f32.gmra.mrb[0].mxu0 %v1622
        %v1692 = vpop.f32.mrb[0].mxu0
        %v1693 = vadd.f32 0.0, %v1692
        %v1694 = vpop.f32.mrb[0].mxu0
        %1695 = vdwg.mxu0
        %v1696 = vsel %vm1126, %v1693, -inf
        %1697 = vmax.xlane.f32.xlu0 %v1696
        %v1698 = vpop.xlane.xlu0 %1697
        %v1699 = vsub.f32 %v1693, %v1698
        %v1700 = vmul.f32 %v1699, 1.442695
        %v1701 = vpow.pop %v1700
        %v1702 = vsel %vm1126, %v1701, 0.0
        %1703 = vadd.xlane.f32.xlu0 %v1702
        %v1704 = vpop.xlane.xlu0 %1703
        %v1705 = vrcp.pop %v1704
        %v1706 = vmul.f32 %v1701, %v1705
        %1707 = vrot.lane.b32.xlu0 %v1123, 104
        %v1708 = vpop.permute.xlu0 %1707
        %v1711 = vsel %vm1126, %v1706, 0
        %1713 = vmatprep.subr.mxu0 0.0
        %1714 = vmatpush1.msra.mxu0 %v1708
        %1715 = vmatprep.subr.mxu0 0.0
        %1716 = vmatpush1.msra.mxu0 0.0
        %1717 = vmatprep.subr.mxu0 0.0
        %1718 = vmatpush1.msra.mxu0 0.0
        %1719 = vmatprep.subr.mxu0 0.0
        %1720 = vmatpush1.msra.mxu0 0.0
        %1721 = vmatprep.subr.mxu0 0.0
        %1722 = vmatpush1.msra.mxu0 0.0
        %1723 = vmatprep.subr.mxu0 0.0
        %1724 = vmatpush1.msra.mxu0 0.0
        %1725 = vmatprep.subr.mxu0 0.0
        %1726 = vmatpush1.msra.mxu0 0.0
        %1727 = vmatprep.subr.mxu0 0.0
        %1728 = vmatpush1.msra.mxu0 0.0
        %1729 = vmatprep.subr.mxu0 0.0
        %1730 = vmatpush1.msra.mxu0 0.0
        %1731 = vmatprep.subr.mxu0 0.0
        %1732 = vmatpush1.msra.mxu0 0.0
        %1733 = vmatprep.subr.mxu0 0.0
        %1734 = vmatpush1.msra.mxu0 0.0
        %1735 = vmatprep.subr.mxu0 0.0
        %1736 = vmatpush1.msra.mxu0 0.0
        %1737 = vmatprep.subr.mxu0 0.0
        %1738 = vmatpush1.msra.mxu0 0.0
        %1739 = vmatprep.subr.mxu0 0.0
        %1740 = vmatpush1.msra.mxu0 0.0
        %1741 = vmatprep.subr.mxu0 0.0
        %1742 = vmatpush1.msra.mxu0 0.0
        %1743 = vmatprep.subr.mxu0 0.0
        %1744 = vmatpush1.msra.mxu0 0.0
        %1745 = vmatprep.subr.mxu0 0.0
        %1746 = vmatpush1.msra.mxu0 0.0
        %1747 = vmatprep.subr.mxu0 0.0
        %1748 = vmatpush1.msra.mxu0 0.0
        %1749 = vmatprep.subr.mxu0 0.0
        %1750 = vmatpush1.msra.mxu0 0.0
        %1751 = vmatprep.subr.mxu0 0.0
        %1752 = vmatpush1.msra.mxu0 0.0
        %1753 = vmatprep.subr.mxu0 0.0
        %1754 = vmatpush1.msra.mxu0 0.0
        %1755 = vmatprep.subr.mxu0 0.0
        %1756 = vmatpush1.msra.mxu0 0.0
        %1757 = vmatprep.subr.mxu0 0.0
        %1758 = vmatpush1.msra.mxu0 0.0
        %1759 = vmatprep.subr.mxu0 0.0
        %1760 = vmatpush1.msra.mxu0 0.0
        %1761 = vmatprep.subr.mxu0 0.0
        %1762 = vmatpush1.msra.mxu0 0.0
        %1763 = vmatprep.subr.mxu0 0.0
        %1764 = vmatpush1.msra.mxu0 0.0
        %1765 = vmatprep.subr.mxu0 0.0
        %1766 = vmatpush1.msra.mxu0 0.0
        %1767 = vmatprep.subr.mxu0 0.0
        %1768 = vmatpush1.msra.mxu0 0.0
        %1769 = vmatprep.subr.mxu0 0.0
        %1770 = vmatpush1.msra.mxu0 0.0
        %1771 = vmatprep.subr.mxu0 0.0
        %1772 = vmatpush1.msra.mxu0 0.0
        %1773 = vmatprep.subr.mxu0 0.0
        %1774 = vmatpush1.msra.mxu0 0.0
        %1775 = vmatprep.subr.mxu0 0.0
        %1776 = vmatpush1.msra.mxu0 0.0
        %1777 = vmatprep.mubr.f32.mxu0 0.0
        %1778 = vmatmul.mubr.f32.gmra.mrb[0].mxu0 %v1711
        %v1779 = vpop.f32.mrb[0].mxu0
        %v1780 = vadd.f32 0.0, %v1779
        %v1781 = vpop.f32.mrb[0].mxu0
        %1782 = vdwg.mxu0
        %1784 = vrot.lane.b32.xlu0 %v1450, 8
        %v1785 = vpop.permute.xlu0 %1784
        %1788 = vrot.lane.b32.xlu0 %v1615, 16
        %v1789 = vpop.permute.xlu0 %1788
        %1792 = vrot.lane.b32.xlu0 %v1780, 24
        %v1793 = vpop.permute.xlu0 %1792
        %v1795 = vsel %vm1126, %v1284, %v1785
        %vm1796 = vcmask 130048
        %v1797 = vsel %vm1796, %v1795, %v1789
        %vm1798 = vcmask 195584
        %v1799 = vsel %vm1798, %v1797, %v1793
        %vm1800 = vcmask 261120
        %v1801 = vsel %vm1800, %v1799, 0.0
        %v1802 = vld [vmem:[#allocation14] sm:$0xff]
        %v1803 = vld [vmem:[#allocation14 + $0x8] sm:$0xff]
        %v1804 = vld [vmem:[#allocation14 + $0x10] sm:$0xff]
        %v1805 = vld [vmem:[#allocation14 + $0x18] sm:$0xff]
        %v1806 = vld [vmem:[#allocation14 + $0x20] sm:$0xff]
        %v1807 = vld [vmem:[#allocation14 + $0x28] sm:$0xff]
        %v1808 = vld [vmem:[#allocation14 + $0x30] sm:$0xff]
        %v1809 = vld [vmem:[#allocation14 + $0x38] sm:$0xff]
        %v1810 = vld [vmem:[#allocation14 + $0x40] sm:$0xff]
        %v1811 = vld [vmem:[#allocation14 + $0x48] sm:$0xff]
        %v1812 = vld [vmem:[#allocation14 + $0x50] sm:$0xff]
        %v1813 = vld [vmem:[#allocation14 + $0x58] sm:$0xff]
        %v1814 = vld [vmem:[#allocation14 + $0x60] sm:$0xff]
        %v1815 = vld [vmem:[#allocation14 + $0x68] sm:$0xff]
        %v1816 = vld [vmem:[#allocation14 + $0x70] sm:$0xff]
        %v1817 = vld [vmem:[#allocation14 + $0x78] sm:$0xff]
        %v1818 = vld [vmem:[%s11] sm:$0x1]
        %v1820 = vlaneseq
        %v1821 = vshrl.u32 %v1820, 7
        %v1822 = vsub.s32 0, %v1821
        %v1823 = vrot.slane %v1818, %v1822
        %1825 = vmatprep.subr.mxu0 0.0
        %1826 = vmatpush1.msra.mxu0 %v1802
        %1827 = vmatprep.subr.mxu0 0.0
        %1828 = vmatpush1.msra.mxu0 %v1803
        %1829 = vmatprep.subr.mxu0 0.0
        %1830 = vmatpush1.msra.mxu0 %v1804
        %1831 = vmatprep.subr.mxu0 0.0
        %1832 = vmatpush1.msra.mxu0 %v1805
        %1833 = vmatprep.subr.mxu0 0.0
        %1834 = vmatpush1.msra.mxu0 %v1806
        %1835 = vmatprep.subr.mxu0 0.0
        %1836 = vmatpush1.msra.mxu0 %v1807
        %1837 = vmatprep.subr.mxu0 0.0
        %1838 = vmatpush1.msra.mxu0 %v1808
        %1839 = vmatprep.subr.mxu0 0.0
        %1840 = vmatpush1.msra.mxu0 %v1809
        %1841 = vmatprep.subr.mxu0 0.0
        %1842 = vmatpush1.msra.mxu0 %v1810
        %1843 = vmatprep.subr.mxu0 0.0
        %1844 = vmatpush1.msra.mxu0 %v1811
        %1845 = vmatprep.subr.mxu0 0.0
        %1846 = vmatpush1.msra.mxu0 %v1812
        %1847 = vmatprep.subr.mxu0 0.0
        %1848 = vmatpush1.msra.mxu0 %v1813
        %1849 = vmatprep.subr.mxu0 0.0
        %1850 = vmatpush1.msra.mxu0 %v1814
        %1851 = vmatprep.subr.mxu0 0.0
        %1852 = vmatpush1.msra.mxu0 %v1815
        %1853 = vmatprep.subr.mxu0 0.0
        %1854 = vmatpush1.msra.mxu0 %v1816
        %1855 = vmatprep.subr.mxu0 0.0
        %1856 = vmatpush1.msra.mxu0 %v1817
        %1857 = vmatprep.subr.mxu0 0.0
        %1858 = vmatpush1.msra.mxu0 0.0
        %1859 = vmatprep.subr.mxu0 0.0
        %1860 = vmatpush1.msra.mxu0 0.0
        %1861 = vmatprep.subr.mxu0 0.0
        %1862 = vmatpush1.msra.mxu0 0.0
        %1863 = vmatprep.subr.mxu0 0.0
        %1864 = vmatpush1.msra.mxu0 0.0
        %1865 = vmatprep.subr.mxu0 0.0
        %1866 = vmatpush1.msra.mxu0 0.0
        %1867 = vmatprep.subr.mxu0 0.0
        %1868 = vmatpush1.msra.mxu0 0.0
        %1869 = vmatprep.subr.mxu0 0.0
        %1870 = vmatpush1.msra.mxu0 0.0
        %1871 = vmatprep.subr.mxu0 0.0
        %1872 = vmatpush1.msra.mxu0 0.0
        %1873 = vmatprep.subr.mxu0 0.0
        %1874 = vmatpush1.msra.mxu0 0.0
        %1875 = vmatprep.subr.mxu0 0.0
        %1876 = vmatpush1.msra.mxu0 0.0
        %1877 = vmatprep.subr.mxu0 0.0
        %1878 = vmatpush1.msra.mxu0 0.0
        %1879 = vmatprep.subr.mxu0 0.0
        %1880 = vmatpush1.msra.mxu0 0.0
        %1881 = vmatprep.subr.mxu0 0.0
        %1882 = vmatpush1.msra.mxu0 0.0
        %1883 = vmatprep.subr.mxu0 0.0
        %1884 = vmatpush1.msra.mxu0 0.0
        %1885 = vmatprep.subr.mxu0 0.0
        %1886 = vmatpush1.msra.mxu0 0.0
        %1887 = vmatprep.subr.mxu0 0.0
        %1888 = vmatpush1.msra.mxu0 0.0
        %1889 = vmatprep.mubr.f32.mxu0 0.0
        %1890 = vmatmul.mubr.f32.gmra.mrb[0].mxu0 %v1801
        %v1891 = vpop.f32.mrb[0].mxu0
        %v1892 = vadd.f32 %v1823, %v1891
        %v1893 = vpop.f32.mrb[0].mxu0
        %1894 = vdwg.mxu0
        %v1895 = vadd.f32 %v840, %v1892
        %v1896 = vld [vmem:[%s12] sm:$0x1]
        %v1897 = vld [vmem:[%s13] sm:$0x1]
        %v1898 = vsel %vm846, 1, 0
        %vm1899 = vcmp.eq.s32.totalorder %v1898, 1
        %v1900 = vsel %vm1899, %v1895, 0.0
        %1901 = vadd.xlane.f32.xlu0 %v1900
        %v1902 = vpop.xlane.xlu0 %1901
        %v1903 = vmul.f32 %v1902, 0.03125
        %v1904 = vsub.f32 %v1900, %v1903
        %v1905 = vsel %vm1899, %v1904, 0.0
        %v1906 = vmul.f32 %v1905, %v1905
        %1907 = vadd.xlane.f32.xlu0 %v1906
        %v1908 = vpop.xlane.xlu0 %1907
        %v1909 = vmul.f32 %v1908, 0.03125
        %v1910 = vadd.f32 %v1909, 1e-05
        %v1911 = vrsqrt.pop %v1910
        %v1912 = vmul.f32 %v1905, %v1911
        %v1914 = vlaneseq
        %v1915 = vshrl.u32 %v1914, 7
        %v1916 = vsub.s32 0, %v1915
        %v1917 = vrot.slane %v1896, %v1916
        %v1919 = vmul.f32 %v1912, %v1917
        %v1921 = vlaneseq
        %v1922 = vshrl.u32 %v1921, 7
        %v1923 = vsub.s32 0, %v1922
        %v1924 = vrot.slane %v1897, %v1923
        %v1926 = vadd.f32 %v1919, %v1924
        %v1927 = vld [vmem:[#allocation16] sm:$0xff]
        %v1928 = vld [vmem:[#allocation16 + $0x8] sm:$0xff]
        %v1929 = vld [vmem:[#allocation16 + $0x10] sm:$0xff]
        %v1930 = vld [vmem:[#allocation16 + $0x18] sm:$0xff]
        %v1931 = vld [vmem:[#allocation16 + $0x20] sm:$0xff]
        %v1932 = vld [vmem:[#allocation16 + $0x28] sm:$0xff]
        %v1933 = vld [vmem:[#allocation16 + $0x30] sm:$0xff]
        %v1934 = vld [vmem:[#allocation16 + $0x38] sm:$0xff]
        %v1935 = vld [vmem:[#allocation16 + $0x40] sm:$0xff]
        %v1936 = vld [vmem:[#allocation16 + $0x48] sm:$0xff]
        %v1937 = vld [vmem:[#allocation16 + $0x50] sm:$0xff]
        %v1938 = vld [vmem:[#allocation16 + $0x58] sm:$0xff]
        %v1939 = vld [vmem:[#allocation16 + $0x60] sm:$0xff]
        %v1940 = vld [vmem:[#allocation16 + $0x68] sm:$0xff]
        %v1941 = vld [vmem:[#allocation16 + $0x70] sm:$0xff]
        %v1942 = vld [vmem:[#allocation16 + $0x78] sm:$0xff]
        %v1943 = vld [vmem:[%s15] sm:$0x1]
        %v1945 = vlaneseq
        %v1946 = vshrl.u32 %v1945, 7
        %v1947 = vsub.s32 0, %v1946
        %v1948 = vrot.slane %v1943, %v1947
        %1950 = vmatprep.subr.mxu0 0.0
        %1951 = vmatpush1.msra.mxu0 %v1927
        %1952 = vmatprep.subr.mxu0 0.0
        %1953 = vmatpush1.msra.mxu0 %v1928
        %1954 = vmatprep.subr.mxu0 0.0
        %1955 = vmatpush1.msra.mxu0 %v1929
        %1956 = vmatprep.subr.mxu0 0.0
        %1957 = vmatpush1.msra.mxu0 %v1930
        %1958 = vmatprep.subr.mxu0 0.0
        %1959 = vmatpush1.msra.mxu0 %v1931
        %1960 = vmatprep.subr.mxu0 0.0
        %1961 = vmatpush1.msra.mxu0 %v1932
        %1962 = vmatprep.subr.mxu0 0.0
        %1963 = vmatpush1.msra.mxu0 %v1933
        %1964 = vmatprep.subr.mxu0 0.0
        %1965 = vmatpush1.msra.mxu0 %v1934
        %1966 = vmatprep.subr.mxu0 0.0
        %1967 = vmatpush1.msra.mxu0 %v1935
        %1968 = vmatprep.subr.mxu0 0.0
        %1969 = vmatpush1.msra.mxu0 %v1936
        %1970 = vmatprep.subr.mxu0 0.0
        %1971 = vmatpush1.msra.mxu0 %v1937
        %1972 = vmatprep.subr.mxu0 0.0
        %1973 = vmatpush1.msra.mxu0 %v1938
        %1974 = vmatprep.subr.mxu0 0.0
        %1975 = vmatpush1.msra.mxu0 %v1939
        %1976 = vmatprep.subr.mxu0 0.0
        %1977 = vmatpush1.msra.mxu0 %v1940
        %1978 = vmatprep.subr.mxu0 0.0
        %1979 = vmatpush1.msra.mxu0 %v1941
        %1980 = vmatprep.subr.mxu0 0.0
        %1981 = vmatpush1.msra.mxu0 %v1942
        %1982 = vmatprep.subr.mxu0 0.0
        %1983 = vmatpush1.msra.mxu0 0.0
        %1984 = vmatprep.subr.mxu0 0.0
        %1985 = vmatpush1.msra.mxu0 0.0
        %1986 = vmatprep.subr.mxu0 0.0
        %1987 = vmatpush1.msra.mxu0 0.0
        %1988 = vmatprep.subr.mxu0 0.0
        %1989 = vmatpush1.msra.mxu0 0.0
        %1990 = vmatprep.subr.mxu0 0.0
        %1991 = vmatpush1.msra.mxu0 0.0
        %1992 = vmatprep.subr.mxu0 0.0
        %1993 = vmatpush1.msra.mxu0 0.0
        %1994 = vmatprep.subr.mxu0 0.0
        %1995 = vmatpush1.msra.mxu0 0.0
        %1996 = vmatprep.subr.mxu0 0.0
        %1997 = vmatpush1.msra.mxu0 0.0
        %1998 = vmatprep.subr.mxu0 0.0
        %1999 = vmatpush1.msra.mxu0 0.0
        %2000 = vmatprep.subr.mxu0 0.0
        %2001 = vmatpush1.msra.mxu0 0.0
        %2002 = vmatprep.subr.mxu0 0.0
        %2003 = vmatpush1.msra.mxu0 0.0
        %2004 = vmatprep.subr.mxu0 0.0
        %2005 = vmatpush1.msra.mxu0 0.0
        %2006 = vmatprep.subr.mxu0 0.0
        %2007 = vmatpush1.msra.mxu0 0.0
        %2008 = vmatprep.subr.mxu0 0.0
        %2009 = vmatpush1.msra.mxu0 0.0
        %2010 = vmatprep.subr.mxu0 0.0
        %2011 = vmatpush1.msra.mxu0 0.0
        %2012 = vmatprep.subr.mxu0 0.0
        %2013 = vmatpush1.msra.mxu0 0.0
        %2014 = vmatprep.mubr.f32.mxu0 0.0
        %2015 = vmatmul.mubr.f32.gmra.mrb[0].mxu0 %v1926
        %v2016 = vpop.f32.mrb[0].mxu0
        %v2017 = vadd.f32 %v1948, %v2016
        %v2018 = vpop.f32.mrb[0].mxu0
        %2019 = vdwg.mxu0
        %v2020 = vmax.f32 %v2017, 0.0
        %v2021 = vld [vmem:[#allocation17] sm:$0xff]
        %v2022 = vld [vmem:[#allocation17 + $0x8] sm:$0xff]
        %v2023 = vld [vmem:[#allocation17 + $0x10] sm:$0xff]
        %v2024 = vld [vmem:[#allocation17 + $0x18] sm:$0xff]
        %v2025 = vld [vmem:[#allocation17 + $0x20] sm:$0xff]
        %v2026 = vld [vmem:[#allocation17 + $0x28] sm:$0xff]
        %v2027 = vld [vmem:[#allocation17 + $0x30] sm:$0xff]
        %v2028 = vld [vmem:[#allocation17 + $0x38] sm:$0xff]
        %v2029 = vld [vmem:[#allocation17 + $0x40] sm:$0xff]
        %v2030 = vld [vmem:[#allocation17 + $0x48] sm:$0xff]
        %v2031 = vld [vmem:[#allocation17 + $0x50] sm:$0xff]
        %v2032 = vld [vmem:[#allocation17 + $0x58] sm:$0xff]
        %v2033 = vld [vmem:[#allocation17 + $0x60] sm:$0xff]
        %v2034 = vld [vmem:[#allocation17 + $0x68] sm:$0xff]
        %v2035 = vld [vmem:[#allocation17 + $0x70] sm:$0xff]
        %v2036 = vld [vmem:[#allocation17 + $0x78] sm:$0xff]
        %v2037 = vld [vmem:[%s17] sm:$0x1]
        %v2039 = vlaneseq
        %v2040 = vshrl.u32 %v2039, 7
        %v2041 = vsub.s32 0, %v2040
        %v2042 = vrot.slane %v2037, %v2041
        %2044 = vmatprep.subr.mxu0 0.0
        %2045 = vmatpush1.msra.mxu0 %v2021
        %2046 = vmatprep.subr.mxu0 0.0
        %2047 = vmatpush1.msra.mxu0 %v2022
        %2048 = vmatprep.subr.mxu0 0.0
        %2049 = vmatpush1.msra.mxu0 %v2023
        %2050 = vmatprep.subr.mxu0 0.0
        %2051 = vmatpush1.msra.mxu0 %v2024
        %2052 = vmatprep.subr.mxu0 0.0
        %2053 = vmatpush1.msra.mxu0 %v2025
        %2054 = vmatprep.subr.mxu0 0.0
        %2055 = vmatpush1.msra.mxu0 %v2026
        %2056 = vmatprep.subr.mxu0 0.0
        %2057 = vmatpush1.msra.mxu0 %v2027
        %2058 = vmatprep.subr.mxu0 0.0
        %2059 = vmatpush1.msra.mxu0 %v2028
        %2060 = vmatprep.subr.mxu0 0.0
        %2061 = vmatpush1.msra.mxu0 %v2029
        %2062 = vmatprep.subr.mxu0 0.0
        %2063 = vmatpush1.msra.mxu0 %v2030
        %2064 = vmatprep.subr.mxu0 0.0
        %2065 = vmatpush1.msra.mxu0 %v2031
        %2066 = vmatprep.subr.mxu0 0.0
        %2067 = vmatpush1.msra.mxu0 %v2032
        %2068 = vmatprep.subr.mxu0 0.0
        %2069 = vmatpush1.msra.mxu0 %v2033
        %2070 = vmatprep.subr.mxu0 0.0
        %2071 = vmatpush1.msra.mxu0 %v2034
        %2072 = vmatprep.subr.mxu0 0.0
        %2073 = vmatpush1.msra.mxu0 %v2035
        %2074 = vmatprep.subr.mxu0 0.0
        %2075 = vmatpush1.msra.mxu0 %v2036
        %2076 = vmatprep.subr.mxu0 0.0
        %2077 = vmatpush1.msra.mxu0 0.0
        %2078 = vmatprep.subr.mxu0 0.0
        %2079 = vmatpush1.msra.mxu0 0.0
        %2080 = vmatprep.subr.mxu0 0.0
        %2081 = vmatpush1.msra.mxu0 0.0
        %2082 = vmatprep.subr.mxu0 0.0
        %2083 = vmatpush1.msra.mxu0 0.0
        %2084 = vmatprep.subr.mxu0 0.0
        %2085 = vmatpush1.msra.mxu0 0.0
        %2086 = vmatprep.subr.mxu0 0.0
        %2087 = vmatpush1.msra.mxu0 0.0
        %2088 = vmatprep.subr.mxu0 0.0
        %2089 = vmatpush1.msra.mxu0 0.0
        %2090 = vmatprep.subr.mxu0 0.0
        %2091 = vmatpush1.msra.mxu0 0.0
        %2092 = vmatprep.subr.mxu0 0.0
        %2093 = vmatpush1.msra.mxu0 0.0
        %2094 = vmatprep.subr.mxu0 0.0
        %2095 = vmatpush1.msra.mxu0 0.0
        %2096 = vmatprep.subr.mxu0 0.0
        %2097 = vmatpush1.msra.mxu0 0.0
        %2098 = vmatprep.subr.mxu0 0.0
        %2099 = vmatpush1.msra.mxu0 0.0
        %2100 = vmatprep.subr.mxu0 0.0
        %2101 = vmatpush1.msra.mxu0 0.0
        %2102 = vmatprep.subr.mxu0 0.0
        %2103 = vmatpush1.msra.mxu0 0.0
        %2104 = vmatprep.subr.mxu0 0.0
        %2105 = vmatpush1.msra.mxu0 0.0
        %2106 = vmatprep.subr.mxu0 0.0
        %2107 = vmatpush1.msra.mxu0 0.0
        %2108 = vmatprep.mubr.f32.mxu0 0.0
        %2109 = vmatmul.mubr.f32.gmra.mrb[0].mxu0 %v2020
        %v2110 = vpop.f32.mrb[0].mxu0
        %v2111 = vadd.f32 %v2042, %v2110
        %v2112 = vpop.f32.mrb[0].mxu0
        %2113 = vdwg.mxu0
        %v2114 = vadd.f32 %v1926, %v2111
        %v2115 = vld [vmem:[%s18] sm:$0x1]
        %v2116 = vld [vmem:[%s19] sm:$0x1]
        %v2117 = vsel %vm1899, %v2114, 0.0
        %2118 = vadd.xlane.f32.xlu0 %v2117
        %v2119 = vpop.xlane.xlu0 %2118
        %v2120 = vmul.f32 %v2119, 0.03125
        %v2121 = vsub.f32 %v2117, %v2120
        %v2122 = vsel %vm1899, %v2121, 0.0
        %v2123 = vmul.f32 %v2122, %v2122
        %2124 = vadd.xlane.f32.xlu0 %v2123
        %v2125 = vpop.xlane.xlu0 %2124
        %v2126 = vmul.f32 %v2125, 0.03125
        %v2127 = vadd.f32 %v2126, 1e-05
        %v2128 = vrsqrt.pop %v2127
        %v2129 = vmul.f32 %v2122, %v2128
        %v2131 = vlaneseq
        %v2132 = vshrl.u32 %v2131, 7
        %v2133 = vsub.s32 0, %v2132
        %v2134 = vrot.slane %v2115, %v2133
        %v2136 = vmul.f32 %v2129, %v2134
        %v2138 = vlaneseq
        %v2139 = vshrl.u32 %v2138, 7
        %v2140 = vsub.s32 0, %v2139
        %v2141 = vrot.slane %v2116, %v2140
        %v2143 = vadd.f32 %v2136, %v2141
        %2144 = vst [vmem:[%s839] sm:$0xff] %v2143
        %s2145 = sand.u32 %s494, 1
        %s2146 = scalar_lea.sflag [#allocation4], %s2145
        %s2147 = sand.u32 %s494, 1
        %s2148 = smul.addr %s2147, 8
        %s2149 = scalar_lea.vmem [#allocation19], %s2148
        // Predicated region
        $region141: #{tpu_custom_call.1} parent=99 // pred_check
          %p2150 = pneg %p504
        $region142: #{tpu_custom_call.1} parent=99 // pred_check_branch
          %2152 = sbr.rel (%p2150) target = $region144
        $region143: #{tpu_custom_call.1} parent=99 // pred_region
          %s2154 = ssub.s32 128, 128
          %2155 = vsyncadd %s2146, %s2154
          %s2156 = smul.addr %s46, 128
          %s2157 = scalar_lea.hbm %s20, %s2156
          %s2159 = sshll.u32 %s2149, 4
          %s2160 = int_to_ptr.vmem [resolvable:$true] %s2159
          %2162 = dma.vmem_to_hbm [thread:$0]  %s2160, 128, %s2157, %s2146
        $region144: #{tpu_custom_call.1} parent=99 // pred_fallthru
          _
      $region100: #{tpu_custom_call.1} parent=5 // pred_fallthru
        _
      %p2163 = scmp.le.s32.totalorder 2, %s41
      // Predicated region
      $region145: #{tpu_custom_call.1} parent=5 // pred_check
        %p2164 = pneg %p2163
      $region146: #{tpu_custom_call.1} parent=5 // pred_check_branch
        %2166 = sbr.rel (%p2164) target = $region148
      $region147: #{tpu_custom_call.1} parent=5 // pred_region
        %s2167 = ssub.s32 %s41, 2
        // Predicated region
        $region149: #{tpu_custom_call.1} parent=147 // pred_check
          %p2168 = pneg %p510
        $region150: #{tpu_custom_call.1} parent=147 // pred_check_branch
          %2170 = sbr.rel (%p2168) target = $region152
        $region151: #{tpu_custom_call.1} parent=147 // pred_region
          %s2171 = sand.u32 %s495, 1
          %s2172 = scalar_lea.sflag [#allocation4], %s2171
          %s2173 = sand.u32 %s495, 1
          %s2174 = smul.addr %s2173, 8
          %s2175 = scalar_lea.vmem [#allocation19], %s2174
          %2176 = dma.done %s2172, 128
        $region152: #{tpu_custom_call.1} parent=147 // pred_fallthru
          _
      $region148: #{tpu_custom_call.1} parent=5 // pred_fallthru
        _
    $region6: #{tpu_custom_call.1} parent=1 // loop_footer
      %s45 = sadd.s32 1, %s41
    $region7: #{tpu_custom_call.1} parent=1 // loop_footer_branch
      %40 = sbr.rel target = $region3
    $region8: #{tpu_custom_call.1} parent=1 // loop_exit
      _
    %2177 = vsyncpa [#allocation3], 1
    %s2178 = scalar_lea.sflag [#allocation3], 1
    %2179 = vsyncpa %s2178, 1
    %2180 = vsyncpa [#allocation6], 1
    %s2181 = scalar_lea.sflag [#allocation6], 1
    %2182 = vsyncpa %s2181, 1
    %2183 = vsyncpa [#allocation9], 1
    %s2184 = scalar_lea.sflag [#allocation9], 1
    %2185 = vsyncpa %s2184, 1
    %2186 = vsyncpa [#allocation12], 1
    %2187 = vsyncpa [#allocation15], 1
    %2188 = vsyncpa [#allocation18], 1
    %2189 = vsyncpa [#allocation4], 1
    %s2190 = scalar_lea.sflag [#allocation4], 1
    %2191 = vsyncpa %s2190, 1

</llo_original>
